<compile_context>
chip_gen: v7x
topology: tpu7x:2x2x1
jax: 0.10.0
libtpu: 0.0.40
codegen_flags: <defaults>
</compile_context>

<pallas_src>
import functools

import jax
import jax.numpy as jnp
import numpy as np
from jax.experimental import pallas as pl
from jax.experimental.pallas import tpu as pltpu


def _round_up(x, m):
    return (x + m - 1) // m * m


# ---------------------------------------------------------------------------
# delta computation, fully on-device (no host sync in the quantized forward)
# ---------------------------------------------------------------------------
def compute_delta_device(x, bits, overflow_rate=0.0):
    """delta = 2^-(bits-1-ceil(log2(v))), v = overflow-rate quantile of |x|."""
    absv = jnp.abs(x).astype(jnp.float32).reshape(-1)
    n = int(absv.shape[0])
    k = int(overflow_rate * n)
    k = min(max(k, 0), n - 1)
    if k == 0:
        v = jnp.max(absv)                      # no O(n log n) sort needed
    else:
        v = jax.lax.top_k(absv, k + 1)[0][k]
    v = jnp.maximum(v, jnp.float32(1e-12))     # all-zero tensor guard
    si = jnp.ceil(jnp.log2(v + 1e-12))
    sf = (bits - 1) - si
    return jnp.exp2(-sf)                       # traced f32 scalar


# ---------------------------------------------------------------------------
# strip geometry / VMEM budgeting helpers
# ---------------------------------------------------------------------------
def _vmem_limit_bytes():
    # Default scoped VMEM (16/32 MiB) is far below physical (128/128/64 MiB on
    # v5e/v6e/v7x); raise it per generation, leaving headroom.
    try:
        cap = pltpu.get_tpu_info().vmem_capacity_bytes
    except Exception:
        cap = 64 * 1024 * 1024
    return int(min(cap * 3 // 4, 96 * 1024 * 1024))


def _pick_strip_h(Ho, Wp, cin, cout, vmem_limit):
    """Largest strip height (multiple of 8, dividing Ho) fitting ~half the
    scoped-VMEM budget (rest is double-buffering / relayout headroom)."""
    budget = vmem_limit // 2
    best = None
    for h in range(8, Ho + 1, 8):
        if Ho % h:
            continue
        rows = h * Wp
        need = (2 * rows * cin * 4 +          # body blocks (double buffered)
                2 * rows * cout * 4 +         # output blocks (double buffered)
                (rows + 3 * Wp) * cin * 2 +   # bf16 working strip
                4 * rows * cout * 4)          # accumulator + relayout slack
        if need <= budget:
            best = h
    return best if best is not None else Ho    # tiny images: single strip


def _halo_block_rows(strip_rows, halo_need):
    """Smallest multiple of 8 that divides strip_rows and is >= halo_need
    (bounds the extra halo HBM traffic to halo_rows/strip_rows)."""
    d = _round_up(halo_need, 8)
    while d < strip_rows:
        if strip_rows % d == 0:
            return d
        d += 8
    return strip_rows


# ---------------------------------------------------------------------------
# shared in-kernel helpers
# ---------------------------------------------------------------------------
def _fill_strip(xw_ref, body, halo):
    """Write the (processed) strip body + halo rows into the bf16 work buffer."""
    rows = body.shape[0]
    hn = halo.shape[0]
    xw_ref[0:rows, :] = body.astype(xw_ref.dtype)
    xw_ref[rows:rows + hn, :] = halo.astype(xw_ref.dtype)


def _accum_taps(xw_ref, w_ref, KH, KW, Wp, rows):
    """sum_{kh,kw} X[kh*Wp+kw : +rows, :] @ W[kh*KW+kw]   (row-flattened conv).

    Each tap is a plain sublane-offset slice (no concat temporaries); the
    KH*KW shallow dots accumulate in vregs with f32 MXU accumulation and the
    caller stores the result once.
    """
    acc = None
    for kh in range(KH):
        for kw in range(KW):
            slab = xw_ref[pl.ds(kh * Wp + kw, rows), :]
            c = jnp.dot(slab, w_ref[kh * KW + kw],
                        preferred_element_type=jnp.float32)
            acc = c if acc is None else acc + c
    return acc                                   # (rows, Cout) f32


# ---------------------------------------------------------------------------
# kernel 1: first conv -> per-strip per-channel (sum, centered M2) only
# ---------------------------------------------------------------------------
def _stats_kernel(KH, KW, Wp, Wo, rows, halo_need,
                  xb_ref, xh_ref, w_ref, stats_ref, xw_ref):
    _fill_strip(xw_ref, xb_ref[0], xh_ref[0][:halo_need])      # f32 -> bf16
    y = _accum_taps(xw_ref, w_ref, KH, KW, Wp, rows)            # (rows, Cout)
    # mask the wrap-around columns (wo >= Wo) of the row-flattened conv
    col = jax.lax.broadcasted_iota(jnp.int32, (rows, 1), 0) % Wp
    valid = col < Wo
    cnt = float((rows // Wp) * Wo)
    ym = jnp.where(valid, y, 0.0)
    s1 = jnp.sum(ym, axis=0, keepdims=True)                     # (1, Cout)
    d = jnp.where(valid, y - s1 / cnt, 0.0)                     # strip-centered
    m2 = jnp.sum(d * d, axis=0, keepdims=True)                  # (1, Cout)
    stats_ref[...] = jnp.concatenate([s1, m2], axis=0)[None, None]


# ---------------------------------------------------------------------------
# kernel 2: fused activation fake-quant + conv (bf16 MXU) + quantized bias
# ---------------------------------------------------------------------------
def _quant_kernel(KH, KW, Wp, rows, halo_need, fwd_bits,
                  scal_ref, xb_ref, xh_ref, w_ref, b_ref, out_ref, xw_ref):
    delta_b = scal_ref[0]                    # SMEM scalar, not baked in
    inv_db = 1.0 / delta_b                   # exact: delta_b is a power of two
    bound = 2.0 ** (fwd_bits - 1)

    def fq(v):                               # f32 VPU math (v5e-safe)
        q = jnp.clip(jnp.floor(v * inv_db + 0.5), -bound, bound - 1.0)
        return q * delta_b                   # 8-bit codes -> exact in bf16

    _fill_strip(xw_ref, fq(xb_ref[0]), fq(xh_ref[0][:halo_need]))
    y = _accum_taps(xw_ref, w_ref, KH, KW, Wp, rows)
    out_ref[...] = (y + b_ref[...])[None]    # single lane-dense-ish store


# ---------------------------------------------------------------------------
# pallas_call wrappers
# ---------------------------------------------------------------------------
def _x_specs(strip_rows, halo_rows, cin):
    ratio = strip_rows // halo_rows
    body = pl.BlockSpec((1, strip_rows, cin), lambda n, s: (n, s, 0))
    halo = pl.BlockSpec((1, halo_rows, cin),
                        lambda n, s: (n, (s + 1) * ratio, 0))
    return body, halo


def _conv_stats_pallas(xflat, w_taps, KH, KW, Wp, Wo, strip_h, num_strips,
                       halo_need, vmem_limit):
    N, _, cin = xflat.shape
    T, _, cout = w_taps.shape
    rows = strip_h * Wp
    halo_rows = _halo_block_rows(rows, halo_need)
    body_spec, halo_spec = _x_specs(rows, halo_rows, cin)
    kern = functools.partial(_stats_kernel, KH, KW, Wp, Wo, rows, halo_need)
    return pl.pallas_call(
        kern,
        out_shape=jax.ShapeDtypeStruct((N, num_strips, 2, cout), jnp.float32),
        grid=(N, num_strips),
        in_specs=[body_spec, halo_spec,
                  pl.BlockSpec((T, cin, cout), lambda n, s: (0, 0, 0))],
        out_specs=pl.BlockSpec((1, 1, 2, cout), lambda n, s: (n, s, 0, 0)),
        scratch_shapes=[pltpu.VMEM((rows + halo_need, cin), jnp.bfloat16)],
        compiler_params=pltpu.CompilerParams(
            dimension_semantics=("parallel", "parallel"),
            vmem_limit_bytes=vmem_limit),
    )(xflat, xflat, w_taps)


def _conv_quant_pallas(xflat, w_taps, qbias, delta_b, KH, KW, Wp, strip_h,
                       num_strips, halo_need, fwd_bits, vmem_limit):
    N, _, cin = xflat.shape
    T, _, cout = w_taps.shape
    rows = strip_h * Wp
    halo_rows = _halo_block_rows(rows, halo_need)
    body_spec, halo_spec = _x_specs(rows, halo_rows, cin)
    scal = jnp.reshape(jnp.asarray(delta_b, jnp.float32), (1,))
    kern = functools.partial(_quant_kernel, KH, KW, Wp, rows, halo_need,
                             fwd_bits)
    return pl.pallas_call(
        kern,
        out_shape=jax.ShapeDtypeStruct((N, num_strips * rows, cout),
                                       jnp.float32),
        grid=(N, num_strips),
        in_specs=[pl.BlockSpec(memory_space=pltpu.MemorySpace.SMEM),  # delta_b
                  body_spec, halo_spec,
                  pl.BlockSpec((T, cin, cout), lambda n, s: (0, 0, 0)),
                  pl.BlockSpec((1, cout), lambda n, s: (0, 0))],
        out_specs=pl.BlockSpec((1, rows, cout), lambda n, s: (n, s, 0)),
        scratch_shapes=[pltpu.VMEM((rows + halo_need, cin), jnp.bfloat16)],
        compiler_params=pltpu.CompilerParams(
            dimension_semantics=("parallel", "parallel"),
            vmem_limit_bytes=vmem_limit),
    )(scal, xflat, xflat, w_taps, qbias)


# ---------------------------------------------------------------------------
# Conv_BnQuant.forward — quantized branch (counter == 0), BN in train mode
# ---------------------------------------------------------------------------
def conv_bn_quant_forward(x_nchw, conv_w_oihw, bn_weight, bn_bias,
                          running_mean, running_var, delta_b,
                          param_bits=8, fwd_bits=8, eps=1e-5, momentum=0.1,
                          padding=(1, 1), overflow_rate=0.0, strip_h=None):
    N, Cin, H, W = x_nchw.shape
    Cout, _, KH, KW = conv_w_oihw.shape
    ph, pw = padding
    Hp, Wp = H + 2 * ph, W + 2 * pw
    Ho, Wo = Hp - KH + 1, Wp - KW + 1

    vmem_limit = _vmem_limit_bytes()
    if strip_h is None:
        strip_h = _pick_strip_h(Ho, Wp, Cin, Cout, vmem_limit)
    assert Ho % strip_h == 0 and (strip_h * Wp) % 8 == 0, (
        "TODO(synk): ragged strips (Ho % strip_h != 0) need row masking")
    num_strips = Ho // strip_h
    halo_need = (KH - 1) * Wp + (KW - 1)

    # single layout pass: NCHW -> row-flattened NHWC, spatial halo pad,
    # (KW-1) guard rows; channels stay at the TRUE Cin (no 128-lane HBM pad)
    xp = jnp.transpose(x_nchw, (0, 2, 3, 1))
    xp = jnp.pad(xp, ((0, 0), (ph, ph), (pw, pw), (0, 0)))
    xflat = jnp.pad(xp.reshape(N, Hp * Wp, Cin), ((0, 0), (0, KW - 1), (0, 0)))

    def to_taps(w_oihw):
        w = jnp.transpose(w_oihw, (2, 3, 1, 0))        # (KH, KW, Cin, Cout)
        return w.reshape(KH * KW, Cin, Cout)

    # 1) first conv: per-strip channel stats only (what self.bn(y_t) needs),
    #    bf16 MXU operands, f32 accumulation (deliberate precision choice).
    stats = _conv_stats_pallas(
        xflat, to_taps(conv_w_oihw).astype(jnp.bfloat16),
        KH, KW, Wp, Wo, strip_h, num_strips, halo_need, vmem_limit)
    cnt = strip_h * Wo
    total = N * num_strips * cnt                       # == N*Ho*Wo
    s1 = stats[:, :, 0, :]
    m2 = stats[:, :, 1, :]
    mean = jnp.sum(s1, axis=(0, 1)) / total
    chunk_mean = s1 / cnt
    m2_tot = jnp.sum(m2, axis=(0, 1)) + cnt * jnp.sum(
        (chunk_mean - mean) ** 2, axis=(0, 1))         # Chan/Welford combine
    var_unbiased = m2_tot / (total - 1)
    running_mean = (1.0 - momentum) * running_mean + momentum * mean
    running_var = (1.0 - momentum) * running_var + momentum * var_unbiased

    # 2) BN fold + fake-quant of the (tiny) folded weight — all on device
    inv_std = 1.0 / jnp.sqrt(running_var + eps)
    a = bn_weight * inv_std
    b = -bn_weight * running_mean * inv_std + bn_bias
    combine_weight = conv_w_oihw * a.reshape(Cout, 1, 1, 1)
    delta_a = compute_delta_device(combine_weight, param_bits, overflow_rate)
    bound_w = 2.0 ** (param_bits - 1)
    quant_weight = delta_a * jnp.clip(
        jnp.floor(combine_weight / delta_a + 0.5), -bound_w, bound_w - 1.0)
    quant_bias = jnp.floor(b / (delta_a * delta_b)) * (delta_a * delta_b)

    w_q = to_taps(quant_weight).astype(jnp.bfloat16)   # exact for 8-bit codes
    qb = quant_bias.reshape(1, Cout).astype(jnp.float32)

    # 3) fused activation fake-quant + conv + quantized bias
    q = _conv_quant_pallas(xflat, w_q, qb, delta_b, KH, KW, Wp, strip_h,
                           num_strips, halo_need, fwd_bits, vmem_limit)
    q = q.reshape(N, Ho, Wp, Cout)[:, :, :Wo, :]       # drop wrap-around cols
    # TODO(synk): an NHWC consumer could take `q` directly; the transpose below
    # is the only remaining XLA epilogue pass (module contract returns NCHW).
    return jnp.transpose(q, (0, 3, 1, 2))


# ---------------------------------------------------------------------------
# plain-JAX reference (same math, f32, using lax.conv) for a sanity check
# ---------------------------------------------------------------------------
def _reference(x, w, bn_w, bn_b, rm, rv, delta_b, param_bits, fwd_bits,
               eps=1e-5, momentum=0.1):
    dn = jax.lax.conv_dimension_numbers(x.shape, w.shape, ('NCHW', 'OIHW', 'NCHW'))
    conv = lambda a_, k_: jax.lax.conv_general_dilated(
        a_, k_, (1, 1), ((1, 1), (1, 1)), dimension_numbers=dn)
    y_t = conv(x, w)
    n = y_t.shape[0] * y_t.shape[2] * y_t.shape[3]
    mean = y_t.mean(axis=(0, 2, 3))
    var_b = y_t.var(axis=(0, 2, 3))
    var_u = var_b * n / (n - 1)
    rm = (1 - momentum) * rm + momentum * mean
    rv = (1 - momentum) * rv + momentum * var_u
    a = bn_w / jnp.sqrt(rv + eps)
    b = -bn_w * rm / jnp.sqrt(rv + eps) + bn_b
    cw = w * a.reshape(-1, 1, 1, 1)
    delta_a = compute_delta_device(cw, param_bits, 0.0)
    lq = lambda v, bits, d: jnp.clip(jnp.floor(v / d + 0.5),
                                     -(2.0 ** (bits - 1)), 2.0 ** (bits - 1) - 1)
    qw = delta_a * lq(cw, param_bits, delta_a)
    qb = jnp.floor(b / (delta_a * delta_b)) * delta_a * delta_b
    qi = delta_b * lq(x, fwd_bits, delta_b)
    return conv(qi, qw) + qb.reshape(1, -1, 1, 1)


if __name__ == "__main__":
    key = jax.random.PRNGKey(0)
    k1, k2, k3, k4, k5, k6 = jax.random.split(key, 6)

    N, Cin, H, W = 2, 4, 16, 16
    Cout, KH, KW = 8, 3, 3
    param_bits, fwd_bits = 8, 8

    x = jax.random.normal(k1, (N, Cin, H, W), jnp.float32)
    conv_w = 0.2 * jax.random.normal(k2, (Cout, Cin, KH, KW), jnp.float32)
    bn_weight = 1.0 + 0.1 * jax.random.normal(k3, (Cout,), jnp.float32)
    bn_bias = 0.1 * jax.random.normal(k4, (Cout,), jnp.float32)
    running_mean = 0.1 * jax.random.normal(k5, (Cout,), jnp.float32)
    running_var = jax.random.uniform(k6, (Cout,), jnp.float32, 0.5, 1.5)

    # calibration phase (counter > 0) stores delta_b as a python float on the
    # module; the one-time host read below mirrors that (not in the hot path).
    delta_b = float(compute_delta_device(x, fwd_bits, 0.0))

    # strip_h=8 -> two strips per image, exercising the halo/strip path.
    fwd = jax.jit(functools.partial(conv_bn_quant_forward,
                                    param_bits=param_bits, fwd_bits=fwd_bits,
                                    strip_h=8))
    out = fwd(x, conv_w, bn_weight, bn_bias, running_mean, running_var, delta_b)
    out = jax.block_until_ready(out)

    ref = _reference(x, conv_w, bn_weight, bn_bias, running_mean, running_var,
                     delta_b, param_bits, fwd_bits)
    ref = jax.block_until_ready(ref)

    assert out.shape == (N, Cout, H, W)
    # bf16 stats-conv operands shift the BN batch statistics by O(1e-3)
    # relative (documented, deliberate); tolerance covers that.
    np.testing.assert_allclose(np.asarray(out), np.asarray(ref),
                               rtol=1e-2, atol=5e-2)
    print("KERNEL_OK")
</pallas_src>

<mosaic_0001>
module attributes {stable_mosaic.version = 11 : i64} {
  func.func @_stats_kernel(%arg0: i32, %arg1: i32, %arg2: memref<1x144x4xf32, #tpu.memory_space<vmem>>, %arg3: memref<1x48x4xf32, #tpu.memory_space<vmem>>, %arg4: memref<9x4x8xbf16, #tpu.memory_space<vmem>>, %arg5: memref<1x1x2x8xf32, #tpu.memory_space<vmem>>, %arg6: memref<182x4xbf16, #tpu.memory_space<vmem>>) attributes {dimension_semantics = [#tpu.dimension_semantics<parallel>, #tpu.dimension_semantics<parallel>], iteration_bounds = array<i64: 2, 2>, scalar_prefetch = 0 : i64, scratch_operands = 1 : i64, tpu.core_type = #tpu.core_type<tc>, window_params = [{transform_indices = @transform_0, window_bounds = array<i64: 1, 144, 4>}, {transform_indices = @transform_1, window_bounds = array<i64: 1, 48, 4>}, {pipeline_mode = #tpu.pipeline_mode<synchronous>, transform_indices = @transform_2, window_bounds = array<i64: 9, 4, 8>}, {transform_indices = @transform_3, window_bounds = array<i64: 1, 1, 2, 8>}]} {
    %c0 = arith.constant 0 : index
    %c0_0 = arith.constant 0 : index
    %c0_1 = arith.constant 0 : index
    %0 = vector.load %arg2[%c0, %c0_0, %c0_1] : memref<1x144x4xf32, #tpu.memory_space<vmem>>, vector<1x144x4xf32>
    %1 = vector.shape_cast %0 : vector<1x144x4xf32> to vector<144x4xf32>
    %c0_2 = arith.constant 0 : index
    %c0_3 = arith.constant 0 : index
    %c0_4 = arith.constant 0 : index
    %2 = vector.load %arg3[%c0_2, %c0_3, %c0_4] : memref<1x48x4xf32, #tpu.memory_space<vmem>>, vector<1x48x4xf32>
    %3 = vector.shape_cast %2 : vector<1x48x4xf32> to vector<48x4xf32>
    %4 = vector.extract_strided_slice %3 {offsets = [0, 0], sizes = [38, 4], strides = [1, 1]} : vector<48x4xf32> to vector<38x4xf32>
    %5 = arith.truncf %1 : vector<144x4xf32> to vector<144x4xbf16>
    %c0_5 = arith.constant 0 : index
    %c0_6 = arith.constant 0 : index
    %6 = vector.load %arg6[%c0_5, %c0_6] : memref<182x4xbf16, #tpu.memory_space<vmem>>, vector<144x4xbf16>
    tpu.vector_store %arg6[%c0_5, %c0_6], %5 {strides = array<i32>} : memref<182x4xbf16, #tpu.memory_space<vmem>>, vector<144x4xbf16>,
    %7 = arith.truncf %4 : vector<38x4xf32> to vector<38x4xbf16>
    %c144 = arith.constant 144 : index
    %c0_7 = arith.constant 0 : index
    %8 = vector.load %arg6[%c144, %c0_7] : memref<182x4xbf16, #tpu.memory_space<vmem>>, vector<38x4xbf16>
    tpu.vector_store %arg6[%c144, %c0_7], %7 {strides = array<i32>} : memref<182x4xbf16, #tpu.memory_space<vmem>>, vector<38x4xbf16>,
    %c0_8 = arith.constant 0 : index
    %c0_9 = arith.constant 0 : index
    %9 = vector.load %arg6[%c0_8, %c0_9] : memref<182x4xbf16, #tpu.memory_space<vmem>>, vector<144x4xbf16>
    %c0_10 = arith.constant 0 : index
    %c0_11 = arith.constant 0 : index
    %c0_12 = arith.constant 0 : index
    %10 = vector.load %arg4[%c0_10, %c0_11, %c0_12] : memref<9x4x8xbf16, #tpu.memory_space<vmem>>, vector<1x4x8xbf16>
    %11 = vector.shape_cast %10 : vector<1x4x8xbf16> to vector<4x8xbf16>
    %cst = arith.constant dense<0.000000e+00> : vector<144x8xf32>
    %12 = tpu.matmul %9, %11, %cst {dimension_numbers = #tpu.dot_dimension_numbers<[1], [0], [0], [1], [0, 0, 1, 1], [], []>} : vector<144x4xbf16>, vector<4x8xbf16>, vector<144x8xf32> -> vector<144x8xf32>
    %c1 = arith.constant 1 : index
    %c0_13 = arith.constant 0 : index
    %13 = vector.load %arg6[%c1, %c0_13] : memref<182x4xbf16, #tpu.memory_space<vmem>>, vector<144x4xbf16>
    %c1_14 = arith.constant 1 : index
    %c0_15 = arith.constant 0 : index
    %c0_16 = arith.constant 0 : index
    %14 = vector.load %arg4[%c1_14, %c0_15, %c0_16] : memref<9x4x8xbf16, #tpu.memory_space<vmem>>, vector<1x4x8xbf16>
    %15 = vector.shape_cast %14 : vector<1x4x8xbf16> to vector<4x8xbf16>
    %cst_17 = arith.constant dense<0.000000e+00> : vector<144x8xf32>
    %16 = tpu.matmul %13, %15, %cst_17 {dimension_numbers = #tpu.dot_dimension_numbers<[1], [0], [0], [1], [0, 0, 1, 1], [], []>} : vector<144x4xbf16>, vector<4x8xbf16>, vector<144x8xf32> -> vector<144x8xf32>
    %17 = arith.addf %12, %16 : vector<144x8xf32>
    %c2 = arith.constant 2 : index
    %c0_18 = arith.constant 0 : index
    %18 = vector.load %arg6[%c2, %c0_18] : memref<182x4xbf16, #tpu.memory_space<vmem>>, vector<144x4xbf16>
    %c2_19 = arith.constant 2 : index
    %c0_20 = arith.constant 0 : index
    %c0_21 = arith.constant 0 : index
    %19 = vector.load %arg4[%c2_19, %c0_20, %c0_21] : memref<9x4x8xbf16, #tpu.memory_space<vmem>>, vector<1x4x8xbf16>
    %20 = vector.shape_cast %19 : vector<1x4x8xbf16> to vector<4x8xbf16>
    %cst_22 = arith.constant dense<0.000000e+00> : vector<144x8xf32>
    %21 = tpu.matmul %18, %20, %cst_22 {dimension_numbers = #tpu.dot_dimension_numbers<[1], [0], [0], [1], [0, 0, 1, 1], [], []>} : vector<144x4xbf16>, vector<4x8xbf16>, vector<144x8xf32> -> vector<144x8xf32>
    %22 = arith.addf %17, %21 : vector<144x8xf32>
    %c18 = arith.constant 18 : index
    %c0_23 = arith.constant 0 : index
    %23 = vector.load %arg6[%c18, %c0_23] : memref<182x4xbf16, #tpu.memory_space<vmem>>, vector<144x4xbf16>
    %c3 = arith.constant 3 : index
    %c0_24 = arith.constant 0 : index
    %c0_25 = arith.constant 0 : index
    %24 = vector.load %arg4[%c3, %c0_24, %c0_25] : memref<9x4x8xbf16, #tpu.memory_space<vmem>>, vector<1x4x8xbf16>
    %25 = vector.shape_cast %24 : vector<1x4x8xbf16> to vector<4x8xbf16>
    %cst_26 = arith.constant dense<0.000000e+00> : vector<144x8xf32>
    %26 = tpu.matmul %23, %25, %cst_26 {dimension_numbers = #tpu.dot_dimension_numbers<[1], [0], [0], [1], [0, 0, 1, 1], [], []>} : vector<144x4xbf16>, vector<4x8xbf16>, vector<144x8xf32> -> vector<144x8xf32>
    %27 = arith.addf %22, %26 : vector<144x8xf32>
    %c19 = arith.constant 19 : index
    %c0_27 = arith.constant 0 : index
    %28 = vector.load %arg6[%c19, %c0_27] : memref<182x4xbf16, #tpu.memory_space<vmem>>, vector<144x4xbf16>
    %c4 = arith.constant 4 : index
    %c0_28 = arith.constant 0 : index
    %c0_29 = arith.constant 0 : index
    %29 = vector.load %arg4[%c4, %c0_28, %c0_29] : memref<9x4x8xbf16, #tpu.memory_space<vmem>>, vector<1x4x8xbf16>
    %30 = vector.shape_cast %29 : vector<1x4x8xbf16> to vector<4x8xbf16>
    %cst_30 = arith.constant dense<0.000000e+00> : vector<144x8xf32>
    %31 = tpu.matmul %28, %30, %cst_30 {dimension_numbers = #tpu.dot_dimension_numbers<[1], [0], [0], [1], [0, 0, 1, 1], [], []>} : vector<144x4xbf16>, vector<4x8xbf16>, vector<144x8xf32> -> vector<144x8xf32>
    %32 = arith.addf %27, %31 : vector<144x8xf32>
    %c20 = arith.constant 20 : index
    %c0_31 = arith.constant 0 : index
    %33 = vector.load %arg6[%c20, %c0_31] : memref<182x4xbf16, #tpu.memory_space<vmem>>, vector<144x4xbf16>
    %c5 = arith.constant 5 : index
    %c0_32 = arith.constant 0 : index
    %c0_33 = arith.constant 0 : index
    %34 = vector.load %arg4[%c5, %c0_32, %c0_33] : memref<9x4x8xbf16, #tpu.memory_space<vmem>>, vector<1x4x8xbf16>
    %35 = vector.shape_cast %34 : vector<1x4x8xbf16> to vector<4x8xbf16>
    %cst_34 = arith.constant dense<0.000000e+00> : vector<144x8xf32>
    %36 = tpu.matmul %33, %35, %cst_34 {dimension_numbers = #tpu.dot_dimension_numbers<[1], [0], [0], [1], [0, 0, 1, 1], [], []>} : vector<144x4xbf16>, vector<4x8xbf16>, vector<144x8xf32> -> vector<144x8xf32>
    %37 = arith.addf %32, %36 : vector<144x8xf32>
    %c36 = arith.constant 36 : index
    %c0_35 = arith.constant 0 : index
    %38 = vector.load %arg6[%c36, %c0_35] : memref<182x4xbf16, #tpu.memory_space<vmem>>, vector<144x4xbf16>
    %c6 = arith.constant 6 : index
    %c0_36 = arith.constant 0 : index
    %c0_37 = arith.constant 0 : index
    %39 = vector.load %arg4[%c6, %c0_36, %c0_37] : memref<9x4x8xbf16, #tpu.memory_space<vmem>>, vector<1x4x8xbf16>
    %40 = vector.shape_cast %39 : vector<1x4x8xbf16> to vector<4x8xbf16>
    %cst_38 = arith.constant dense<0.000000e+00> : vector<144x8xf32>
    %41 = tpu.matmul %38, %40, %cst_38 {dimension_numbers = #tpu.dot_dimension_numbers<[1], [0], [0], [1], [0, 0, 1, 1], [], []>} : vector<144x4xbf16>, vector<4x8xbf16>, vector<144x8xf32> -> vector<144x8xf32>
    %42 = arith.addf %37, %41 : vector<144x8xf32>
    %c37 = arith.constant 37 : index
    %c0_39 = arith.constant 0 : index
    %43 = vector.load %arg6[%c37, %c0_39] : memref<182x4xbf16, #tpu.memory_space<vmem>>, vector<144x4xbf16>
    %c7 = arith.constant 7 : index
    %c0_40 = arith.constant 0 : index
    %c0_41 = arith.constant 0 : index
    %44 = vector.load %arg4[%c7, %c0_40, %c0_41] : memref<9x4x8xbf16, #tpu.memory_space<vmem>>, vector<1x4x8xbf16>
    %45 = vector.shape_cast %44 : vector<1x4x8xbf16> to vector<4x8xbf16>
    %cst_42 = arith.constant dense<0.000000e+00> : vector<144x8xf32>
    %46 = tpu.matmul %43, %45, %cst_42 {dimension_numbers = #tpu.dot_dimension_numbers<[1], [0], [0], [1], [0, 0, 1, 1], [], []>} : vector<144x4xbf16>, vector<4x8xbf16>, vector<144x8xf32> -> vector<144x8xf32>
    %47 = arith.addf %42, %46 : vector<144x8xf32>
    %c38 = arith.constant 38 : index
    %c0_43 = arith.constant 0 : index
    %48 = vector.load %arg6[%c38, %c0_43] : memref<182x4xbf16, #tpu.memory_space<vmem>>, vector<144x4xbf16>
    %c8 = arith.constant 8 : index
    %c0_44 = arith.constant 0 : index
    %c0_45 = arith.constant 0 : index
    %49 = vector.load %arg4[%c8, %c0_44, %c0_45] : memref<9x4x8xbf16, #tpu.memory_space<vmem>>, vector<1x4x8xbf16>
    %50 = vector.shape_cast %49 : vector<1x4x8xbf16> to vector<4x8xbf16>
    %cst_46 = arith.constant dense<0.000000e+00> : vector<144x8xf32>
    %51 = tpu.matmul %48, %50, %cst_46 {dimension_numbers = #tpu.dot_dimension_numbers<[1], [0], [0], [1], [0, 0, 1, 1], [], []>} : vector<144x4xbf16>, vector<4x8xbf16>, vector<144x8xf32> -> vector<144x8xf32>
    %52 = arith.addf %47, %51 : vector<144x8xf32>
    %53 = tpu.iota {dimensions = array<i32: 0>} : vector<144x1xi32>
    %c18_i32 = arith.constant 18 : i32
    %c0_i32 = arith.constant 0 : i32
    %54 = arith.cmpi eq, %c18_i32, %c0_i32 : i32
    %c1_i32 = arith.constant 1 : i32
    %55 = arith.select %54, %c1_i32, %c18_i32 : i32
    %56 = vector.broadcast %55 : i32 to vector<144x1xi32>
    %57 = arith.remsi %53, %56 : vector<144x1xi32>
    %c0_i32_47 = arith.constant 0 : i32
    %58 = vector.broadcast %c0_i32_47 : i32 to vector<144x1xi32>
    %59 = arith.cmpi ne, %57, %58 : vector<144x1xi32>
    %c0_i32_48 = arith.constant 0 : i32
    %60 = vector.broadcast %c0_i32_48 : i32 to vector<144x1xi32>
    %61 = arith.cmpi slt, %57, %60 : vector<144x1xi32>
    %c0_i32_49 = arith.constant 0 : i32
    %62 = arith.cmpi slt, %55, %c0_i32_49 : i32
    %63 = vector.broadcast %62 : i1 to vector<144x1xi1>
    %64 = vector.broadcast %63 : vector<144x1xi1> to vector<144x1xi1>
    %65 = arith.xori %61, %64 : vector<144x1xi1>
    %66 = arith.andi %65, %59 : vector<144x1xi1>
    %67 = vector.broadcast %55 : i32 to vector<144x1xi32>
    %68 = arith.addi %57, %67 : vector<144x1xi32>
    %69 = arith.select %66, %68, %57 : vector<144x1xi1>, vector<144x1xi32>
    %c16_i32 = arith.constant 16 : i32
    %70 = vector.broadcast %c16_i32 : i32 to vector<144x1xi32>
    %71 = arith.cmpi slt, %69, %70 : vector<144x1xi32>
    %cst_50 = arith.constant 0.000000e+00 : f32
    %72 = vector.shape_cast %71 : vector<144x1xi1> to vector<144x1xi1>
    %73 = vector.broadcast %72 : vector<144x1xi1> to vector<144x8xi1>
    %74 = vector.broadcast %cst_50 : f32 to vector<144x8xf32>
    %75 = arith.select %73, %52, %74 : vector<144x8xi1>, vector<144x8xf32>
    %cst_51 = arith.constant dense<0.000000e+00> : vector<8xf32>
    %76 = vector.multi_reduction <add>, %75, %cst_51 [0] : vector<144x8xf32> to vector<8xf32>
    %77 = vector.shape_cast %76 : vector<8xf32> to vector<1x8xf32>
    %cst_52 = arith.constant 1.280000e+02 : f32
    %78 = vector.broadcast %cst_52 : f32 to vector<1x8xf32>
    %79 = arith.divf %77, %78 : vector<1x8xf32>
    %80 = vector.broadcast %79 : vector<1x8xf32> to vector<144x8xf32>
    %81 = arith.subf %52, %80 : vector<144x8xf32>
    %cst_53 = arith.constant 0.000000e+00 : f32
    %82 = vector.shape_cast %71 : vector<144x1xi1> to vector<144x1xi1>
    %83 = vector.broadcast %82 : vector<144x1xi1> to vector<144x8xi1>
    %84 = vector.broadcast %cst_53 : f32 to vector<144x8xf32>
    %85 = arith.select %83, %81, %84 : vector<144x8xi1>, vector<144x8xf32>
    %86 = arith.mulf %85, %85 : vector<144x8xf32>
    %cst_54 = arith.constant dense<0.000000e+00> : vector<8xf32>
    %87 = vector.multi_reduction <add>, %86, %cst_54 [0] : vector<144x8xf32> to vector<8xf32>
    %88 = vector.shape_cast %87 : vector<8xf32> to vector<1x8xf32>
    %89 = tpu.concatenate %77, %88 in 0 : vector<1x8xf32>, vector<1x8xf32> -> vector<2x8xf32>
    %90 = vector.shape_cast %89 : vector<2x8xf32> to vector<1x1x2x8xf32>
    %c0_55 = arith.constant 0 : index
    %c0_56 = arith.constant 0 : index
    %c0_57 = arith.constant 0 : index
    %c0_58 = arith.constant 0 : index
    %91 = vector.load %arg5[%c0_55, %c0_56, %c0_57, %c0_58] : memref<1x1x2x8xf32, #tpu.memory_space<vmem>>, vector<1x1x2x8xf32>
    tpu.vector_store %arg5[%c0_55, %c0_56, %c0_57, %c0_58], %90 {strides = array<i32>} : memref<1x1x2x8xf32, #tpu.memory_space<vmem>>, vector<1x1x2x8xf32>,
    return
  }
  func.func @transform_0(%arg0: i32, %arg1: i32) -> (i32, i32, i32) {
    %c0_i32 = arith.constant 0 : i32
    %c0_i32_0 = arith.constant 0 : i32
    return %arg0, %arg1, %c0_i32 : i32, i32, i32
  }
  func.func @transform_1(%arg0: i32, %arg1: i32) -> (i32, i32, i32) {
    %c1_i32 = arith.constant 1 : i32
    %0 = arith.addi %arg1, %c1_i32 : i32
    %c3_i32 = arith.constant 3 : i32
    %1 = arith.muli %0, %c3_i32 : i32
    %c0_i32 = arith.constant 0 : i32
    %c0_i32_0 = arith.constant 0 : i32
    return %arg0, %1, %c0_i32 : i32, i32, i32
  }
  func.func @transform_2(%arg0: i32, %arg1: i32) -> (i32, i32, i32) {
    %c0_i32 = arith.constant 0 : i32
    %c0_i32_0 = arith.constant 0 : i32
    %c0_i32_1 = arith.constant 0 : i32
    %c0_i32_2 = arith.constant 0 : i32
    return %c0_i32, %c0_i32_0, %c0_i32_1 : i32, i32, i32
  }
  func.func @transform_3(%arg0: i32, %arg1: i32) -> (i32, i32, i32, i32) {
    %c0_i32 = arith.constant 0 : i32
    %c0_i32_0 = arith.constant 0 : i32
    %c0_i32_1 = arith.constant 0 : i32
    return %arg0, %arg1, %c0_i32, %c0_i32_0 : i32, i32, i32, i32
  }
}

module attributes {stable_mosaic.version = 11 : i64} {
  func.func @_quant_kernel(%arg0: i32, %arg1: i32, %arg2: memref<1xf32, #tpu.memory_space<smem>>, %arg3: memref<1x144x4xf32, #tpu.memory_space<vmem>>, %arg4: memref<1x48x4xf32, #tpu.memory_space<vmem>>, %arg5: memref<9x4x8xbf16, #tpu.memory_space<vmem>>, %arg6: memref<1x8xf32, #tpu.memory_space<vmem>>, %arg7: memref<1x144x8xf32, #tpu.memory_space<vmem>>, %arg8: memref<182x4xbf16, #tpu.memory_space<vmem>>) attributes {dimension_semantics = [#tpu.dimension_semantics<parallel>, #tpu.dimension_semantics<parallel>], iteration_bounds = array<i64: 2, 2>, scalar_prefetch = 0 : i64, scratch_operands = 1 : i64, tpu.core_type = #tpu.core_type<tc>, window_params = [{transform_indices = @transform_0, window_bounds = array<i64: 1>}, {transform_indices = @transform_1, window_bounds = array<i64: 1, 144, 4>}, {transform_indices = @transform_2, window_bounds = array<i64: 1, 48, 4>}, {pipeline_mode = #tpu.pipeline_mode<synchronous>, transform_indices = @transform_3, window_bounds = array<i64: 9, 4, 8>}, {pipeline_mode = #tpu.pipeline_mode<synchronous>, transform_indices = @transform_4, window_bounds = array<i64: 1, 8>}, {transform_indices = @transform_5, window_bounds = array<i64: 1, 144, 8>}]} {
    %c0 = arith.constant 0 : index
    %0 = memref.load %arg2[%c0] : memref<1xf32, #tpu.memory_space<smem>>
    %cst = arith.constant 1.000000e+00 : f32
    %1 = arith.divf %cst, %0 : f32
    %c0_0 = arith.constant 0 : index
    %c0_1 = arith.constant 0 : index
    %c0_2 = arith.constant 0 : index
    %2 = vector.load %arg3[%c0_0, %c0_1, %c0_2] : memref<1x144x4xf32, #tpu.memory_space<vmem>>, vector<1x144x4xf32>
    %3 = vector.shape_cast %2 : vector<1x144x4xf32> to vector<144x4xf32>
    %4 = vector.broadcast %1 : f32 to vector<144x4xf32>
    %5 = arith.mulf %3, %4 : vector<144x4xf32>
    %cst_3 = arith.constant 5.000000e-01 : f32
    %6 = vector.broadcast %cst_3 : f32 to vector<144x4xf32>
    %7 = arith.addf %5, %6 : vector<144x4xf32>
    %8 = math.floor %7 : vector<144x4xf32>
    %cst_4 = arith.constant -1.280000e+02 : f32
    %cst_5 = arith.constant 1.270000e+02 : f32
    %9 = vector.broadcast %cst_4 : f32 to vector<144x4xf32>
    %10 = arith.maximumf %9, %8 : vector<144x4xf32>
    %11 = vector.broadcast %cst_5 : f32 to vector<144x4xf32>
    %12 = arith.minimumf %11, %10 : vector<144x4xf32>
    %13 = vector.broadcast %0 : f32 to vector<144x4xf32>
    %14 = arith.mulf %12, %13 : vector<144x4xf32>
    %c0_6 = arith.constant 0 : index
    %c0_7 = arith.constant 0 : index
    %c0_8 = arith.constant 0 : index
    %15 = vector.load %arg4[%c0_6, %c0_7, %c0_8] : memref<1x48x4xf32, #tpu.memory_space<vmem>>, vector<1x48x4xf32>
    %16 = vector.shape_cast %15 : vector<1x48x4xf32> to vector<48x4xf32>
    %17 = vector.extract_strided_slice %16 {offsets = [0, 0], sizes = [38, 4], strides = [1, 1]} : vector<48x4xf32> to vector<38x4xf32>
    %18 = vector.broadcast %1 : f32 to vector<38x4xf32>
    %19 = arith.mulf %17, %18 : vector<38x4xf32>
    %cst_9 = arith.constant 5.000000e-01 : f32
    %20 = vector.broadcast %cst_9 : f32 to vector<38x4xf32>
    %21 = arith.addf %19, %20 : vector<38x4xf32>
    %22 = math.floor %21 : vector<38x4xf32>
    %cst_10 = arith.constant -1.280000e+02 : f32
    %cst_11 = arith.constant 1.270000e+02 : f32
    %23 = vector.broadcast %cst_10 : f32 to vector<38x4xf32>
    %24 = arith.maximumf %23, %22 : vector<38x4xf32>
    %25 = vector.broadcast %cst_11 : f32 to vector<38x4xf32>
    %26 = arith.minimumf %25, %24 : vector<38x4xf32>
    %27 = vector.broadcast %0 : f32 to vector<38x4xf32>
    %28 = arith.mulf %26, %27 : vector<38x4xf32>
    %29 = arith.truncf %14 : vector<144x4xf32> to vector<144x4xbf16>
    %c0_12 = arith.constant 0 : index
    %c0_13 = arith.constant 0 : index
    %30 = vector.load %arg8[%c0_12, %c0_13] : memref<182x4xbf16, #tpu.memory_space<vmem>>, vector<144x4xbf16>
    tpu.vector_store %arg8[%c0_12, %c0_13], %29 {strides = array<i32>} : memref<182x4xbf16, #tpu.memory_space<vmem>>, vector<144x4xbf16>,
    %31 = arith.truncf %28 : vector<38x4xf32> to vector<38x4xbf16>
    %c144 = arith.constant 144 : index
    %c0_14 = arith.constant 0 : index
    %32 = vector.load %arg8[%c144, %c0_14] : memref<182x4xbf16, #tpu.memory_space<vmem>>, vector<38x4xbf16>
    tpu.vector_store %arg8[%c144, %c0_14], %31 {strides = array<i32>} : memref<182x4xbf16, #tpu.memory_space<vmem>>, vector<38x4xbf16>,
    %c0_15 = arith.constant 0 : index
    %c0_16 = arith.constant 0 : index
    %33 = vector.load %arg8[%c0_15, %c0_16] : memref<182x4xbf16, #tpu.memory_space<vmem>>, vector<144x4xbf16>
    %c0_17 = arith.constant 0 : index
    %c0_18 = arith.constant 0 : index
    %c0_19 = arith.constant 0 : index
    %34 = vector.load %arg5[%c0_17, %c0_18, %c0_19] : memref<9x4x8xbf16, #tpu.memory_space<vmem>>, vector<1x4x8xbf16>
    %35 = vector.shape_cast %34 : vector<1x4x8xbf16> to vector<4x8xbf16>
    %cst_20 = arith.constant dense<0.000000e+00> : vector<144x8xf32>
    %36 = tpu.matmul %33, %35, %cst_20 {dimension_numbers = #tpu.dot_dimension_numbers<[1], [0], [0], [1], [0, 0, 1, 1], [], []>} : vector<144x4xbf16>, vector<4x8xbf16>, vector<144x8xf32> -> vector<144x8xf32>
    %c1 = arith.constant 1 : index
    %c0_21 = arith.constant 0 : index
    %37 = vector.load %arg8[%c1, %c0_21] : memref<182x4xbf16, #tpu.memory_space<vmem>>, vector<144x4xbf16>
    %c1_22 = arith.constant 1 : index
    %c0_23 = arith.constant 0 : index
    %c0_24 = arith.constant 0 : index
    %38 = vector.load %arg5[%c1_22, %c0_23, %c0_24] : memref<9x4x8xbf16, #tpu.memory_space<vmem>>, vector<1x4x8xbf16>
    %39 = vector.shape_cast %38 : vector<1x4x8xbf16> to vector<4x8xbf16>
    %cst_25 = arith.constant dense<0.000000e+00> : vector<144x8xf32>
    %40 = tpu.matmul %37, %39, %cst_25 {dimension_numbers = #tpu.dot_dimension_numbers<[1], [0], [0], [1], [0, 0, 1, 1], [], []>} : vector<144x4xbf16>, vector<4x8xbf16>, vector<144x8xf32> -> vector<144x8xf32>
    %41 = arith.addf %36, %40 : vector<144x8xf32>
    %c2 = arith.constant 2 : index
    %c0_26 = arith.constant 0 : index
    %42 = vector.load %arg8[%c2, %c0_26] : memref<182x4xbf16, #tpu.memory_space<vmem>>, vector<144x4xbf16>
    %c2_27 = arith.constant 2 : index
    %c0_28 = arith.constant 0 : index
    %c0_29 = arith.constant 0 : index
    %43 = vector.load %arg5[%c2_27, %c0_28, %c0_29] : memref<9x4x8xbf16, #tpu.memory_space<vmem>>, vector<1x4x8xbf16>
    %44 = vector.shape_cast %43 : vector<1x4x8xbf16> to vector<4x8xbf16>
    %cst_30 = arith.constant dense<0.000000e+00> : vector<144x8xf32>
    %45 = tpu.matmul %42, %44, %cst_30 {dimension_numbers = #tpu.dot_dimension_numbers<[1], [0], [0], [1], [0, 0, 1, 1], [], []>} : vector<144x4xbf16>, vector<4x8xbf16>, vector<144x8xf32> -> vector<144x8xf32>
    %46 = arith.addf %41, %45 : vector<144x8xf32>
    %c18 = arith.constant 18 : index
    %c0_31 = arith.constant 0 : index
    %47 = vector.load %arg8[%c18, %c0_31] : memref<182x4xbf16, #tpu.memory_space<vmem>>, vector<144x4xbf16>
    %c3 = arith.constant 3 : index
    %c0_32 = arith.constant 0 : index
    %c0_33 = arith.constant 0 : index
    %48 = vector.load %arg5[%c3, %c0_32, %c0_33] : memref<9x4x8xbf16, #tpu.memory_space<vmem>>, vector<1x4x8xbf16>
    %49 = vector.shape_cast %48 : vector<1x4x8xbf16> to vector<4x8xbf16>
    %cst_34 = arith.constant dense<0.000000e+00> : vector<144x8xf32>
    %50 = tpu.matmul %47, %49, %cst_34 {dimension_numbers = #tpu.dot_dimension_numbers<[1], [0], [0], [1], [0, 0, 1, 1], [], []>} : vector<144x4xbf16>, vector<4x8xbf16>, vector<144x8xf32> -> vector<144x8xf32>
    %51 = arith.addf %46, %50 : vector<144x8xf32>
    %c19 = arith.constant 19 : index
    %c0_35 = arith.constant 0 : index
    %52 = vector.load %arg8[%c19, %c0_35] : memref<182x4xbf16, #tpu.memory_space<vmem>>, vector<144x4xbf16>
    %c4 = arith.constant 4 : index
    %c0_36 = arith.constant 0 : index
    %c0_37 = arith.constant 0 : index
    %53 = vector.load %arg5[%c4, %c0_36, %c0_37] : memref<9x4x8xbf16, #tpu.memory_space<vmem>>, vector<1x4x8xbf16>
    %54 = vector.shape_cast %53 : vector<1x4x8xbf16> to vector<4x8xbf16>
    %cst_38 = arith.constant dense<0.000000e+00> : vector<144x8xf32>
    %55 = tpu.matmul %52, %54, %cst_38 {dimension_numbers = #tpu.dot_dimension_numbers<[1], [0], [0], [1], [0, 0, 1, 1], [], []>} : vector<144x4xbf16>, vector<4x8xbf16>, vector<144x8xf32> -> vector<144x8xf32>
    %56 = arith.addf %51, %55 : vector<144x8xf32>
    %c20 = arith.constant 20 : index
    %c0_39 = arith.constant 0 : index
    %57 = vector.load %arg8[%c20, %c0_39] : memref<182x4xbf16, #tpu.memory_space<vmem>>, vector<144x4xbf16>
    %c5 = arith.constant 5 : index
    %c0_40 = arith.constant 0 : index
    %c0_41 = arith.constant 0 : index
    %58 = vector.load %arg5[%c5, %c0_40, %c0_41] : memref<9x4x8xbf16, #tpu.memory_space<vmem>>, vector<1x4x8xbf16>
    %59 = vector.shape_cast %58 : vector<1x4x8xbf16> to vector<4x8xbf16>
    %cst_42 = arith.constant dense<0.000000e+00> : vector<144x8xf32>
    %60 = tpu.matmul %57, %59, %cst_42 {dimension_numbers = #tpu.dot_dimension_numbers<[1], [0], [0], [1], [0, 0, 1, 1], [], []>} : vector<144x4xbf16>, vector<4x8xbf16>, vector<144x8xf32> -> vector<144x8xf32>
    %61 = arith.addf %56, %60 : vector<144x8xf32>
    %c36 = arith.constant 36 : index
    %c0_43 = arith.constant 0 : index
    %62 = vector.load %arg8[%c36, %c0_43] : memref<182x4xbf16, #tpu.memory_space<vmem>>, vector<144x4xbf16>
    %c6 = arith.constant 6 : index
    %c0_44 = arith.constant 0 : index
    %c0_45 = arith.constant 0 : index
    %63 = vector.load %arg5[%c6, %c0_44, %c0_45] : memref<9x4x8xbf16, #tpu.memory_space<vmem>>, vector<1x4x8xbf16>
    %64 = vector.shape_cast %63 : vector<1x4x8xbf16> to vector<4x8xbf16>
    %cst_46 = arith.constant dense<0.000000e+00> : vector<144x8xf32>
    %65 = tpu.matmul %62, %64, %cst_46 {dimension_numbers = #tpu.dot_dimension_numbers<[1], [0], [0], [1], [0, 0, 1, 1], [], []>} : vector<144x4xbf16>, vector<4x8xbf16>, vector<144x8xf32> -> vector<144x8xf32>
    %66 = arith.addf %61, %65 : vector<144x8xf32>
    %c37 = arith.constant 37 : index
    %c0_47 = arith.constant 0 : index
    %67 = vector.load %arg8[%c37, %c0_47] : memref<182x4xbf16, #tpu.memory_space<vmem>>, vector<144x4xbf16>
    %c7 = arith.constant 7 : index
    %c0_48 = arith.constant 0 : index
    %c0_49 = arith.constant 0 : index
    %68 = vector.load %arg5[%c7, %c0_48, %c0_49] : memref<9x4x8xbf16, #tpu.memory_space<vmem>>, vector<1x4x8xbf16>
    %69 = vector.shape_cast %68 : vector<1x4x8xbf16> to vector<4x8xbf16>
    %cst_50 = arith.constant dense<0.000000e+00> : vector<144x8xf32>
    %70 = tpu.matmul %67, %69, %cst_50 {dimension_numbers = #tpu.dot_dimension_numbers<[1], [0], [0], [1], [0, 0, 1, 1], [], []>} : vector<144x4xbf16>, vector<4x8xbf16>, vector<144x8xf32> -> vector<144x8xf32>
    %71 = arith.addf %66, %70 : vector<144x8xf32>
    %c38 = arith.constant 38 : index
    %c0_51 = arith.constant 0 : index
    %72 = vector.load %arg8[%c38, %c0_51] : memref<182x4xbf16, #tpu.memory_space<vmem>>, vector<144x4xbf16>
    %c8 = arith.constant 8 : index
    %c0_52 = arith.constant 0 : index
    %c0_53 = arith.constant 0 : index
    %73 = vector.load %arg5[%c8, %c0_52, %c0_53] : memref<9x4x8xbf16, #tpu.memory_space<vmem>>, vector<1x4x8xbf16>
    %74 = vector.shape_cast %73 : vector<1x4x8xbf16> to vector<4x8xbf16>
    %cst_54 = arith.constant dense<0.000000e+00> : vector<144x8xf32>
    %75 = tpu.matmul %72, %74, %cst_54 {dimension_numbers = #tpu.dot_dimension_numbers<[1], [0], [0], [1], [0, 0, 1, 1], [], []>} : vector<144x4xbf16>, vector<4x8xbf16>, vector<144x8xf32> -> vector<144x8xf32>
    %76 = arith.addf %71, %75 : vector<144x8xf32>
    %c0_55 = arith.constant 0 : index
    %c0_56 = arith.constant 0 : index
    %77 = vector.load %arg6[%c0_55, %c0_56] : memref<1x8xf32, #tpu.memory_space<vmem>>, vector<1x8xf32>
    %78 = vector.broadcast %77 : vector<1x8xf32> to vector<144x8xf32>
    %79 = arith.addf %76, %78 : vector<144x8xf32>
    %80 = vector.shape_cast %79 : vector<144x8xf32> to vector<1x144x8xf32>
    %c0_57 = arith.constant 0 : index
    %c0_58 = arith.constant 0 : index
    %c0_59 = arith.constant 0 : index
    %81 = vector.load %arg7[%c0_57, %c0_58, %c0_59] : memref<1x144x8xf32, #tpu.memory_space<vmem>>, vector<1x144x8xf32>
    tpu.vector_store %arg7[%c0_57, %c0_58, %c0_59], %80 {strides = array<i32>} : memref<1x144x8xf32, #tpu.memory_space<vmem>>, vector<1x144x8xf32>,
    return
  }
  func.func @transform_0(%arg0: i32, %arg1: i32) -> i32 {
    %c0_i32 = arith.constant 0 : i32
    %c0_i32_0 = arith.constant 0 : i32
    return %c0_i32 : i32
  }
  func.func @transform_1(%arg0: i32, %arg1: i32) -> (i32, i32, i32) {
    %c0_i32 = arith.constant 0 : i32
    %c0_i32_0 = arith.constant 0 : i32
    return %arg0, %arg1, %c0_i32 : i32, i32, i32
  }
  func.func @transform_2(%arg0: i32, %arg1: i32) -> (i32, i32, i32) {
    %c1_i32 = arith.constant 1 : i32
    %0 = arith.addi %arg1, %c1_i32 : i32
    %c3_i32 = arith.constant 3 : i32
    %1 = arith.muli %0, %c3_i32 : i32
    %c0_i32 = arith.constant 0 : i32
    %c0_i32_0 = arith.constant 0 : i32
    return %arg0, %1, %c0_i32 : i32, i32, i32
  }
  func.func @transform_3(%arg0: i32, %arg1: i32) -> (i32, i32, i32) {
    %c0_i32 = arith.constant 0 : i32
    %c0_i32_0 = arith.constant 0 : i32
    %c0_i32_1 = arith.constant 0 : i32
    %c0_i32_2 = arith.constant 0 : i32
    return %c0_i32, %c0_i32_0, %c0_i32_1 : i32, i32, i32
  }
  func.func @transform_4(%arg0: i32, %arg1: i32) -> (i32, i32) {
    %c0_i32 = arith.constant 0 : i32
    %c0_i32_0 = arith.constant 0 : i32
    %c0_i32_1 = arith.constant 0 : i32
    return %c0_i32, %c0_i32_0 : i32, i32
  }
  func.func @transform_5(%arg0: i32, %arg1: i32) -> (i32, i32, i32) {
    %c0_i32 = arith.constant 0 : i32
    %c0_i32_0 = arith.constant 0 : i32
    return %arg0, %arg1, %c0_i32 : i32, i32, i32
  }
}

</mosaic_0001>

<llo_original>
// kernel: conv_bn_quant_forward.3
$region0: #{conv_bn_quant_forward.3}
  #allocation0 [shape = 'u32[]', space=smem, size = 0x4, offset = 0x4, fixed_abs, tag = 'smem constant byte address 0x4 - core index']
  #allocation1 [shape = 'u32[144,128]{1,0:T(1,128)}', space=vmem, size = 0x12000, scoped, tag = 'internal scratch']
  #allocation2 [shape = 'bf16[182,4]{1,0:T(8,128)(2,1)}', space=vmem, size = 0xb800, scoped, tag = 'scratch operand']
  #allocation3 [shape = 'f32[1]{0:T(128)S(6)}', space=smem, size = 0x200, scoped, tag = 'scoped memory for conv_bn_quant_forward.3']
  %s0 = inlined_call_operand.<no memory space> [shape: f32[1], index: 0, kind: input, shape index: {}]
  %s1 = inlined_call_operand.vmem [shape: f32[2,326,4], index: 1, kind: input, shape index: {}, may-alias: {1,2}]
  %s2 = inlined_call_operand.vmem [shape: f32[2,326,4], index: 2, kind: input, shape index: {}, may-alias: {1,2}]
  %s3 = inlined_call_operand.vmem [shape: bf16[9,4,8], index: 3, kind: input, shape index: {}]
  %s4 = inlined_call_operand.vmem [shape: f32[1,8], index: 4, kind: input, shape index: {}]
  %s5 = inlined_call_operand.vmem [shape: f32[2,288,8], index: 5, kind: output, shape index: {}]
  %s6 = sld [smem:[#allocation0]]
  $region53: #{conv_bn_quant_forward.3} parent=0
    _
  %s8 = ssub.s32 1, %s6
  %s9 = scalar_select 0, %s8, %s6
  %10 = sst [smem:[#allocation3]] %s0
  loop: start=0, step=1, limit=6
  $region2: #{conv_bn_quant_forward.3} parent=0 // loop_pre_header
    _
  $region3: #{conv_bn_quant_forward.3} parent=0 // loop_header
    %s12 = sphi 0, %s16
    %p13 = scmp.ge.s32.totalorder %s12, 6
    %s19 = sphi 0, %s31
    %s20 = sphi 0, %s27
    %s21 = sphi 0, %s19
    %s22 = sphi 0, %s20
    %s23 = sphi 0, %s21
    %s24 = sphi 0, %s22
    %s32 = sphi 0, %s32
    %s34 = sphi 0, %s32
    %s35 = sphi 0, %s34
    %s49 = sphi 0, %s35
    %s57 = sphi 0, %s59
    %s60 = sphi 0, %s57
    %s61 = sphi 0, %s60
    %s77 = sphi 0, %s61
    %s89 = sphi 0, %s91
    %s92 = sphi 0, %s89
    %s93 = sphi 0, %s92
    %s109 = sphi 0, %s93
    %s113 = sphi 0, %s113
    %s115 = sphi 0, %s113
    %s116 = sphi 0, %s115
    %s130 = sphi 0, %s116
    %s134 = sphi 0, %s134
    %s136 = sphi 0, %s134
    %s137 = sphi 0, %s136
    %s151 = sphi 0, %s137
    %s159 = sphi 0, %s161
    %s162 = sphi 0, %s159
    %s163 = sphi 0, %s162
    %s179 = sphi 0, %s163
  $region4: #{conv_bn_quant_forward.3} parent=0 // loop_header_branch
    %15 = sbr.rel (%p13) target = $region8
  $region5: #{conv_bn_quant_forward.3} parent=0 // loop_body
    %s17 = ssub.s32 %s12, 1
    %s18 = ssub.s32 %s12, 2
    %s25 = sadd.s32 1, %s20
    %p26 = scmp.ge.s32.totalorder %s25, 2
    %s27 = scalar_select %p26, 0, %s25
    %s28 = sadd.s32 1, %s19
    %s29 = scalar_select %p26, %s28, %s19
    %p30 = scmp.ge.s32.totalorder %s29, 2
    %s31 = scalar_select %p30, 0, %s29
    %s33 = sadd.s32 %s32, 1
    %p36 = scmp.eq.s32.totalorder %s12, 3
    %p37 = scmp.ne.s32.totalorder %s32, %s34
    %p38 = scmp.eq.s32.totalorder %s12, 0
    %p39 = por %p37, %p38
    %p40 = scmp.ne.s32.totalorder %s32, %s34
    %p41 = scmp.eq.s32.totalorder %s17, 3
    %p42 = por %p40, %p41
    %p43 = scmp.ne.s32.totalorder %s34, %s35
    %p44 = scmp.eq.s32.totalorder %s17, 0
    %p45 = por %p43, %p44
    %p46 = scmp.ne.s32.totalorder %s34, %s35
    %p47 = scmp.eq.s32.totalorder %s18, 3
    %p48 = por %p46, %p47
    %p50 = scmp.ne.s32.totalorder %s35, %s49
    %p51 = scmp.eq.s32.totalorder %s18, 0
    %p52 = por %p50, %p51
    %s53 = ssub.s32 %s19, %s31
    %s54 = ssub.s32 %s20, %s27
    %s55 = sor.u32 %s53, %s54
    %p56 = scmp.eq.s32.totalorder %s55, 0
    %s58 = sadd.s32 %s57, 1
    %s59 = scalar_select %p56, %s57, %s58
    %p62 = pneg %p56
    %p63 = scmp.eq.s32.totalorder %s12, 3
    %p64 = por %p62, %p63
    %p65 = scmp.ne.s32.totalorder %s57, %s60
    %p66 = scmp.eq.s32.totalorder %s12, 0
    %p67 = por %p65, %p66
    %p68 = scmp.ne.s32.totalorder %s57, %s60
    %p69 = scmp.eq.s32.totalorder %s17, 3
    %p70 = por %p68, %p69
    %p71 = scmp.ne.s32.totalorder %s60, %s61
    %p72 = scmp.eq.s32.totalorder %s17, 0
    %p73 = por %p71, %p72
    %p74 = scmp.ne.s32.totalorder %s60, %s61
    %p75 = scmp.eq.s32.totalorder %s18, 3
    %p76 = por %p74, %p75
    %p78 = scmp.ne.s32.totalorder %s61, %s77
    %p79 = scmp.eq.s32.totalorder %s18, 0
    %p80 = por %p78, %p79
    %s81 = sadd.s32 %s20, 1
    %s82 = smul.u32 %s81, 3
    %s83 = sadd.s32 %s27, 1
    %s84 = smul.u32 %s83, 3
    %s85 = ssub.s32 %s19, %s31
    %s86 = ssub.s32 %s82, %s84
    %s87 = sor.u32 %s85, %s86
    %p88 = scmp.eq.s32.totalorder %s87, 0
    %s90 = sadd.s32 %s89, 1
    %s91 = scalar_select %p88, %s89, %s90
    %p94 = pneg %p88
    %p95 = scmp.eq.s32.totalorder %s12, 3
    %p96 = por %p94, %p95
    %p97 = scmp.ne.s32.totalorder %s89, %s92
    %p98 = scmp.eq.s32.totalorder %s12, 0
    %p99 = por %p97, %p98
    %p100 = scmp.ne.s32.totalorder %s89, %s92
    %p101 = scmp.eq.s32.totalorder %s17, 3
    %p102 = por %p100, %p101
    %p103 = scmp.ne.s32.totalorder %s92, %s93
    %p104 = scmp.eq.s32.totalorder %s17, 0
    %p105 = por %p103, %p104
    %p106 = scmp.ne.s32.totalorder %s92, %s93
    %p107 = scmp.eq.s32.totalorder %s18, 3
    %p108 = por %p106, %p107
    %p110 = scmp.ne.s32.totalorder %s93, %s109
    %p111 = scmp.eq.s32.totalorder %s18, 0
    %p112 = por %p110, %p111
    %s114 = sadd.s32 %s113, 1
    %p117 = scmp.eq.s32.totalorder %s12, 3
    %p118 = scmp.ne.s32.totalorder %s113, %s115
    %p119 = scmp.eq.s32.totalorder %s12, 0
    %p120 = por %p118, %p119
    %p121 = scmp.ne.s32.totalorder %s113, %s115
    %p122 = scmp.eq.s32.totalorder %s17, 3
    %p123 = por %p121, %p122
    %p124 = scmp.ne.s32.totalorder %s115, %s116
    %p125 = scmp.eq.s32.totalorder %s17, 0
    %p126 = por %p124, %p125
    %p127 = scmp.ne.s32.totalorder %s115, %s116
    %p128 = scmp.eq.s32.totalorder %s18, 3
    %p129 = por %p127, %p128
    %p131 = scmp.ne.s32.totalorder %s116, %s130
    %p132 = scmp.eq.s32.totalorder %s18, 0
    %p133 = por %p131, %p132
    %s135 = sadd.s32 %s134, 1
    %p138 = scmp.eq.s32.totalorder %s12, 3
    %p139 = scmp.ne.s32.totalorder %s134, %s136
    %p140 = scmp.eq.s32.totalorder %s12, 0
    %p141 = por %p139, %p140
    %p142 = scmp.ne.s32.totalorder %s134, %s136
    %p143 = scmp.eq.s32.totalorder %s17, 3
    %p144 = por %p142, %p143
    %p145 = scmp.ne.s32.totalorder %s136, %s137
    %p146 = scmp.eq.s32.totalorder %s17, 0
    %p147 = por %p145, %p146
    %p148 = scmp.ne.s32.totalorder %s136, %s137
    %p149 = scmp.eq.s32.totalorder %s18, 3
    %p150 = por %p148, %p149
    %p152 = scmp.ne.s32.totalorder %s137, %s151
    %p153 = scmp.eq.s32.totalorder %s18, 0
    %p154 = por %p152, %p153
    %s155 = ssub.s32 %s19, %s31
    %s156 = ssub.s32 %s20, %s27
    %s157 = sor.u32 %s155, %s156
    %p158 = scmp.eq.s32.totalorder %s157, 0
    %s160 = sadd.s32 %s159, 1
    %s161 = scalar_select %p158, %s159, %s160
    %p164 = pneg %p158
    %p165 = scmp.eq.s32.totalorder %s12, 3
    %p166 = por %p164, %p165
    %p167 = scmp.ne.s32.totalorder %s159, %s162
    %p168 = scmp.eq.s32.totalorder %s12, 0
    %p169 = por %p167, %p168
    %p170 = scmp.ne.s32.totalorder %s159, %s162
    %p171 = scmp.eq.s32.totalorder %s17, 3
    %p172 = por %p170, %p171
    %p173 = scmp.ne.s32.totalorder %s162, %s163
    %p174 = scmp.eq.s32.totalorder %s17, 0
    %p175 = por %p173, %p174
    %p176 = scmp.ne.s32.totalorder %s162, %s163
    %p177 = scmp.eq.s32.totalorder %s18, 3
    %p178 = por %p176, %p177
    %p180 = scmp.ne.s32.totalorder %s163, %s179
    %p181 = scmp.eq.s32.totalorder %s18, 0
    %p182 = por %p180, %p181
    %p183 = scmp.le.s32.totalorder 1, %s12
    %p184 = scmp.lt.s32.totalorder %s12, 5
    %p185 = pnand %p183, %p184
    %p186 = pneg %p185
    // Predicated region
    $region9: #{conv_bn_quant_forward.3} parent=5 // pred_check
      _
    $region10: #{conv_bn_quant_forward.3} parent=5 // pred_check_branch
      %188 = sbr.rel (%p185) target = $region12
    $region11: #{conv_bn_quant_forward.3} parent=5 // pred_region
      %s189 = ssub.s32 %s12, 1
      // Predicated region
      $region13: #{conv_bn_quant_forward.3} parent=11 // pred_check
        %p190 = pneg %p45
      $region14: #{conv_bn_quant_forward.3} parent=11 // pred_check_branch
        %192 = sbr.rel (%p190) target = $region16
      $region15: #{conv_bn_quant_forward.3} parent=11 // pred_region
        _
      $region16: #{conv_bn_quant_forward.3} parent=11 // pred_fallthru
        _
      // Predicated region
      $region17: #{conv_bn_quant_forward.3} parent=11 // pred_check
        %p193 = pneg %p126
      $region18: #{conv_bn_quant_forward.3} parent=11 // pred_check_branch
        %195 = sbr.rel (%p193) target = $region20
      $region19: #{conv_bn_quant_forward.3} parent=11 // pred_region
        _
      $region20: #{conv_bn_quant_forward.3} parent=11 // pred_fallthru
        _
      // Predicated region
      $region21: #{conv_bn_quant_forward.3} parent=11 // pred_check
        %p196 = pneg %p147
      $region22: #{conv_bn_quant_forward.3} parent=11 // pred_check_branch
        %198 = sbr.rel (%p196) target = $region24
      $region23: #{conv_bn_quant_forward.3} parent=11 // pred_region
        _
      $region24: #{conv_bn_quant_forward.3} parent=11 // pred_fallthru
        _
    $region12: #{conv_bn_quant_forward.3} parent=5 // pred_fallthru
      _
    %p199 = scmp.lt.s32.totalorder %s12, 4
    // Predicated region
    $region25: #{conv_bn_quant_forward.3} parent=5 // pred_check
      %p200 = pneg %p199
    $region26: #{conv_bn_quant_forward.3} parent=5 // pred_check_branch
      %202 = sbr.rel (%p200) target = $region28
    $region27: #{conv_bn_quant_forward.3} parent=5 // pred_region
      // Predicated region
      $region29: #{conv_bn_quant_forward.3} parent=27 // pred_check
        %p203 = pneg %p67
      $region30: #{conv_bn_quant_forward.3} parent=27 // pred_check_branch
        %205 = sbr.rel (%p203) target = $region32
      $region31: #{conv_bn_quant_forward.3} parent=27 // pred_region
        %s206 = smul.u32 18, %s20
        %s207 = ssub.s32 41, %s206
        %p208 = scmp.lt.s32.totalorder %s207, 18
        %s209 = scalar_select %p208, %s207, 18
        %s210 = smul.u32 128, %s209
        %p211 = scmp.lt.s32.totalorder %s19, 1
        %s212 = scalar_select %p211, %s19, 1
        %p213 = scmp.lt.s32.totalorder %s206, 40
        %s214 = scalar_select %p213, %s206, 40
        %s215 = smul.addr %s212, 41
        %s216 = sadd.s32 %s214, %s215
        %s217 = smul.addr %s216, 8
        %s218 = scalar_lea.vmem %s1, %s217
        %s219 = smul.u32 18, %s20
        %s220 = ssub.s32 41, %s219
        %p221 = scmp.lt.s32.totalorder %s220, 18
        %s222 = scalar_select %p221, %s220, 18
        %s223 = smul.u32 128, %s222
      $region32: #{conv_bn_quant_forward.3} parent=27 // pred_fallthru
        _
      // Predicated region
      $region33: #{conv_bn_quant_forward.3} parent=27 // pred_check
        %p224 = pneg %p99
      $region34: #{conv_bn_quant_forward.3} parent=27 // pred_check_branch
        %226 = sbr.rel (%p224) target = $region36
      $region35: #{conv_bn_quant_forward.3} parent=27 // pred_region
        %s227 = sadd.s32 %s20, 1
        %s228 = smul.u32 %s227, 3
        %s229 = smul.u32 6, %s228
        %s230 = ssub.s32 41, %s229
        %p231 = scmp.lt.s32.totalorder %s230, 6
        %s232 = scalar_select %p231, %s230, 6
        %s233 = smul.u32 128, %s232
        %p234 = scmp.lt.s32.totalorder %s19, 1
        %s235 = scalar_select %p234, %s19, 1
        %p236 = scmp.lt.s32.totalorder %s229, 40
        %s237 = scalar_select %p236, %s229, 40
        %s238 = smul.addr %s235, 41
        %s239 = sadd.s32 %s237, %s238
        %s240 = smul.addr %s239, 8
        %s241 = scalar_lea.vmem %s2, %s240
        %s242 = sadd.s32 %s20, 1
        %s243 = smul.u32 %s242, 3
        %s244 = smul.u32 6, %s243
        %s245 = ssub.s32 41, %s244
        %p246 = scmp.lt.s32.totalorder %s245, 6
        %s247 = scalar_select %p246, %s245, 6
        %s248 = smul.u32 128, %s247
      $region36: #{conv_bn_quant_forward.3} parent=27 // pred_fallthru
        _
    $region28: #{conv_bn_quant_forward.3} parent=5 // pred_fallthru
      _
    %p249 = scmp.le.s32.totalorder 1, %s12
    %p250 = scmp.lt.s32.totalorder %s12, 5
    %p251 = pnand %p249, %p250
    %p252 = pneg %p251
    // Predicated region
    $region37: #{conv_bn_quant_forward.3} parent=5 // pred_check
      _
    $region38: #{conv_bn_quant_forward.3} parent=5 // pred_check_branch
      %254 = sbr.rel (%p251) target = $region40
    $region39: #{conv_bn_quant_forward.3} parent=5 // pred_region
      %s255 = ssub.s32 %s12, 1
      %p256 = pneg %p45
      %p257 = pneg %p42
      %s258 = smul.u32 18, %s22
      %s259 = ssub.s32 41, %s258
      %p260 = scmp.lt.s32.totalorder %s259, 18
      %s261 = scalar_select %p260, %s259, 18
      %s262 = smul.u32 128, %s261
      %p263 = scmp.lt.s32.totalorder %s21, 1
      %s264 = scalar_select %p263, %s21, 1
      %p265 = scmp.lt.s32.totalorder %s258, 40
      %s266 = scalar_select %p265, %s258, 40
      %s267 = smul.addr %s264, 41
      %s268 = sadd.s32 %s266, %s267
      %s269 = smul.addr %s268, 8
      %s270 = scalar_lea.vmem %s1, %s269
      %p271 = pneg %p73
      %p272 = pneg %p70
      %s273 = sadd.s32 %s22, 1
      %s274 = smul.u32 %s273, 3
      %s275 = smul.u32 6, %s274
      %s276 = ssub.s32 41, %s275
      %p277 = scmp.lt.s32.totalorder %s276, 6
      %s278 = scalar_select %p277, %s276, 6
      %s279 = smul.u32 128, %s278
      %p280 = scmp.lt.s32.totalorder %s21, 1
      %s281 = scalar_select %p280, %s21, 1
      %p282 = scmp.lt.s32.totalorder %s275, 40
      %s283 = scalar_select %p282, %s275, 40
      %s284 = smul.addr %s281, 41
      %s285 = sadd.s32 %s283, %s284
      %s286 = smul.addr %s285, 8
      %s287 = scalar_lea.vmem %s2, %s286
      %p288 = pneg %p105
      %p289 = pneg %p102
      %p290 = pneg %p126
      %p291 = pneg %p123
      %p292 = pneg %p147
      %p293 = pneg %p144
      %p294 = pneg %p175
      %p295 = pneg %p172
      %s296 = smul.u32 18, %s22
      %p297 = scmp.lt.s32.totalorder %s21, 1
      %s298 = scalar_select %p297, %s21, 1
      %p299 = scmp.lt.s32.totalorder %s296, 35
      %s300 = scalar_select %p299, %s296, 35
      %s301 = smul.addr %s298, 36
      %s302 = sadd.s32 %s300, %s301
      %s303 = smul.addr %s302, 8
      %s304 = scalar_lea.vmem %s5, %s303
      %s305 = smul.u32 18, %s22
      %s306 = ssub.s32 41, %s305
      %p307 = scmp.lt.s32.totalorder %s306, 18
      %s308 = scalar_select %p307, %s306, 18
      %s309 = smul.u32 128, %s308
      %p310 = scmp.lt.s32.totalorder %s21, 1
      %s311 = scalar_select %p310, %s21, 1
      %p312 = scmp.lt.s32.totalorder %s305, 40
      %s313 = scalar_select %p312, %s305, 40
      %s314 = smul.addr %s311, 41
      %s315 = sadd.s32 %s313, %s314
      %s316 = smul.addr %s315, 8
      %s317 = scalar_lea.vmem %s1, %s316
      %s318 = smul.u32 18, %s22
      %s319 = ssub.s32 41, %s318
      %p320 = scmp.lt.s32.totalorder %s319, 18
      %s321 = scalar_select %p320, %s319, 18
      %s322 = smul.u32 128, %s321
      %s323 = sadd.s32 %s22, 1
      %s324 = smul.u32 %s323, 3
      %s325 = smul.u32 6, %s324
      %s326 = ssub.s32 41, %s325
      %p327 = scmp.lt.s32.totalorder %s326, 6
      %s328 = scalar_select %p327, %s326, 6
      %s329 = smul.u32 128, %s328
      %p330 = scmp.lt.s32.totalorder %s21, 1
      %s331 = scalar_select %p330, %s21, 1
      %p332 = scmp.lt.s32.totalorder %s325, 40
      %s333 = scalar_select %p332, %s325, 40
      %s334 = smul.addr %s331, 41
      %s335 = sadd.s32 %s333, %s334
      %s336 = smul.addr %s335, 8
      %s337 = scalar_lea.vmem %s2, %s336
      %s338 = sadd.s32 %s22, 1
      %s339 = smul.u32 %s338, 3
      %s340 = smul.u32 6, %s339
      %s341 = ssub.s32 41, %s340
      %p342 = scmp.lt.s32.totalorder %s341, 6
      %s343 = scalar_select %p342, %s341, 6
      %s344 = smul.u32 128, %s343
      %s345 = smul.u32 18, %s22
      %p346 = scmp.lt.s32.totalorder %s21, 1
      %s347 = scalar_select %p346, %s21, 1
      %p348 = scmp.lt.s32.totalorder %s345, 35
      %s349 = scalar_select %p348, %s345, 35
      %s350 = smul.addr %s347, 36
      %s351 = sadd.s32 %s349, %s350
      %s352 = smul.addr %s351, 8
      %s353 = scalar_lea.vmem %s5, %s352
      %s354 = smul.u32 18, %s22
      %s356 = sld [smem:[#allocation3]]
      %v357 = vstv %s356
      %v358 = vrcp.pop %v357
      %s359 = vtos %v358
      %v360 = vld [vmem:[%s317] sm:$0xff]
      %v361 = vld [vmem:[%s317 + $0x8] sm:$0xff]
      %v362 = vld [vmem:[%s317 + $0x10] sm:$0xff]
      %v363 = vld [vmem:[%s317 + $0x18] sm:$0xff]
      %v364 = vld [vmem:[%s317 + $0x20] sm:$0xff]
      %v365 = vld [vmem:[%s317 + $0x28] sm:$0xff]
      %v366 = vld [vmem:[%s317 + $0x30] sm:$0xff]
      %v367 = vld [vmem:[%s317 + $0x38] sm:$0xff]
      %v368 = vld [vmem:[%s317 + $0x40] sm:$0xff]
      %v369 = vld [vmem:[%s317 + $0x48] sm:$0xff]
      %v370 = vld [vmem:[%s317 + $0x50] sm:$0xff]
      %v371 = vld [vmem:[%s317 + $0x58] sm:$0xff]
      %v372 = vld [vmem:[%s317 + $0x60] sm:$0xff]
      %v373 = vld [vmem:[%s317 + $0x68] sm:$0xff]
      %v374 = vld [vmem:[%s317 + $0x70] sm:$0xff]
      %v375 = vld [vmem:[%s317 + $0x78] sm:$0xff]
      %v376 = vld [vmem:[%s317 + $0x80] sm:$0xff]
      %v377 = vld [vmem:[%s317 + $0x88] sm:$0xff]
      %v378 = vstv %s359
      %v379 = vmul.f32 %v360, %v378
      %v380 = vmul.f32 %v361, %v378
      %v381 = vmul.f32 %v362, %v378
      %v382 = vmul.f32 %v363, %v378
      %v383 = vmul.f32 %v364, %v378
      %v384 = vmul.f32 %v365, %v378
      %v385 = vmul.f32 %v366, %v378
      %v386 = vmul.f32 %v367, %v378
      %v387 = vmul.f32 %v368, %v378
      %v388 = vmul.f32 %v369, %v378
      %v389 = vmul.f32 %v370, %v378
      %v390 = vmul.f32 %v371, %v378
      %v391 = vmul.f32 %v372, %v378
      %v392 = vmul.f32 %v373, %v378
      %v393 = vmul.f32 %v374, %v378
      %v394 = vmul.f32 %v375, %v378
      %v395 = vmul.f32 %v376, %v378
      %v396 = vmul.f32 %v377, %v378
      %v397 = vadd.f32 %v379, 0.5
      %v398 = vadd.f32 %v380, 0.5
      %v399 = vadd.f32 %v381, 0.5
      %v400 = vadd.f32 %v382, 0.5
      %v401 = vadd.f32 %v383, 0.5
      %v402 = vadd.f32 %v384, 0.5
      %v403 = vadd.f32 %v385, 0.5
      %v404 = vadd.f32 %v386, 0.5
      %v405 = vadd.f32 %v387, 0.5
      %v406 = vadd.f32 %v388, 0.5
      %v407 = vadd.f32 %v389, 0.5
      %v408 = vadd.f32 %v390, 0.5
      %v409 = vadd.f32 %v391, 0.5
      %v410 = vadd.f32 %v392, 0.5
      %v411 = vadd.f32 %v393, 0.5
      %v412 = vadd.f32 %v394, 0.5
      %v413 = vadd.f32 %v395, 0.5
      %v414 = vadd.f32 %v396, 0.5
      %v415 = vfloor.f32 %v397
      %v416 = vfloor.f32 %v398
      %v417 = vfloor.f32 %v399
      %v418 = vfloor.f32 %v400
      %v419 = vfloor.f32 %v401
      %v420 = vfloor.f32 %v402
      %v421 = vfloor.f32 %v403
      %v422 = vfloor.f32 %v404
      %v423 = vfloor.f32 %v405
      %v424 = vfloor.f32 %v406
      %v425 = vfloor.f32 %v407
      %v426 = vfloor.f32 %v408
      %v427 = vfloor.f32 %v409
      %v428 = vfloor.f32 %v410
      %v429 = vfloor.f32 %v411
      %v430 = vfloor.f32 %v412
      %v431 = vfloor.f32 %v413
      %v432 = vfloor.f32 %v414
      %v433 = vmax.f32 %v415, -128.0
      %v434 = vmax.f32 %v416, -128.0
      %v435 = vmax.f32 %v417, -128.0
      %v436 = vmax.f32 %v418, -128.0
      %v437 = vmax.f32 %v419, -128.0
      %v438 = vmax.f32 %v420, -128.0
      %v439 = vmax.f32 %v421, -128.0
      %v440 = vmax.f32 %v422, -128.0
      %v441 = vmax.f32 %v423, -128.0
      %v442 = vmax.f32 %v424, -128.0
      %v443 = vmax.f32 %v425, -128.0
      %v444 = vmax.f32 %v426, -128.0
      %v445 = vmax.f32 %v427, -128.0
      %v446 = vmax.f32 %v428, -128.0
      %v447 = vmax.f32 %v429, -128.0
      %v448 = vmax.f32 %v430, -128.0
      %v449 = vmax.f32 %v431, -128.0
      %v450 = vmax.f32 %v432, -128.0
      %v451 = vmin.f32 %v433, 127.0
      %v452 = vmin.f32 %v434, 127.0
      %v453 = vmin.f32 %v435, 127.0
      %v454 = vmin.f32 %v436, 127.0
      %v455 = vmin.f32 %v437, 127.0
      %v456 = vmin.f32 %v438, 127.0
      %v457 = vmin.f32 %v439, 127.0
      %v458 = vmin.f32 %v440, 127.0
      %v459 = vmin.f32 %v441, 127.0
      %v460 = vmin.f32 %v442, 127.0
      %v461 = vmin.f32 %v443, 127.0
      %v462 = vmin.f32 %v444, 127.0
      %v463 = vmin.f32 %v445, 127.0
      %v464 = vmin.f32 %v446, 127.0
      %v465 = vmin.f32 %v447, 127.0
      %v466 = vmin.f32 %v448, 127.0
      %v467 = vmin.f32 %v449, 127.0
      %v468 = vmin.f32 %v450, 127.0
      %v469 = vstv %s356
      %v470 = vmul.f32 %v451, %v469
      %v471 = vmul.f32 %v452, %v469
      %v472 = vmul.f32 %v453, %v469
      %v473 = vmul.f32 %v454, %v469
      %v474 = vmul.f32 %v455, %v469
      %v475 = vmul.f32 %v456, %v469
      %v476 = vmul.f32 %v457, %v469
      %v477 = vmul.f32 %v458, %v469
      %v478 = vmul.f32 %v459, %v469
      %v479 = vmul.f32 %v460, %v469
      %v480 = vmul.f32 %v461, %v469
      %v481 = vmul.f32 %v462, %v469
      %v482 = vmul.f32 %v463, %v469
      %v483 = vmul.f32 %v464, %v469
      %v484 = vmul.f32 %v465, %v469
      %v485 = vmul.f32 %v466, %v469
      %v486 = vmul.f32 %v467, %v469
      %v487 = vmul.f32 %v468, %v469
      %v488 = vld [vmem:[%s337] sm:$0xff]
      %v489 = vld [vmem:[%s337 + $0x8] sm:$0xff]
      %v490 = vld [vmem:[%s337 + $0x10] sm:$0xff]
      %v491 = vld [vmem:[%s337 + $0x18] sm:$0xff]
      %v492 = vld [vmem:[%s337 + $0x20] sm:$0xff]
      %v493 = vmul.f32 %v488, %v378
      %v494 = vmul.f32 %v489, %v378
      %v495 = vmul.f32 %v490, %v378
      %v496 = vmul.f32 %v491, %v378
      %v497 = vmul.f32 %v492, %v378
      %v498 = vadd.f32 %v493, 0.5
      %v499 = vadd.f32 %v494, 0.5
      %v500 = vadd.f32 %v495, 0.5
      %v501 = vadd.f32 %v496, 0.5
      %v502 = vadd.f32 %v497, 0.5
      %v503 = vfloor.f32 %v498
      %v504 = vfloor.f32 %v499
      %v505 = vfloor.f32 %v500
      %v506 = vfloor.f32 %v501
      %v507 = vfloor.f32 %v502
      %v508 = vmax.f32 %v503, -128.0
      %v509 = vmax.f32 %v504, -128.0
      %v510 = vmax.f32 %v505, -128.0
      %v511 = vmax.f32 %v506, -128.0
      %v512 = vmax.f32 %v507, -128.0
      %v513 = vmin.f32 %v508, 127.0
      %v514 = vmin.f32 %v509, 127.0
      %v515 = vmin.f32 %v510, 127.0
      %v516 = vmin.f32 %v511, 127.0
      %v517 = vmin.f32 %v512, 127.0
      %v518 = vmul.f32 %v513, %v469
      %v519 = vmul.f32 %v514, %v469
      %v520 = vmul.f32 %v515, %v469
      %v521 = vmul.f32 %v516, %v469
      %v522 = vmul.f32 %v517, %v469
      %v523 = vpack.c.bf16 %v471, %v470
      %v524 = vpack.c.bf16 %v473, %v472
      %v525 = vpack.c.bf16 %v475, %v474
      %v526 = vpack.c.bf16 %v477, %v476
      %v527 = vpack.c.bf16 %v479, %v478
      %v528 = vpack.c.bf16 %v481, %v480
      %v529 = vpack.c.bf16 %v483, %v482
      %v530 = vpack.c.bf16 %v485, %v484
      %v531 = vpack.c.bf16 %v487, %v486
      %v541 = vunpack.c.l.b16 %v523
      %v542 = vunpack.c.h.b16 %v523
      %v543 = vunpack.c.l.b16 %v524
      %v544 = vunpack.c.h.b16 %v524
      %v545 = vunpack.c.l.b16 %v525
      %v546 = vunpack.c.h.b16 %v525
      %v547 = vunpack.c.l.b16 %v526
      %v548 = vunpack.c.h.b16 %v526
      %v549 = vunpack.c.l.b16 %v527
      %v550 = vunpack.c.h.b16 %v527
      %v551 = vunpack.c.l.b16 %v528
      %v552 = vunpack.c.h.b16 %v528
      %v553 = vunpack.c.l.b16 %v529
      %v554 = vunpack.c.h.b16 %v529
      %v555 = vunpack.c.l.b16 %v530
      %v556 = vunpack.c.h.b16 %v530
      %v557 = vunpack.c.l.b16 %v531
      %v558 = vunpack.c.h.b16 %v531
      %v559 = vpack.c.b16 %v541, %v541
      %v560 = vpack.c.b16 %v542, %v542
      %v561 = vpack.c.b16 %v543, %v543
      %v562 = vpack.c.b16 %v544, %v544
      %v563 = vpack.c.b16 %v545, %v545
      %v564 = vpack.c.b16 %v546, %v546
      %v565 = vpack.c.b16 %v547, %v547
      %v566 = vpack.c.b16 %v548, %v548
      %v567 = vpack.c.b16 %v549, %v549
      %v568 = vpack.c.b16 %v550, %v550
      %v569 = vpack.c.b16 %v551, %v551
      %v570 = vpack.c.b16 %v552, %v552
      %v571 = vpack.c.b16 %v553, %v553
      %v572 = vpack.c.b16 %v554, %v554
      %v573 = vpack.c.b16 %v555, %v555
      %v574 = vpack.c.b16 %v556, %v556
      %v575 = vpack.c.b16 %v557, %v557
      %v576 = vpack.c.b16 %v558, %v558
      %vm595 = vcmask 27648
      %596 = vst.msk [vmem:[#allocation2] sm:$0xf] %vm595, %v559
      %597 = vst.msk [vmem:[#allocation2 + $0x4] sm:$0xf] %vm595, %v560
      %598 = vst.msk [vmem:[#allocation2 + $0x8] sm:$0xf] %vm595, %v561
      %599 = vst.msk [vmem:[#allocation2 + $0xc] sm:$0xf] %vm595, %v562
      %600 = vst.msk [vmem:[#allocation2 + $0x10] sm:$0xf] %vm595, %v563
      %601 = vst.msk [vmem:[#allocation2 + $0x14] sm:$0xf] %vm595, %v564
      %602 = vst.msk [vmem:[#allocation2 + $0x18] sm:$0xf] %vm595, %v565
      %603 = vst.msk [vmem:[#allocation2 + $0x1c] sm:$0xf] %vm595, %v566
      %604 = vst.msk [vmem:[#allocation2 + $0x20] sm:$0xf] %vm595, %v567
      %605 = vst.msk [vmem:[#allocation2 + $0x24] sm:$0xf] %vm595, %v568
      %606 = vst.msk [vmem:[#allocation2 + $0x28] sm:$0xf] %vm595, %v569
      %607 = vst.msk [vmem:[#allocation2 + $0x2c] sm:$0xf] %vm595, %v570
      %608 = vst.msk [vmem:[#allocation2 + $0x30] sm:$0xf] %vm595, %v571
      %609 = vst.msk [vmem:[#allocation2 + $0x34] sm:$0xf] %vm595, %v572
      %610 = vst.msk [vmem:[#allocation2 + $0x38] sm:$0xf] %vm595, %v573
      %611 = vst.msk [vmem:[#allocation2 + $0x3c] sm:$0xf] %vm595, %v574
      %612 = vst.msk [vmem:[#allocation2 + $0x40] sm:$0xf] %vm595, %v575
      %613 = vst.msk [vmem:[#allocation2 + $0x44] sm:$0xf] %vm595, %v576
      %v614 = vpack.c.bf16 %v519, %v518
      %v615 = vpack.c.bf16 %v521, %v520
      %v616 = vpack.c.bf16 %v522, %v522
      %v620 = vunpack.c.l.b16 %v614
      %v621 = vunpack.c.h.b16 %v614
      %v622 = vunpack.c.l.b16 %v615
      %v623 = vunpack.c.h.b16 %v615
      %v624 = vunpack.c.l.b16 %v616
      %v625 = vpack.c.b16 %v620, %v620
      %v626 = vpack.c.b16 %v621, %v621
      %v627 = vpack.c.b16 %v622, %v622
      %v628 = vpack.c.b16 %v623, %v623
      %v629 = vpack.c.b16 %v624, %v624
      %635 = vst.msk [vmem:[#allocation2 + $0x48] sm:$0xf] %vm595, %v625
      %636 = vst.msk [vmem:[#allocation2 + $0x4c] sm:$0xf] %vm595, %v626
      %637 = vst.msk [vmem:[#allocation2 + $0x50] sm:$0xf] %vm595, %v627
      %638 = vst.msk [vmem:[#allocation2 + $0x54] sm:$0xf] %vm595, %v628
      %vm639 = vcmask 26624
      %640 = vst.msk [vmem:[#allocation2 + $0x58] sm:$0x7] %vm639, %v629
      %v641 = vld [vmem:[#allocation2] sm:$0xf]
      %v642 = vld [vmem:[#allocation2 + $0x4] sm:$0xf]
      %v643 = vld [vmem:[#allocation2 + $0x8] sm:$0xf]
      %v644 = vld [vmem:[#allocation2 + $0xc] sm:$0xf]
      %v645 = vld [vmem:[#allocation2 + $0x10] sm:$0xf]
      %v646 = vld [vmem:[#allocation2 + $0x14] sm:$0xf]
      %v647 = vld [vmem:[#allocation2 + $0x18] sm:$0xf]
      %v648 = vld [vmem:[#allocation2 + $0x1c] sm:$0xf]
      %v649 = vld [vmem:[#allocation2 + $0x20] sm:$0xf]
      %v650 = vld [vmem:[#allocation2 + $0x24] sm:$0xf]
      %v651 = vld [vmem:[#allocation2 + $0x28] sm:$0xf]
      %v652 = vld [vmem:[#allocation2 + $0x2c] sm:$0xf]
      %v653 = vld [vmem:[#allocation2 + $0x30] sm:$0xf]
      %v654 = vld [vmem:[#allocation2 + $0x34] sm:$0xf]
      %v655 = vld [vmem:[#allocation2 + $0x38] sm:$0xf]
      %v656 = vld [vmem:[#allocation2 + $0x3c] sm:$0xf]
      %v657 = vld [vmem:[#allocation2 + $0x40] sm:$0xf]
      %v658 = vld [vmem:[#allocation2 + $0x44] sm:$0xf]
      %v659 = vld [vmem:[%s3] sm:$0x3]
      %v660 = vld [vmem:[#allocation2 + $0x48] sm:$0x1]
      %s661 = scalar_lea.vmem %s3, 2
      %v662 = vld [vmem:[%s661] sm:$0x3]
      %v682 = vunpack.c.l.b16 %v641
      %v683 = vunpack.c.l.b16 %v642
      %v684 = vunpack.c.l.b16 %v643
      %v685 = vunpack.c.l.b16 %v644
      %v686 = vunpack.c.l.b16 %v645
      %v687 = vunpack.c.l.b16 %v646
      %v688 = vunpack.c.l.b16 %v647
      %v689 = vunpack.c.l.b16 %v648
      %v690 = vunpack.c.l.b16 %v649
      %v691 = vunpack.c.l.b16 %v650
      %v692 = vunpack.c.l.b16 %v651
      %v693 = vunpack.c.l.b16 %v652
      %v694 = vunpack.c.l.b16 %v653
      %v695 = vunpack.c.l.b16 %v654
      %v696 = vunpack.c.l.b16 %v655
      %v697 = vunpack.c.l.b16 %v656
      %v698 = vunpack.c.l.b16 %v657
      %v699 = vunpack.c.l.b16 %v658
      %v700 = vunpack.c.l.b16 %v660
      %v701 = vpack.c.b16 %v683, %v682
      %v702 = vpack.c.b16 %v685, %v684
      %v703 = vpack.c.b16 %v687, %v686
      %v704 = vpack.c.b16 %v689, %v688
      %v705 = vpack.c.b16 %v691, %v690
      %v706 = vpack.c.b16 %v693, %v692
      %v707 = vpack.c.b16 %v695, %v694
      %v708 = vpack.c.b16 %v697, %v696
      %v709 = vpack.c.b16 %v699, %v698
      %v710 = vpack.c.b16 %v700, %v700
      %vm711 = vsmask.f32 7424
      %v713 = vshrl.u32 %v701, 16
      %v715 = vshll.u32 %v701, 16
      %v717 = vrot.slane %v715, 1
      %v718 = vor.u32 %v713, %v717
      %v720 = vshll.u32 %v702, 16
      %v722 = vrot.slane %v720, 1
      %v723 = vsel %vm711, %v718, %v722
      %v724 = vshrl.u32 %v702, 16
      %v726 = vor.u32 %v724, %v722
      %v728 = vshll.u32 %v703, 16
      %v730 = vrot.slane %v728, 1
      %v731 = vsel %vm711, %v726, %v730
      %v732 = vshrl.u32 %v703, 16
      %v734 = vor.u32 %v732, %v730
      %v736 = vshll.u32 %v704, 16
      %v738 = vrot.slane %v736, 1
      %v739 = vsel %vm711, %v734, %v738
      %v740 = vshrl.u32 %v704, 16
      %v742 = vor.u32 %v740, %v738
      %v744 = vshll.u32 %v705, 16
      %v746 = vrot.slane %v744, 1
      %v747 = vsel %vm711, %v742, %v746
      %v748 = vshrl.u32 %v705, 16
      %v750 = vor.u32 %v748, %v746
      %v752 = vshll.u32 %v706, 16
      %v754 = vrot.slane %v752, 1
      %v755 = vsel %vm711, %v750, %v754
      %v756 = vshrl.u32 %v706, 16
      %v758 = vor.u32 %v756, %v754
      %v760 = vshll.u32 %v707, 16
      %v762 = vrot.slane %v760, 1
      %v763 = vsel %vm711, %v758, %v762
      %v764 = vshrl.u32 %v707, 16
      %v766 = vor.u32 %v764, %v762
      %v768 = vshll.u32 %v708, 16
      %v770 = vrot.slane %v768, 1
      %v771 = vsel %vm711, %v766, %v770
      %v772 = vshrl.u32 %v708, 16
      %v774 = vor.u32 %v772, %v770
      %v776 = vshll.u32 %v709, 16
      %v778 = vrot.slane %v776, 1
      %v779 = vsel %vm711, %v774, %v778
      %v780 = vshrl.u32 %v709, 16
      %v782 = vor.u32 %v780, %v778
      %v784 = vshll.u32 %v710, 16
      %v786 = vrot.slane %v784, 1
      %v787 = vsel %vm711, %v782, %v786
      %vm788 = vcmask 31744
      %v790 = vsel %vm788, %v723, 0
      %v793 = vsel %vm788, %v731, 0
      %v796 = vsel %vm788, %v739, 0
      %v799 = vsel %vm788, %v747, 0
      %v802 = vsel %vm788, %v755, 0
      %v805 = vsel %vm788, %v763, 0
      %v808 = vsel %vm788, %v771, 0
      %v811 = vsel %vm788, %v779, 0
      %v814 = vsel %vm788, %v787, 0
      %vm816 = vcmask 1041408
      %v818 = vsel %vm816, %v662, 0
      %820 = vmatprep.subr.bf16.mxu0 0
      %821 = vmatpush1.bf16.msra.mxu0 %v818
      %822 = vmatprep.subr.bf16.mxu0 0
      %823 = vmatpush1.bf16.msra.mxu0 0
      %824 = vmatprep.subr.bf16.mxu0 0
      %825 = vmatpush1.bf16.msra.mxu0 0
      %826 = vmatprep.subr.bf16.mxu0 0
      %827 = vmatpush1.bf16.msra.mxu0 0
      %828 = vmatprep.subr.bf16.mxu0 0
      %829 = vmatpush1.bf16.msra.mxu0 0
      %830 = vmatprep.subr.bf16.mxu0 0
      %831 = vmatpush1.bf16.msra.mxu0 0
      %832 = vmatprep.subr.bf16.mxu0 0
      %833 = vmatpush1.bf16.msra.mxu0 0
      %834 = vmatprep.subr.bf16.mxu0 0
      %835 = vmatpush1.bf16.msra.mxu0 0
      %836 = vmatprep.subr.bf16.mxu0 0
      %837 = vmatpush1.bf16.msra.mxu0 0
      %838 = vmatprep.subr.bf16.mxu0 0
      %839 = vmatpush1.bf16.msra.mxu0 0
      %840 = vmatprep.subr.bf16.mxu0 0
      %841 = vmatpush1.bf16.msra.mxu0 0
      %842 = vmatprep.subr.bf16.mxu0 0
      %843 = vmatpush1.bf16.msra.mxu0 0
      %844 = vmatprep.subr.bf16.mxu0 0
      %845 = vmatpush1.bf16.msra.mxu0 0
      %846 = vmatprep.subr.bf16.mxu0 0
      %847 = vmatpush1.bf16.msra.mxu0 0
      %848 = vmatprep.subr.bf16.mxu0 0
      %849 = vmatpush1.bf16.msra.mxu0 0
      %850 = vmatprep.subr.bf16.mxu0 0
      %851 = vmatpush1.bf16.msra.mxu0 0
      %852 = vmatprep.mubr.bf16.mxu0 0
      %853 = vmatmul.mubr.bf16.gmra.mrb[0].mxu0 %v790
      %v854 = vpop.f32.mrb[0].mxu0
      %v855 = vadd.f32 0.0, %v854
      %v856 = vpop.f32.mrb[0].mxu0
      %v857 = vpop.f32.mrb[0].mxu0
      %v858 = vadd.f32 0.0, %v857
      %v859 = vpop.f32.mrb[0].mxu0
      %860 = vmatprep.mubr.bf16.mxu0 0
      %861 = vmatmul.mubr.bf16.gmra.mrb[0].mxu0 %v793
      %v862 = vpop.f32.mrb[0].mxu0
      %v863 = vadd.f32 0.0, %v862
      %v864 = vpop.f32.mrb[0].mxu0
      %v865 = vpop.f32.mrb[0].mxu0
      %v866 = vadd.f32 0.0, %v865
      %v867 = vpop.f32.mrb[0].mxu0
      %868 = vmatprep.mubr.bf16.mxu0 0
      %869 = vmatmul.mubr.bf16.gmra.mrb[0].mxu0 %v796
      %v870 = vpop.f32.mrb[0].mxu0
      %v871 = vadd.f32 0.0, %v870
      %v872 = vpop.f32.mrb[0].mxu0
      %v873 = vpop.f32.mrb[0].mxu0
      %v874 = vadd.f32 0.0, %v873
      %v875 = vpop.f32.mrb[0].mxu0
      %876 = vmatprep.mubr.bf16.mxu0 0
      %877 = vmatmul.mubr.bf16.gmra.mrb[0].mxu0 %v799
      %v878 = vpop.f32.mrb[0].mxu0
      %v879 = vadd.f32 0.0, %v878
      %v880 = vpop.f32.mrb[0].mxu0
      %v881 = vpop.f32.mrb[0].mxu0
      %v882 = vadd.f32 0.0, %v881
      %v883 = vpop.f32.mrb[0].mxu0
      %884 = vmatprep.mubr.bf16.mxu0 0
      %885 = vmatmul.mubr.bf16.gmra.mrb[0].mxu0 %v802
      %v886 = vpop.f32.mrb[0].mxu0
      %v887 = vadd.f32 0.0, %v886
      %v888 = vpop.f32.mrb[0].mxu0
      %v889 = vpop.f32.mrb[0].mxu0
      %v890 = vadd.f32 0.0, %v889
      %v891 = vpop.f32.mrb[0].mxu0
      %892 = vmatprep.mubr.bf16.mxu0 0
      %893 = vmatmul.mubr.bf16.gmra.mrb[0].mxu0 %v805
      %v894 = vpop.f32.mrb[0].mxu0
      %v895 = vadd.f32 0.0, %v894
      %v896 = vpop.f32.mrb[0].mxu0
      %v897 = vpop.f32.mrb[0].mxu0
      %v898 = vadd.f32 0.0, %v897
      %v899 = vpop.f32.mrb[0].mxu0
      %900 = vmatprep.mubr.bf16.mxu0 0
      %901 = vmatmul.mubr.bf16.gmra.mrb[0].mxu0 %v808
      %v902 = vpop.f32.mrb[0].mxu0
      %v903 = vadd.f32 0.0, %v902
      %v904 = vpop.f32.mrb[0].mxu0
      %v905 = vpop.f32.mrb[0].mxu0
      %v906 = vadd.f32 0.0, %v905
      %v907 = vpop.f32.mrb[0].mxu0
      %908 = vmatprep.mubr.bf16.mxu0 0
      %909 = vmatmul.mubr.bf16.gmra.mrb[0].mxu0 %v811
      %v910 = vpop.f32.mrb[0].mxu0
      %v911 = vadd.f32 0.0, %v910
      %v912 = vpop.f32.mrb[0].mxu0
      %v913 = vpop.f32.mrb[0].mxu0
      %v914 = vadd.f32 0.0, %v913
      %v915 = vpop.f32.mrb[0].mxu0
      %916 = vmatprep.mubr.bf16.mxu0 0
      %917 = vmatmul.mubr.bf16.gmra.mrb[0].mxu0 %v814
      %v918 = vpop.f32.mrb[0].mxu0
      %v919 = vadd.f32 0.0, %v918
      %v920 = vpop.f32.mrb[0].mxu0
      %v921 = vpop.f32.mrb[0].mxu0
      %v922 = vadd.f32 0.0, %v921
      %v923 = vpop.f32.mrb[0].mxu0
      %924 = vdwg.mxu0
      %v925 = vsel %vm788, %v701, 0
      %v927 = vsel %vm788, %v702, 0
      %v929 = vsel %vm788, %v703, 0
      %v931 = vsel %vm788, %v704, 0
      %v933 = vsel %vm788, %v705, 0
      %v935 = vsel %vm788, %v706, 0
      %v937 = vsel %vm788, %v707, 0
      %v939 = vsel %vm788, %v708, 0
      %v941 = vsel %vm788, %v709, 0
      %v944 = vsel %vm816, %v659, 0
      %946 = vmatprep.subr.bf16.mxu0 0
      %947 = vmatpush1.bf16.msra.mxu0 %v944
      %948 = vmatprep.subr.bf16.mxu0 0
      %949 = vmatpush1.bf16.msra.mxu0 0
      %950 = vmatprep.subr.bf16.mxu0 0
      %951 = vmatpush1.bf16.msra.mxu0 0
      %952 = vmatprep.subr.bf16.mxu0 0
      %953 = vmatpush1.bf16.msra.mxu0 0
      %954 = vmatprep.subr.bf16.mxu0 0
      %955 = vmatpush1.bf16.msra.mxu0 0
      %956 = vmatprep.subr.bf16.mxu0 0
      %957 = vmatpush1.bf16.msra.mxu0 0
      %958 = vmatprep.subr.bf16.mxu0 0
      %959 = vmatpush1.bf16.msra.mxu0 0
      %960 = vmatprep.subr.bf16.mxu0 0
      %961 = vmatpush1.bf16.msra.mxu0 0
      %962 = vmatprep.subr.bf16.mxu0 0
      %963 = vmatpush1.bf16.msra.mxu0 0
      %964 = vmatprep.subr.bf16.mxu0 0
      %965 = vmatpush1.bf16.msra.mxu0 0
      %966 = vmatprep.subr.bf16.mxu0 0
      %967 = vmatpush1.bf16.msra.mxu0 0
      %968 = vmatprep.subr.bf16.mxu0 0
      %969 = vmatpush1.bf16.msra.mxu0 0
      %970 = vmatprep.subr.bf16.mxu0 0
      %971 = vmatpush1.bf16.msra.mxu0 0
      %972 = vmatprep.subr.bf16.mxu0 0
      %973 = vmatpush1.bf16.msra.mxu0 0
      %974 = vmatprep.subr.bf16.mxu0 0
      %975 = vmatpush1.bf16.msra.mxu0 0
      %976 = vmatprep.subr.bf16.mxu0 0
      %977 = vmatpush1.bf16.msra.mxu0 0
      %978 = vmatprep.mubr.bf16.mxu0 0
      %979 = vmatmul.mubr.bf16.gmra.mrb[0].mxu0 %v925
      %v980 = vpop.f32.mrb[0].mxu0
      %v981 = vadd.f32 %v855, %v980
      %v982 = vpop.f32.mrb[0].mxu0
      %v983 = vpop.f32.mrb[0].mxu0
      %v984 = vadd.f32 %v858, %v983
      %v985 = vpop.f32.mrb[0].mxu0
      %986 = vmatprep.mubr.bf16.mxu0 0
      %987 = vmatmul.mubr.bf16.gmra.mrb[0].mxu0 %v927
      %v988 = vpop.f32.mrb[0].mxu0
      %v989 = vadd.f32 %v863, %v988
      %v990 = vpop.f32.mrb[0].mxu0
      %v991 = vpop.f32.mrb[0].mxu0
      %v992 = vadd.f32 %v866, %v991
      %v993 = vpop.f32.mrb[0].mxu0
      %994 = vmatprep.mubr.bf16.mxu0 0
      %995 = vmatmul.mubr.bf16.gmra.mrb[0].mxu0 %v929
      %v996 = vpop.f32.mrb[0].mxu0
      %v997 = vadd.f32 %v871, %v996
      %v998 = vpop.f32.mrb[0].mxu0
      %v999 = vpop.f32.mrb[0].mxu0
      %v1000 = vadd.f32 %v874, %v999
      %v1001 = vpop.f32.mrb[0].mxu0
      %1002 = vmatprep.mubr.bf16.mxu0 0
      %1003 = vmatmul.mubr.bf16.gmra.mrb[0].mxu0 %v931
      %v1004 = vpop.f32.mrb[0].mxu0
      %v1005 = vadd.f32 %v879, %v1004
      %v1006 = vpop.f32.mrb[0].mxu0
      %v1007 = vpop.f32.mrb[0].mxu0
      %v1008 = vadd.f32 %v882, %v1007
      %v1009 = vpop.f32.mrb[0].mxu0
      %1010 = vmatprep.mubr.bf16.mxu0 0
      %1011 = vmatmul.mubr.bf16.gmra.mrb[0].mxu0 %v933
      %v1012 = vpop.f32.mrb[0].mxu0
      %v1013 = vadd.f32 %v887, %v1012
      %v1014 = vpop.f32.mrb[0].mxu0
      %v1015 = vpop.f32.mrb[0].mxu0
      %v1016 = vadd.f32 %v890, %v1015
      %v1017 = vpop.f32.mrb[0].mxu0
      %1018 = vmatprep.mubr.bf16.mxu0 0
      %1019 = vmatmul.mubr.bf16.gmra.mrb[0].mxu0 %v935
      %v1020 = vpop.f32.mrb[0].mxu0
      %v1021 = vadd.f32 %v895, %v1020
      %v1022 = vpop.f32.mrb[0].mxu0
      %v1023 = vpop.f32.mrb[0].mxu0
      %v1024 = vadd.f32 %v898, %v1023
      %v1025 = vpop.f32.mrb[0].mxu0
      %1026 = vmatprep.mubr.bf16.mxu0 0
      %1027 = vmatmul.mubr.bf16.gmra.mrb[0].mxu0 %v937
      %v1028 = vpop.f32.mrb[0].mxu0
      %v1029 = vadd.f32 %v903, %v1028
      %v1030 = vpop.f32.mrb[0].mxu0
      %v1031 = vpop.f32.mrb[0].mxu0
      %v1032 = vadd.f32 %v906, %v1031
      %v1033 = vpop.f32.mrb[0].mxu0
      %1034 = vmatprep.mubr.bf16.mxu0 0
      %1035 = vmatmul.mubr.bf16.gmra.mrb[0].mxu0 %v939
      %v1036 = vpop.f32.mrb[0].mxu0
      %v1037 = vadd.f32 %v911, %v1036
      %v1038 = vpop.f32.mrb[0].mxu0
      %v1039 = vpop.f32.mrb[0].mxu0
      %v1040 = vadd.f32 %v914, %v1039
      %v1041 = vpop.f32.mrb[0].mxu0
      %1042 = vmatprep.mubr.bf16.mxu0 0
      %1043 = vmatmul.mubr.bf16.gmra.mrb[0].mxu0 %v941
      %v1044 = vpop.f32.mrb[0].mxu0
      %v1045 = vadd.f32 %v919, %v1044
      %v1046 = vpop.f32.mrb[0].mxu0
      %v1047 = vpop.f32.mrb[0].mxu0
      %v1048 = vadd.f32 %v922, %v1047
      %v1049 = vpop.f32.mrb[0].mxu0
      %1050 = vdwg.mxu0
      %v1051 = vld [vmem:[#allocation2] sm:$0xe]
      %s1052 = scalar_lea.vmem %s3, 4
      %v1053 = vld [vmem:[%s1052] sm:$0x3]
      %v1055 = vunpack.c.l.b16 %v1051
      %v1056 = vpack.c.b16 %v683, %v1055
      %vm1057 = vcmask 1046528
      %v1058 = vrot.slane %v1056, 1
      %v1059 = vrot.slane %v702, 1
      %v1060 = vsel %vm1057, %v1058, %v1059
      %v1061 = vrot.slane %v703, 1
      %v1062 = vsel %vm1057, %v1059, %v1061
      %v1063 = vrot.slane %v704, 1
      %v1064 = vsel %vm1057, %v1061, %v1063
      %v1065 = vrot.slane %v705, 1
      %v1066 = vsel %vm1057, %v1063, %v1065
      %v1067 = vrot.slane %v706, 1
      %v1068 = vsel %vm1057, %v1065, %v1067
      %v1069 = vrot.slane %v707, 1
      %v1070 = vsel %vm1057, %v1067, %v1069
      %v1071 = vrot.slane %v708, 1
      %v1072 = vsel %vm1057, %v1069, %v1071
      %v1073 = vrot.slane %v709, 1
      %v1074 = vsel %vm1057, %v1071, %v1073
      %v1075 = vrot.slane %v710, 1
      %v1076 = vsel %vm1057, %v1073, %v1075
      %v1078 = vsel %vm788, %v1060, 0
      %v1081 = vsel %vm788, %v1062, 0
      %v1084 = vsel %vm788, %v1064, 0
      %v1087 = vsel %vm788, %v1066, 0
      %v1090 = vsel %vm788, %v1068, 0
      %v1093 = vsel %vm788, %v1070, 0
      %v1096 = vsel %vm788, %v1072, 0
      %v1099 = vsel %vm788, %v1074, 0
      %v1102 = vsel %vm788, %v1076, 0
      %v1105 = vsel %vm816, %v1053, 0
      %1107 = vmatprep.subr.bf16.mxu0 0
      %1108 = vmatpush1.bf16.msra.mxu0 %v1105
      %1109 = vmatprep.subr.bf16.mxu0 0
      %1110 = vmatpush1.bf16.msra.mxu0 0
      %1111 = vmatprep.subr.bf16.mxu0 0
      %1112 = vmatpush1.bf16.msra.mxu0 0
      %1113 = vmatprep.subr.bf16.mxu0 0
      %1114 = vmatpush1.bf16.msra.mxu0 0
      %1115 = vmatprep.subr.bf16.mxu0 0
      %1116 = vmatpush1.bf16.msra.mxu0 0
      %1117 = vmatprep.subr.bf16.mxu0 0
      %1118 = vmatpush1.bf16.msra.mxu0 0
      %1119 = vmatprep.subr.bf16.mxu0 0
      %1120 = vmatpush1.bf16.msra.mxu0 0
      %1121 = vmatprep.subr.bf16.mxu0 0
      %1122 = vmatpush1.bf16.msra.mxu0 0
      %1123 = vmatprep.subr.bf16.mxu0 0
      %1124 = vmatpush1.bf16.msra.mxu0 0
      %1125 = vmatprep.subr.bf16.mxu0 0
      %1126 = vmatpush1.bf16.msra.mxu0 0
      %1127 = vmatprep.subr.bf16.mxu0 0
      %1128 = vmatpush1.bf16.msra.mxu0 0
      %1129 = vmatprep.subr.bf16.mxu0 0
      %1130 = vmatpush1.bf16.msra.mxu0 0
      %1131 = vmatprep.subr.bf16.mxu0 0
      %1132 = vmatpush1.bf16.msra.mxu0 0
      %1133 = vmatprep.subr.bf16.mxu0 0
      %1134 = vmatpush1.bf16.msra.mxu0 0
      %1135 = vmatprep.subr.bf16.mxu0 0
      %1136 = vmatpush1.bf16.msra.mxu0 0
      %1137 = vmatprep.subr.bf16.mxu0 0
      %1138 = vmatpush1.bf16.msra.mxu0 0
      %1139 = vmatprep.mubr.bf16.mxu0 0
      %1140 = vmatmul.mubr.bf16.gmra.mrb[0].mxu0 %v1078
      %v1141 = vpop.f32.mrb[0].mxu0
      %v1142 = vadd.f32 0.0, %v1141
      %v1143 = vpop.f32.mrb[0].mxu0
      %v1144 = vpop.f32.mrb[0].mxu0
      %v1145 = vadd.f32 0.0, %v1144
      %v1146 = vpop.f32.mrb[0].mxu0
      %1147 = vmatprep.mubr.bf16.mxu0 0
      %1148 = vmatmul.mubr.bf16.gmra.mrb[0].mxu0 %v1081
      %v1149 = vpop.f32.mrb[0].mxu0
      %v1150 = vadd.f32 0.0, %v1149
      %v1151 = vpop.f32.mrb[0].mxu0
      %v1152 = vpop.f32.mrb[0].mxu0
      %v1153 = vadd.f32 0.0, %v1152
      %v1154 = vpop.f32.mrb[0].mxu0
      %1155 = vmatprep.mubr.bf16.mxu0 0
      %1156 = vmatmul.mubr.bf16.gmra.mrb[0].mxu0 %v1084
      %v1157 = vpop.f32.mrb[0].mxu0
      %v1158 = vadd.f32 0.0, %v1157
      %v1159 = vpop.f32.mrb[0].mxu0
      %v1160 = vpop.f32.mrb[0].mxu0
      %v1161 = vadd.f32 0.0, %v1160
      %v1162 = vpop.f32.mrb[0].mxu0
      %1163 = vmatprep.mubr.bf16.mxu0 0
      %1164 = vmatmul.mubr.bf16.gmra.mrb[0].mxu0 %v1087
      %v1165 = vpop.f32.mrb[0].mxu0
      %v1166 = vadd.f32 0.0, %v1165
      %v1167 = vpop.f32.mrb[0].mxu0
      %v1168 = vpop.f32.mrb[0].mxu0
      %v1169 = vadd.f32 0.0, %v1168
      %v1170 = vpop.f32.mrb[0].mxu0
      %1171 = vmatprep.mubr.bf16.mxu0 0
      %1172 = vmatmul.mubr.bf16.gmra.mrb[0].mxu0 %v1090
      %v1173 = vpop.f32.mrb[0].mxu0
      %v1174 = vadd.f32 0.0, %v1173
      %v1175 = vpop.f32.mrb[0].mxu0
      %v1176 = vpop.f32.mrb[0].mxu0
      %v1177 = vadd.f32 0.0, %v1176
      %v1178 = vpop.f32.mrb[0].mxu0
      %1179 = vmatprep.mubr.bf16.mxu0 0
      %1180 = vmatmul.mubr.bf16.gmra.mrb[0].mxu0 %v1093
      %v1181 = vpop.f32.mrb[0].mxu0
      %v1182 = vadd.f32 0.0, %v1181
      %v1183 = vpop.f32.mrb[0].mxu0
      %v1184 = vpop.f32.mrb[0].mxu0
      %v1185 = vadd.f32 0.0, %v1184
      %v1186 = vpop.f32.mrb[0].mxu0
      %1187 = vmatprep.mubr.bf16.mxu0 0
      %1188 = vmatmul.mubr.bf16.gmra.mrb[0].mxu0 %v1096
      %v1189 = vpop.f32.mrb[0].mxu0
      %v1190 = vadd.f32 0.0, %v1189
      %v1191 = vpop.f32.mrb[0].mxu0
      %v1192 = vpop.f32.mrb[0].mxu0
      %v1193 = vadd.f32 0.0, %v1192
      %v1194 = vpop.f32.mrb[0].mxu0
      %1195 = vmatprep.mubr.bf16.mxu0 0
      %1196 = vmatmul.mubr.bf16.gmra.mrb[0].mxu0 %v1099
      %v1197 = vpop.f32.mrb[0].mxu0
      %v1198 = vadd.f32 0.0, %v1197
      %v1199 = vpop.f32.mrb[0].mxu0
      %v1200 = vpop.f32.mrb[0].mxu0
      %v1201 = vadd.f32 0.0, %v1200
      %v1202 = vpop.f32.mrb[0].mxu0
      %1203 = vmatprep.mubr.bf16.mxu0 0
      %1204 = vmatmul.mubr.bf16.gmra.mrb[0].mxu0 %v1102
      %v1205 = vpop.f32.mrb[0].mxu0
      %v1206 = vadd.f32 0.0, %v1205
      %v1207 = vpop.f32.mrb[0].mxu0
      %v1208 = vpop.f32.mrb[0].mxu0
      %v1209 = vadd.f32 0.0, %v1208
      %v1210 = vpop.f32.mrb[0].mxu0
      %1211 = vdwg.mxu0
      %v1212 = vadd.f32 %v981, %v1142
      %v1213 = vadd.f32 %v984, %v1145
      %v1214 = vadd.f32 %v989, %v1150
      %v1215 = vadd.f32 %v992, %v1153
      %v1216 = vadd.f32 %v997, %v1158
      %v1217 = vadd.f32 %v1000, %v1161
      %v1218 = vadd.f32 %v1005, %v1166
      %v1219 = vadd.f32 %v1008, %v1169
      %v1220 = vadd.f32 %v1013, %v1174
      %v1221 = vadd.f32 %v1016, %v1177
      %v1222 = vadd.f32 %v1021, %v1182
      %v1223 = vadd.f32 %v1024, %v1185
      %v1224 = vadd.f32 %v1029, %v1190
      %v1225 = vadd.f32 %v1032, %v1193
      %v1226 = vadd.f32 %v1037, %v1198
      %v1227 = vadd.f32 %v1040, %v1201
      %v1228 = vadd.f32 %v1045, %v1206
      %v1229 = vadd.f32 %v1048, %v1209
      %v1230 = vld [vmem:[#allocation2 + $0x8] sm:$0xe]
      %v1231 = vld [vmem:[#allocation2 + $0xc] sm:$0xf]
      %v1232 = vld [vmem:[#allocation2 + $0x10] sm:$0xf]
      %v1233 = vld [vmem:[#allocation2 + $0x14] sm:$0xf]
      %v1234 = vld [vmem:[#allocation2 + $0x18] sm:$0xf]
      %v1235 = vld [vmem:[#allocation2 + $0x1c] sm:$0xf]
      %v1236 = vld [vmem:[#allocation2 + $0x20] sm:$0xf]
      %v1237 = vld [vmem:[#allocation2 + $0x24] sm:$0xf]
      %v1238 = vld [vmem:[#allocation2 + $0x28] sm:$0xf]
      %v1239 = vld [vmem:[#allocation2 + $0x2c] sm:$0xf]
      %v1240 = vld [vmem:[#allocation2 + $0x30] sm:$0xf]
      %v1241 = vld [vmem:[#allocation2 + $0x34] sm:$0xf]
      %v1242 = vld [vmem:[#allocation2 + $0x38] sm:$0xf]
      %v1243 = vld [vmem:[#allocation2 + $0x3c] sm:$0xf]
      %v1244 = vld [vmem:[#allocation2 + $0x40] sm:$0xf]
      %v1245 = vld [vmem:[#allocation2 + $0x44] sm:$0xf]
      %v1246 = vld [vmem:[#allocation2 + $0x48] sm:$0xf]
      %v1247 = vld [vmem:[#allocation2 + $0x4c] sm:$0xf]
      %v1248 = vld [vmem:[#allocation2 + $0x50] sm:$0x1]
      %s1249 = scalar_lea.vmem %s3, 6
      %v1250 = vld [vmem:[%s1249] sm:$0x3]
      %v1270 = vunpack.c.l.b16 %v1230
      %v1271 = vunpack.c.l.b16 %v1231
      %v1272 = vunpack.c.l.b16 %v1232
      %v1273 = vunpack.c.l.b16 %v1233
      %v1274 = vunpack.c.l.b16 %v1234
      %v1275 = vunpack.c.l.b16 %v1235
      %v1276 = vunpack.c.l.b16 %v1236
      %v1277 = vunpack.c.l.b16 %v1237
      %v1278 = vunpack.c.l.b16 %v1238
      %v1279 = vunpack.c.l.b16 %v1239
      %v1280 = vunpack.c.l.b16 %v1240
      %v1281 = vunpack.c.l.b16 %v1241
      %v1282 = vunpack.c.l.b16 %v1242
      %v1283 = vunpack.c.l.b16 %v1243
      %v1284 = vunpack.c.l.b16 %v1244
      %v1285 = vunpack.c.l.b16 %v1245
      %v1286 = vunpack.c.l.b16 %v1246
      %v1287 = vunpack.c.l.b16 %v1247
      %v1288 = vunpack.c.l.b16 %v1248
      %v1289 = vpack.c.b16 %v1271, %v1270
      %v1290 = vpack.c.b16 %v1273, %v1272
      %v1291 = vpack.c.b16 %v1275, %v1274
      %v1292 = vpack.c.b16 %v1277, %v1276
      %v1293 = vpack.c.b16 %v1279, %v1278
      %v1294 = vpack.c.b16 %v1281, %v1280
      %v1295 = vpack.c.b16 %v1283, %v1282
      %v1296 = vpack.c.b16 %v1285, %v1284
      %v1297 = vpack.c.b16 %v1287, %v1286
      %v1298 = vpack.c.b16 %v1288, %v1288
      %v1299 = vrot.slane %v1289, 1
      %v1300 = vrot.slane %v1290, 1
      %v1301 = vsel %vm1057, %v1299, %v1300
      %v1302 = vrot.slane %v1291, 1
      %v1303 = vsel %vm1057, %v1300, %v1302
      %v1304 = vrot.slane %v1292, 1
      %v1305 = vsel %vm1057, %v1302, %v1304
      %v1306 = vrot.slane %v1293, 1
      %v1307 = vsel %vm1057, %v1304, %v1306
      %v1308 = vrot.slane %v1294, 1
      %v1309 = vsel %vm1057, %v1306, %v1308
      %v1310 = vrot.slane %v1295, 1
      %v1311 = vsel %vm1057, %v1308, %v1310
      %v1312 = vrot.slane %v1296, 1
      %v1313 = vsel %vm1057, %v1310, %v1312
      %v1314 = vrot.slane %v1297, 1
      %v1315 = vsel %vm1057, %v1312, %v1314
      %v1316 = vrot.slane %v1298, 1
      %v1317 = vsel %vm1057, %v1314, %v1316
      %v1319 = vsel %vm788, %v1301, 0
      %v1322 = vsel %vm788, %v1303, 0
      %v1325 = vsel %vm788, %v1305, 0
      %v1328 = vsel %vm788, %v1307, 0
      %v1331 = vsel %vm788, %v1309, 0
      %v1334 = vsel %vm788, %v1311, 0
      %v1337 = vsel %vm788, %v1313, 0
      %v1340 = vsel %vm788, %v1315, 0
      %v1343 = vsel %vm788, %v1317, 0
      %v1346 = vsel %vm816, %v1250, 0
      %1348 = vmatprep.subr.bf16.mxu0 0
      %1349 = vmatpush1.bf16.msra.mxu0 %v1346
      %1350 = vmatprep.subr.bf16.mxu0 0
      %1351 = vmatpush1.bf16.msra.mxu0 0
      %1352 = vmatprep.subr.bf16.mxu0 0
      %1353 = vmatpush1.bf16.msra.mxu0 0
      %1354 = vmatprep.subr.bf16.mxu0 0
      %1355 = vmatpush1.bf16.msra.mxu0 0
      %1356 = vmatprep.subr.bf16.mxu0 0
      %1357 = vmatpush1.bf16.msra.mxu0 0
      %1358 = vmatprep.subr.bf16.mxu0 0
      %1359 = vmatpush1.bf16.msra.mxu0 0
      %1360 = vmatprep.subr.bf16.mxu0 0
      %1361 = vmatpush1.bf16.msra.mxu0 0
      %1362 = vmatprep.subr.bf16.mxu0 0
      %1363 = vmatpush1.bf16.msra.mxu0 0
      %1364 = vmatprep.subr.bf16.mxu0 0
      %1365 = vmatpush1.bf16.msra.mxu0 0
      %1366 = vmatprep.subr.bf16.mxu0 0
      %1367 = vmatpush1.bf16.msra.mxu0 0
      %1368 = vmatprep.subr.bf16.mxu0 0
      %1369 = vmatpush1.bf16.msra.mxu0 0
      %1370 = vmatprep.subr.bf16.mxu0 0
      %1371 = vmatpush1.bf16.msra.mxu0 0
      %1372 = vmatprep.subr.bf16.mxu0 0
      %1373 = vmatpush1.bf16.msra.mxu0 0
      %1374 = vmatprep.subr.bf16.mxu0 0
      %1375 = vmatpush1.bf16.msra.mxu0 0
      %1376 = vmatprep.subr.bf16.mxu0 0
      %1377 = vmatpush1.bf16.msra.mxu0 0
      %1378 = vmatprep.subr.bf16.mxu0 0
      %1379 = vmatpush1.bf16.msra.mxu0 0
      %1380 = vmatprep.mubr.bf16.mxu0 0
      %1381 = vmatmul.mubr.bf16.gmra.mrb[0].mxu0 %v1319
      %v1382 = vpop.f32.mrb[0].mxu0
      %v1383 = vadd.f32 0.0, %v1382
      %v1384 = vpop.f32.mrb[0].mxu0
      %v1385 = vpop.f32.mrb[0].mxu0
      %v1386 = vadd.f32 0.0, %v1385
      %v1387 = vpop.f32.mrb[0].mxu0
      %1388 = vmatprep.mubr.bf16.mxu0 0
      %1389 = vmatmul.mubr.bf16.gmra.mrb[0].mxu0 %v1322
      %v1390 = vpop.f32.mrb[0].mxu0
      %v1391 = vadd.f32 0.0, %v1390
      %v1392 = vpop.f32.mrb[0].mxu0
      %v1393 = vpop.f32.mrb[0].mxu0
      %v1394 = vadd.f32 0.0, %v1393
      %v1395 = vpop.f32.mrb[0].mxu0
      %1396 = vmatprep.mubr.bf16.mxu0 0
      %1397 = vmatmul.mubr.bf16.gmra.mrb[0].mxu0 %v1325
      %v1398 = vpop.f32.mrb[0].mxu0
      %v1399 = vadd.f32 0.0, %v1398
      %v1400 = vpop.f32.mrb[0].mxu0
      %v1401 = vpop.f32.mrb[0].mxu0
      %v1402 = vadd.f32 0.0, %v1401
      %v1403 = vpop.f32.mrb[0].mxu0
      %1404 = vmatprep.mubr.bf16.mxu0 0
      %1405 = vmatmul.mubr.bf16.gmra.mrb[0].mxu0 %v1328
      %v1406 = vpop.f32.mrb[0].mxu0
      %v1407 = vadd.f32 0.0, %v1406
      %v1408 = vpop.f32.mrb[0].mxu0
      %v1409 = vpop.f32.mrb[0].mxu0
      %v1410 = vadd.f32 0.0, %v1409
      %v1411 = vpop.f32.mrb[0].mxu0
      %1412 = vmatprep.mubr.bf16.mxu0 0
      %1413 = vmatmul.mubr.bf16.gmra.mrb[0].mxu0 %v1331
      %v1414 = vpop.f32.mrb[0].mxu0
      %v1415 = vadd.f32 0.0, %v1414
      %v1416 = vpop.f32.mrb[0].mxu0
      %v1417 = vpop.f32.mrb[0].mxu0
      %v1418 = vadd.f32 0.0, %v1417
      %v1419 = vpop.f32.mrb[0].mxu0
      %1420 = vmatprep.mubr.bf16.mxu0 0
      %1421 = vmatmul.mubr.bf16.gmra.mrb[0].mxu0 %v1334
      %v1422 = vpop.f32.mrb[0].mxu0
      %v1423 = vadd.f32 0.0, %v1422
      %v1424 = vpop.f32.mrb[0].mxu0
      %v1425 = vpop.f32.mrb[0].mxu0
      %v1426 = vadd.f32 0.0, %v1425
      %v1427 = vpop.f32.mrb[0].mxu0
      %1428 = vmatprep.mubr.bf16.mxu0 0
      %1429 = vmatmul.mubr.bf16.gmra.mrb[0].mxu0 %v1337
      %v1430 = vpop.f32.mrb[0].mxu0
      %v1431 = vadd.f32 0.0, %v1430
      %v1432 = vpop.f32.mrb[0].mxu0
      %v1433 = vpop.f32.mrb[0].mxu0
      %v1434 = vadd.f32 0.0, %v1433
      %v1435 = vpop.f32.mrb[0].mxu0
      %1436 = vmatprep.mubr.bf16.mxu0 0
      %1437 = vmatmul.mubr.bf16.gmra.mrb[0].mxu0 %v1340
      %v1438 = vpop.f32.mrb[0].mxu0
      %v1439 = vadd.f32 0.0, %v1438
      %v1440 = vpop.f32.mrb[0].mxu0
      %v1441 = vpop.f32.mrb[0].mxu0
      %v1442 = vadd.f32 0.0, %v1441
      %v1443 = vpop.f32.mrb[0].mxu0
      %1444 = vmatprep.mubr.bf16.mxu0 0
      %1445 = vmatmul.mubr.bf16.gmra.mrb[0].mxu0 %v1343
      %v1446 = vpop.f32.mrb[0].mxu0
      %v1447 = vadd.f32 0.0, %v1446
      %v1448 = vpop.f32.mrb[0].mxu0
      %v1449 = vpop.f32.mrb[0].mxu0
      %v1450 = vadd.f32 0.0, %v1449
      %v1451 = vpop.f32.mrb[0].mxu0
      %1452 = vdwg.mxu0
      %v1453 = vadd.f32 %v1212, %v1383
      %v1454 = vadd.f32 %v1213, %v1386
      %v1455 = vadd.f32 %v1214, %v1391
      %v1456 = vadd.f32 %v1215, %v1394
      %v1457 = vadd.f32 %v1216, %v1399
      %v1458 = vadd.f32 %v1217, %v1402
      %v1459 = vadd.f32 %v1218, %v1407
      %v1460 = vadd.f32 %v1219, %v1410
      %v1461 = vadd.f32 %v1220, %v1415
      %v1462 = vadd.f32 %v1221, %v1418
      %v1463 = vadd.f32 %v1222, %v1423
      %v1464 = vadd.f32 %v1223, %v1426
      %v1465 = vadd.f32 %v1224, %v1431
      %v1466 = vadd.f32 %v1225, %v1434
      %v1467 = vadd.f32 %v1226, %v1439
      %v1468 = vadd.f32 %v1227, %v1442
      %v1469 = vadd.f32 %v1228, %v1447
      %v1470 = vadd.f32 %v1229, %v1450
      %v1471 = vld [vmem:[#allocation2 + $0x50] sm:$0x3]
      %s1472 = scalar_lea.vmem %s3, 8
      %v1473 = vld [vmem:[%s1472] sm:$0x3]
      %v1475 = vunpack.c.l.b16 %v1471
      %v1476 = vpack.c.b16 %v1475, %v1475
      %vm1477 = vsmask.f32 6400
      %v1479 = vshrl.u32 %v1289, 16
      %v1481 = vrot.slane %v1479, 1
      %v1482 = vshll.u32 %v1289, 16
      %v1484 = vrot.slane %v1482, 2
      %v1485 = vor.u32 %v1481, %v1484
      %v1487 = vshrl.u32 %v1290, 16
      %v1489 = vrot.slane %v1487, 1
      %v1490 = vshll.u32 %v1290, 16
      %v1492 = vrot.slane %v1490, 2
      %v1493 = vor.u32 %v1489, %v1492
      %v1494 = vsel %vm1477, %v1485, %v1493
      %v1496 = vshrl.u32 %v1291, 16
      %v1498 = vrot.slane %v1496, 1
      %v1499 = vshll.u32 %v1291, 16
      %v1501 = vrot.slane %v1499, 2
      %v1502 = vor.u32 %v1498, %v1501
      %v1503 = vsel %vm1477, %v1493, %v1502
      %v1505 = vshrl.u32 %v1292, 16
      %v1507 = vrot.slane %v1505, 1
      %v1508 = vshll.u32 %v1292, 16
      %v1510 = vrot.slane %v1508, 2
      %v1511 = vor.u32 %v1507, %v1510
      %v1512 = vsel %vm1477, %v1502, %v1511
      %v1514 = vshrl.u32 %v1293, 16
      %v1516 = vrot.slane %v1514, 1
      %v1517 = vshll.u32 %v1293, 16
      %v1519 = vrot.slane %v1517, 2
      %v1520 = vor.u32 %v1516, %v1519
      %v1521 = vsel %vm1477, %v1511, %v1520
      %v1523 = vshrl.u32 %v1294, 16
      %v1525 = vrot.slane %v1523, 1
      %v1526 = vshll.u32 %v1294, 16
      %v1528 = vrot.slane %v1526, 2
      %v1529 = vor.u32 %v1525, %v1528
      %v1530 = vsel %vm1477, %v1520, %v1529
      %v1532 = vshrl.u32 %v1295, 16
      %v1534 = vrot.slane %v1532, 1
      %v1535 = vshll.u32 %v1295, 16
      %v1537 = vrot.slane %v1535, 2
      %v1538 = vor.u32 %v1534, %v1537
      %v1539 = vsel %vm1477, %v1529, %v1538
      %v1541 = vshrl.u32 %v1296, 16
      %v1543 = vrot.slane %v1541, 1
      %v1544 = vshll.u32 %v1296, 16
      %v1546 = vrot.slane %v1544, 2
      %v1547 = vor.u32 %v1543, %v1546
      %v1548 = vsel %vm1477, %v1538, %v1547
      %v1550 = vshrl.u32 %v1297, 16
      %v1552 = vrot.slane %v1550, 1
      %v1553 = vshll.u32 %v1297, 16
      %v1555 = vrot.slane %v1553, 2
      %v1556 = vor.u32 %v1552, %v1555
      %v1557 = vsel %vm1477, %v1547, %v1556
      %v1559 = vshrl.u32 %v1476, 16
      %v1561 = vrot.slane %v1559, 1
      %v1562 = vshll.u32 %v1476, 16
      %v1564 = vrot.slane %v1562, 2
      %v1565 = vor.u32 %v1561, %v1564
      %v1566 = vsel %vm1477, %v1556, %v1565
      %v1568 = vsel %vm788, %v1494, 0
      %v1571 = vsel %vm788, %v1503, 0
      %v1574 = vsel %vm788, %v1512, 0
      %v1577 = vsel %vm788, %v1521, 0
      %v1580 = vsel %vm788, %v1530, 0
      %v1583 = vsel %vm788, %v1539, 0
      %v1586 = vsel %vm788, %v1548, 0
      %v1589 = vsel %vm788, %v1557, 0
      %v1592 = vsel %vm788, %v1566, 0
      %v1595 = vsel %vm816, %v1473, 0
      %1597 = vmatprep.subr.bf16.mxu0 0
      %1598 = vmatpush1.bf16.msra.mxu0 %v1595
      %1599 = vmatprep.subr.bf16.mxu0 0
      %1600 = vmatpush1.bf16.msra.mxu0 0
      %1601 = vmatprep.subr.bf16.mxu0 0
      %1602 = vmatpush1.bf16.msra.mxu0 0
      %1603 = vmatprep.subr.bf16.mxu0 0
      %1604 = vmatpush1.bf16.msra.mxu0 0
      %1605 = vmatprep.subr.bf16.mxu0 0
      %1606 = vmatpush1.bf16.msra.mxu0 0
      %1607 = vmatprep.subr.bf16.mxu0 0
      %1608 = vmatpush1.bf16.msra.mxu0 0
      %1609 = vmatprep.subr.bf16.mxu0 0
      %1610 = vmatpush1.bf16.msra.mxu0 0
      %1611 = vmatprep.subr.bf16.mxu0 0
      %1612 = vmatpush1.bf16.msra.mxu0 0
      %1613 = vmatprep.subr.bf16.mxu0 0
      %1614 = vmatpush1.bf16.msra.mxu0 0
      %1615 = vmatprep.subr.bf16.mxu0 0
      %1616 = vmatpush1.bf16.msra.mxu0 0
      %1617 = vmatprep.subr.bf16.mxu0 0
      %1618 = vmatpush1.bf16.msra.mxu0 0
      %1619 = vmatprep.subr.bf16.mxu0 0
      %1620 = vmatpush1.bf16.msra.mxu0 0
      %1621 = vmatprep.subr.bf16.mxu0 0
      %1622 = vmatpush1.bf16.msra.mxu0 0
      %1623 = vmatprep.subr.bf16.mxu0 0
      %1624 = vmatpush1.bf16.msra.mxu0 0
      %1625 = vmatprep.subr.bf16.mxu0 0
      %1626 = vmatpush1.bf16.msra.mxu0 0
      %1627 = vmatprep.subr.bf16.mxu0 0
      %1628 = vmatpush1.bf16.msra.mxu0 0
      %1629 = vmatprep.mubr.bf16.mxu0 0
      %1630 = vmatmul.mubr.bf16.gmra.mrb[0].mxu0 %v1568
      %v1631 = vpop.f32.mrb[0].mxu0
      %v1632 = vadd.f32 0.0, %v1631
      %v1633 = vpop.f32.mrb[0].mxu0
      %v1634 = vpop.f32.mrb[0].mxu0
      %v1635 = vadd.f32 0.0, %v1634
      %v1636 = vpop.f32.mrb[0].mxu0
      %1637 = vmatprep.mubr.bf16.mxu0 0
      %1638 = vmatmul.mubr.bf16.gmra.mrb[0].mxu0 %v1571
      %v1639 = vpop.f32.mrb[0].mxu0
      %v1640 = vadd.f32 0.0, %v1639
      %v1641 = vpop.f32.mrb[0].mxu0
      %v1642 = vpop.f32.mrb[0].mxu0
      %v1643 = vadd.f32 0.0, %v1642
      %v1644 = vpop.f32.mrb[0].mxu0
      %1645 = vmatprep.mubr.bf16.mxu0 0
      %1646 = vmatmul.mubr.bf16.gmra.mrb[0].mxu0 %v1574
      %v1647 = vpop.f32.mrb[0].mxu0
      %v1648 = vadd.f32 0.0, %v1647
      %v1649 = vpop.f32.mrb[0].mxu0
      %v1650 = vpop.f32.mrb[0].mxu0
      %v1651 = vadd.f32 0.0, %v1650
      %v1652 = vpop.f32.mrb[0].mxu0
      %1653 = vmatprep.mubr.bf16.mxu0 0
      %1654 = vmatmul.mubr.bf16.gmra.mrb[0].mxu0 %v1577
      %v1655 = vpop.f32.mrb[0].mxu0
      %v1656 = vadd.f32 0.0, %v1655
      %v1657 = vpop.f32.mrb[0].mxu0
      %v1658 = vpop.f32.mrb[0].mxu0
      %v1659 = vadd.f32 0.0, %v1658
      %v1660 = vpop.f32.mrb[0].mxu0
      %1661 = vmatprep.mubr.bf16.mxu0 0
      %1662 = vmatmul.mubr.bf16.gmra.mrb[0].mxu0 %v1580
      %v1663 = vpop.f32.mrb[0].mxu0
      %v1664 = vadd.f32 0.0, %v1663
      %v1665 = vpop.f32.mrb[0].mxu0
      %v1666 = vpop.f32.mrb[0].mxu0
      %v1667 = vadd.f32 0.0, %v1666
      %v1668 = vpop.f32.mrb[0].mxu0
      %1669 = vmatprep.mubr.bf16.mxu0 0
      %1670 = vmatmul.mubr.bf16.gmra.mrb[0].mxu0 %v1583
      %v1671 = vpop.f32.mrb[0].mxu0
      %v1672 = vadd.f32 0.0, %v1671
      %v1673 = vpop.f32.mrb[0].mxu0
      %v1674 = vpop.f32.mrb[0].mxu0
      %v1675 = vadd.f32 0.0, %v1674
      %v1676 = vpop.f32.mrb[0].mxu0
      %1677 = vmatprep.mubr.bf16.mxu0 0
      %1678 = vmatmul.mubr.bf16.gmra.mrb[0].mxu0 %v1586
      %v1679 = vpop.f32.mrb[0].mxu0
      %v1680 = vadd.f32 0.0, %v1679
      %v1681 = vpop.f32.mrb[0].mxu0
      %v1682 = vpop.f32.mrb[0].mxu0
      %v1683 = vadd.f32 0.0, %v1682
      %v1684 = vpop.f32.mrb[0].mxu0
      %1685 = vmatprep.mubr.bf16.mxu0 0
      %1686 = vmatmul.mubr.bf16.gmra.mrb[0].mxu0 %v1589
      %v1687 = vpop.f32.mrb[0].mxu0
      %v1688 = vadd.f32 0.0, %v1687
      %v1689 = vpop.f32.mrb[0].mxu0
      %v1690 = vpop.f32.mrb[0].mxu0
      %v1691 = vadd.f32 0.0, %v1690
      %v1692 = vpop.f32.mrb[0].mxu0
      %1693 = vmatprep.mubr.bf16.mxu0 0
      %1694 = vmatmul.mubr.bf16.gmra.mrb[0].mxu0 %v1592
      %v1695 = vpop.f32.mrb[0].mxu0
      %v1696 = vadd.f32 0.0, %v1695
      %v1697 = vpop.f32.mrb[0].mxu0
      %v1698 = vpop.f32.mrb[0].mxu0
      %v1699 = vadd.f32 0.0, %v1698
      %v1700 = vpop.f32.mrb[0].mxu0
      %1701 = vdwg.mxu0
      %v1702 = vadd.f32 %v1453, %v1632
      %v1703 = vadd.f32 %v1454, %v1635
      %v1704 = vadd.f32 %v1455, %v1640
      %v1705 = vadd.f32 %v1456, %v1643
      %v1706 = vadd.f32 %v1457, %v1648
      %v1707 = vadd.f32 %v1458, %v1651
      %v1708 = vadd.f32 %v1459, %v1656
      %v1709 = vadd.f32 %v1460, %v1659
      %v1710 = vadd.f32 %v1461, %v1664
      %v1711 = vadd.f32 %v1462, %v1667
      %v1712 = vadd.f32 %v1463, %v1672
      %v1713 = vadd.f32 %v1464, %v1675
      %v1714 = vadd.f32 %v1465, %v1680
      %v1715 = vadd.f32 %v1466, %v1683
      %v1716 = vadd.f32 %v1467, %v1688
      %v1717 = vadd.f32 %v1468, %v1691
      %v1718 = vadd.f32 %v1469, %v1696
      %v1719 = vadd.f32 %v1470, %v1699
      %v1720 = vld [vmem:[#allocation2 + $0x8] sm:$0xc]
      %s1721 = scalar_lea.vmem %s3, 10
      %v1722 = vld [vmem:[%s1721] sm:$0x3]
      %v1724 = vunpack.c.l.b16 %v1720
      %v1725 = vpack.c.b16 %v1271, %v1724
      %vm1726 = vcmask 1045504
      %v1727 = vrot.slane %v1725, 2
      %v1728 = vrot.slane %v1290, 2
      %v1729 = vsel %vm1726, %v1727, %v1728
      %v1730 = vrot.slane %v1291, 2
      %v1731 = vsel %vm1726, %v1728, %v1730
      %v1732 = vrot.slane %v1292, 2
      %v1733 = vsel %vm1726, %v1730, %v1732
      %v1734 = vrot.slane %v1293, 2
      %v1735 = vsel %vm1726, %v1732, %v1734
      %v1736 = vrot.slane %v1294, 2
      %v1737 = vsel %vm1726, %v1734, %v1736
      %v1738 = vrot.slane %v1295, 2
      %v1739 = vsel %vm1726, %v1736, %v1738
      %v1740 = vrot.slane %v1296, 2
      %v1741 = vsel %vm1726, %v1738, %v1740
      %v1742 = vrot.slane %v1297, 2
      %v1743 = vsel %vm1726, %v1740, %v1742
      %v1744 = vrot.slane %v1476, 2
      %v1745 = vsel %vm1726, %v1742, %v1744
      %v1747 = vsel %vm788, %v1729, 0
      %v1750 = vsel %vm788, %v1731, 0
      %v1753 = vsel %vm788, %v1733, 0
      %v1756 = vsel %vm788, %v1735, 0
      %v1759 = vsel %vm788, %v1737, 0
      %v1762 = vsel %vm788, %v1739, 0
      %v1765 = vsel %vm788, %v1741, 0
      %v1768 = vsel %vm788, %v1743, 0
      %v1771 = vsel %vm788, %v1745, 0
      %v1774 = vsel %vm816, %v1722, 0
      %1776 = vmatprep.subr.bf16.mxu0 0
      %1777 = vmatpush1.bf16.msra.mxu0 %v1774
      %1778 = vmatprep.subr.bf16.mxu0 0
      %1779 = vmatpush1.bf16.msra.mxu0 0
      %1780 = vmatprep.subr.bf16.mxu0 0
      %1781 = vmatpush1.bf16.msra.mxu0 0
      %1782 = vmatprep.subr.bf16.mxu0 0
      %1783 = vmatpush1.bf16.msra.mxu0 0
      %1784 = vmatprep.subr.bf16.mxu0 0
      %1785 = vmatpush1.bf16.msra.mxu0 0
      %1786 = vmatprep.subr.bf16.mxu0 0
      %1787 = vmatpush1.bf16.msra.mxu0 0
      %1788 = vmatprep.subr.bf16.mxu0 0
      %1789 = vmatpush1.bf16.msra.mxu0 0
      %1790 = vmatprep.subr.bf16.mxu0 0
      %1791 = vmatpush1.bf16.msra.mxu0 0
      %1792 = vmatprep.subr.bf16.mxu0 0
      %1793 = vmatpush1.bf16.msra.mxu0 0
      %1794 = vmatprep.subr.bf16.mxu0 0
      %1795 = vmatpush1.bf16.msra.mxu0 0
      %1796 = vmatprep.subr.bf16.mxu0 0
      %1797 = vmatpush1.bf16.msra.mxu0 0
      %1798 = vmatprep.subr.bf16.mxu0 0
      %1799 = vmatpush1.bf16.msra.mxu0 0
      %1800 = vmatprep.subr.bf16.mxu0 0
      %1801 = vmatpush1.bf16.msra.mxu0 0
      %1802 = vmatprep.subr.bf16.mxu0 0
      %1803 = vmatpush1.bf16.msra.mxu0 0
      %1804 = vmatprep.subr.bf16.mxu0 0
      %1805 = vmatpush1.bf16.msra.mxu0 0
      %1806 = vmatprep.subr.bf16.mxu0 0
      %1807 = vmatpush1.bf16.msra.mxu0 0
      %1808 = vmatprep.mubr.bf16.mxu0 0
      %1809 = vmatmul.mubr.bf16.gmra.mrb[0].mxu0 %v1747
      %v1810 = vpop.f32.mrb[0].mxu0
      %v1811 = vadd.f32 0.0, %v1810
      %v1812 = vpop.f32.mrb[0].mxu0
      %v1813 = vpop.f32.mrb[0].mxu0
      %v1814 = vadd.f32 0.0, %v1813
      %v1815 = vpop.f32.mrb[0].mxu0
      %1816 = vmatprep.mubr.bf16.mxu0 0
      %1817 = vmatmul.mubr.bf16.gmra.mrb[0].mxu0 %v1750
      %v1818 = vpop.f32.mrb[0].mxu0
      %v1819 = vadd.f32 0.0, %v1818
      %v1820 = vpop.f32.mrb[0].mxu0
      %v1821 = vpop.f32.mrb[0].mxu0
      %v1822 = vadd.f32 0.0, %v1821
      %v1823 = vpop.f32.mrb[0].mxu0
      %1824 = vmatprep.mubr.bf16.mxu0 0
      %1825 = vmatmul.mubr.bf16.gmra.mrb[0].mxu0 %v1753
      %v1826 = vpop.f32.mrb[0].mxu0
      %v1827 = vadd.f32 0.0, %v1826
      %v1828 = vpop.f32.mrb[0].mxu0
      %v1829 = vpop.f32.mrb[0].mxu0
      %v1830 = vadd.f32 0.0, %v1829
      %v1831 = vpop.f32.mrb[0].mxu0
      %1832 = vmatprep.mubr.bf16.mxu0 0
      %1833 = vmatmul.mubr.bf16.gmra.mrb[0].mxu0 %v1756
      %v1834 = vpop.f32.mrb[0].mxu0
      %v1835 = vadd.f32 0.0, %v1834
      %v1836 = vpop.f32.mrb[0].mxu0
      %v1837 = vpop.f32.mrb[0].mxu0
      %v1838 = vadd.f32 0.0, %v1837
      %v1839 = vpop.f32.mrb[0].mxu0
      %1840 = vmatprep.mubr.bf16.mxu0 0
      %1841 = vmatmul.mubr.bf16.gmra.mrb[0].mxu0 %v1759
      %v1842 = vpop.f32.mrb[0].mxu0
      %v1843 = vadd.f32 0.0, %v1842
      %v1844 = vpop.f32.mrb[0].mxu0
      %v1845 = vpop.f32.mrb[0].mxu0
      %v1846 = vadd.f32 0.0, %v1845
      %v1847 = vpop.f32.mrb[0].mxu0
      %1848 = vmatprep.mubr.bf16.mxu0 0
      %1849 = vmatmul.mubr.bf16.gmra.mrb[0].mxu0 %v1762
      %v1850 = vpop.f32.mrb[0].mxu0
      %v1851 = vadd.f32 0.0, %v1850
      %v1852 = vpop.f32.mrb[0].mxu0
      %v1853 = vpop.f32.mrb[0].mxu0
      %v1854 = vadd.f32 0.0, %v1853
      %v1855 = vpop.f32.mrb[0].mxu0
      %1856 = vmatprep.mubr.bf16.mxu0 0
      %1857 = vmatmul.mubr.bf16.gmra.mrb[0].mxu0 %v1765
      %v1858 = vpop.f32.mrb[0].mxu0
      %v1859 = vadd.f32 0.0, %v1858
      %v1860 = vpop.f32.mrb[0].mxu0
      %v1861 = vpop.f32.mrb[0].mxu0
      %v1862 = vadd.f32 0.0, %v1861
      %v1863 = vpop.f32.mrb[0].mxu0
      %1864 = vmatprep.mubr.bf16.mxu0 0
      %1865 = vmatmul.mubr.bf16.gmra.mrb[0].mxu0 %v1768
      %v1866 = vpop.f32.mrb[0].mxu0
      %v1867 = vadd.f32 0.0, %v1866
      %v1868 = vpop.f32.mrb[0].mxu0
      %v1869 = vpop.f32.mrb[0].mxu0
      %v1870 = vadd.f32 0.0, %v1869
      %v1871 = vpop.f32.mrb[0].mxu0
      %1872 = vmatprep.mubr.bf16.mxu0 0
      %1873 = vmatmul.mubr.bf16.gmra.mrb[0].mxu0 %v1771
      %v1874 = vpop.f32.mrb[0].mxu0
      %v1875 = vadd.f32 0.0, %v1874
      %v1876 = vpop.f32.mrb[0].mxu0
      %v1877 = vpop.f32.mrb[0].mxu0
      %v1878 = vadd.f32 0.0, %v1877
      %v1879 = vpop.f32.mrb[0].mxu0
      %1880 = vdwg.mxu0
      %v1881 = vadd.f32 %v1702, %v1811
      %v1882 = vadd.f32 %v1703, %v1814
      %v1883 = vadd.f32 %v1704, %v1819
      %v1884 = vadd.f32 %v1705, %v1822
      %v1885 = vadd.f32 %v1706, %v1827
      %v1886 = vadd.f32 %v1707, %v1830
      %v1887 = vadd.f32 %v1708, %v1835
      %v1888 = vadd.f32 %v1709, %v1838
      %v1889 = vadd.f32 %v1710, %v1843
      %v1890 = vadd.f32 %v1711, %v1846
      %v1891 = vadd.f32 %v1712, %v1851
      %v1892 = vadd.f32 %v1713, %v1854
      %v1893 = vadd.f32 %v1714, %v1859
      %v1894 = vadd.f32 %v1715, %v1862
      %v1895 = vadd.f32 %v1716, %v1867
      %v1896 = vadd.f32 %v1717, %v1870
      %v1897 = vadd.f32 %v1718, %v1875
      %v1898 = vadd.f32 %v1719, %v1878
      %v1899 = vld [vmem:[#allocation2 + $0x10] sm:$0xc]
      %v1900 = vld [vmem:[#allocation2 + $0x14] sm:$0xf]
      %v1901 = vld [vmem:[#allocation2 + $0x18] sm:$0xf]
      %v1902 = vld [vmem:[#allocation2 + $0x1c] sm:$0xf]
      %v1903 = vld [vmem:[#allocation2 + $0x20] sm:$0xf]
      %v1904 = vld [vmem:[#allocation2 + $0x24] sm:$0xf]
      %v1905 = vld [vmem:[#allocation2 + $0x28] sm:$0xf]
      %v1906 = vld [vmem:[#allocation2 + $0x2c] sm:$0xf]
      %v1907 = vld [vmem:[#allocation2 + $0x30] sm:$0xf]
      %v1908 = vld [vmem:[#allocation2 + $0x34] sm:$0xf]
      %v1909 = vld [vmem:[#allocation2 + $0x38] sm:$0xf]
      %v1910 = vld [vmem:[#allocation2 + $0x3c] sm:$0xf]
      %v1911 = vld [vmem:[#allocation2 + $0x40] sm:$0xf]
      %v1912 = vld [vmem:[#allocation2 + $0x44] sm:$0xf]
      %v1913 = vld [vmem:[#allocation2 + $0x48] sm:$0xf]
      %v1914 = vld [vmem:[#allocation2 + $0x4c] sm:$0xf]
      %v1915 = vld [vmem:[#allocation2 + $0x50] sm:$0xf]
      %v1916 = vld [vmem:[#allocation2 + $0x54] sm:$0xf]
      %v1917 = vld [vmem:[#allocation2 + $0x58] sm:$0x3]
      %s1918 = scalar_lea.vmem %s3, 12
      %v1919 = vld [vmem:[%s1918] sm:$0x3]
      %v1939 = vunpack.c.l.b16 %v1899
      %v1940 = vunpack.c.l.b16 %v1900
      %v1941 = vunpack.c.l.b16 %v1901
      %v1942 = vunpack.c.l.b16 %v1902
      %v1943 = vunpack.c.l.b16 %v1903
      %v1944 = vunpack.c.l.b16 %v1904
      %v1945 = vunpack.c.l.b16 %v1905
      %v1946 = vunpack.c.l.b16 %v1906
      %v1947 = vunpack.c.l.b16 %v1907
      %v1948 = vunpack.c.l.b16 %v1908
      %v1949 = vunpack.c.l.b16 %v1909
      %v1950 = vunpack.c.l.b16 %v1910
      %v1951 = vunpack.c.l.b16 %v1911
      %v1952 = vunpack.c.l.b16 %v1912
      %v1953 = vunpack.c.l.b16 %v1913
      %v1954 = vunpack.c.l.b16 %v1914
      %v1955 = vunpack.c.l.b16 %v1915
      %v1956 = vunpack.c.l.b16 %v1916
      %v1957 = vunpack.c.l.b16 %v1917
      %v1958 = vpack.c.b16 %v1940, %v1939
      %v1959 = vpack.c.b16 %v1942, %v1941
      %v1960 = vpack.c.b16 %v1944, %v1943
      %v1961 = vpack.c.b16 %v1946, %v1945
      %v1962 = vpack.c.b16 %v1948, %v1947
      %v1963 = vpack.c.b16 %v1950, %v1949
      %v1964 = vpack.c.b16 %v1952, %v1951
      %v1965 = vpack.c.b16 %v1954, %v1953
      %v1966 = vpack.c.b16 %v1956, %v1955
      %v1967 = vpack.c.b16 %v1957, %v1957
      %v1968 = vrot.slane %v1958, 2
      %v1969 = vrot.slane %v1959, 2
      %v1970 = vsel %vm1726, %v1968, %v1969
      %v1971 = vrot.slane %v1960, 2
      %v1972 = vsel %vm1726, %v1969, %v1971
      %v1973 = vrot.slane %v1961, 2
      %v1974 = vsel %vm1726, %v1971, %v1973
      %v1975 = vrot.slane %v1962, 2
      %v1976 = vsel %vm1726, %v1973, %v1975
      %v1977 = vrot.slane %v1963, 2
      %v1978 = vsel %vm1726, %v1975, %v1977
      %v1979 = vrot.slane %v1964, 2
      %v1980 = vsel %vm1726, %v1977, %v1979
      %v1981 = vrot.slane %v1965, 2
      %v1982 = vsel %vm1726, %v1979, %v1981
      %v1983 = vrot.slane %v1966, 2
      %v1984 = vsel %vm1726, %v1981, %v1983
      %v1985 = vrot.slane %v1967, 2
      %v1986 = vsel %vm1726, %v1983, %v1985
      %v1988 = vsel %vm788, %v1970, 0
      %v1991 = vsel %vm788, %v1972, 0
      %v1994 = vsel %vm788, %v1974, 0
      %v1997 = vsel %vm788, %v1976, 0
      %v2000 = vsel %vm788, %v1978, 0
      %v2003 = vsel %vm788, %v1980, 0
      %v2006 = vsel %vm788, %v1982, 0
      %v2009 = vsel %vm788, %v1984, 0
      %v2012 = vsel %vm788, %v1986, 0
      %v2015 = vsel %vm816, %v1919, 0
      %2017 = vmatprep.subr.bf16.mxu0 0
      %2018 = vmatpush1.bf16.msra.mxu0 %v2015
      %2019 = vmatprep.subr.bf16.mxu0 0
      %2020 = vmatpush1.bf16.msra.mxu0 0
      %2021 = vmatprep.subr.bf16.mxu0 0
      %2022 = vmatpush1.bf16.msra.mxu0 0
      %2023 = vmatprep.subr.bf16.mxu0 0
      %2024 = vmatpush1.bf16.msra.mxu0 0
      %2025 = vmatprep.subr.bf16.mxu0 0
      %2026 = vmatpush1.bf16.msra.mxu0 0
      %2027 = vmatprep.subr.bf16.mxu0 0
      %2028 = vmatpush1.bf16.msra.mxu0 0
      %2029 = vmatprep.subr.bf16.mxu0 0
      %2030 = vmatpush1.bf16.msra.mxu0 0
      %2031 = vmatprep.subr.bf16.mxu0 0
      %2032 = vmatpush1.bf16.msra.mxu0 0
      %2033 = vmatprep.subr.bf16.mxu0 0
      %2034 = vmatpush1.bf16.msra.mxu0 0
      %2035 = vmatprep.subr.bf16.mxu0 0
      %2036 = vmatpush1.bf16.msra.mxu0 0
      %2037 = vmatprep.subr.bf16.mxu0 0
      %2038 = vmatpush1.bf16.msra.mxu0 0
      %2039 = vmatprep.subr.bf16.mxu0 0
      %2040 = vmatpush1.bf16.msra.mxu0 0
      %2041 = vmatprep.subr.bf16.mxu0 0
      %2042 = vmatpush1.bf16.msra.mxu0 0
      %2043 = vmatprep.subr.bf16.mxu0 0
      %2044 = vmatpush1.bf16.msra.mxu0 0
      %2045 = vmatprep.subr.bf16.mxu0 0
      %2046 = vmatpush1.bf16.msra.mxu0 0
      %2047 = vmatprep.subr.bf16.mxu0 0
      %2048 = vmatpush1.bf16.msra.mxu0 0
      %2049 = vmatprep.mubr.bf16.mxu0 0
      %2050 = vmatmul.mubr.bf16.gmra.mrb[0].mxu0 %v1988
      %v2051 = vpop.f32.mrb[0].mxu0
      %v2052 = vadd.f32 0.0, %v2051
      %v2053 = vpop.f32.mrb[0].mxu0
      %v2054 = vpop.f32.mrb[0].mxu0
      %v2055 = vadd.f32 0.0, %v2054
      %v2056 = vpop.f32.mrb[0].mxu0
      %2057 = vmatprep.mubr.bf16.mxu0 0
      %2058 = vmatmul.mubr.bf16.gmra.mrb[0].mxu0 %v1991
      %v2059 = vpop.f32.mrb[0].mxu0
      %v2060 = vadd.f32 0.0, %v2059
      %v2061 = vpop.f32.mrb[0].mxu0
      %v2062 = vpop.f32.mrb[0].mxu0
      %v2063 = vadd.f32 0.0, %v2062
      %v2064 = vpop.f32.mrb[0].mxu0
      %2065 = vmatprep.mubr.bf16.mxu0 0
      %2066 = vmatmul.mubr.bf16.gmra.mrb[0].mxu0 %v1994
      %v2067 = vpop.f32.mrb[0].mxu0
      %v2068 = vadd.f32 0.0, %v2067
      %v2069 = vpop.f32.mrb[0].mxu0
      %v2070 = vpop.f32.mrb[0].mxu0
      %v2071 = vadd.f32 0.0, %v2070
      %v2072 = vpop.f32.mrb[0].mxu0
      %2073 = vmatprep.mubr.bf16.mxu0 0
      %2074 = vmatmul.mubr.bf16.gmra.mrb[0].mxu0 %v1997
      %v2075 = vpop.f32.mrb[0].mxu0
      %v2076 = vadd.f32 0.0, %v2075
      %v2077 = vpop.f32.mrb[0].mxu0
      %v2078 = vpop.f32.mrb[0].mxu0
      %v2079 = vadd.f32 0.0, %v2078
      %v2080 = vpop.f32.mrb[0].mxu0
      %2081 = vmatprep.mubr.bf16.mxu0 0
      %2082 = vmatmul.mubr.bf16.gmra.mrb[0].mxu0 %v2000
      %v2083 = vpop.f32.mrb[0].mxu0
      %v2084 = vadd.f32 0.0, %v2083
      %v2085 = vpop.f32.mrb[0].mxu0
      %v2086 = vpop.f32.mrb[0].mxu0
      %v2087 = vadd.f32 0.0, %v2086
      %v2088 = vpop.f32.mrb[0].mxu0
      %2089 = vmatprep.mubr.bf16.mxu0 0
      %2090 = vmatmul.mubr.bf16.gmra.mrb[0].mxu0 %v2003
      %v2091 = vpop.f32.mrb[0].mxu0
      %v2092 = vadd.f32 0.0, %v2091
      %v2093 = vpop.f32.mrb[0].mxu0
      %v2094 = vpop.f32.mrb[0].mxu0
      %v2095 = vadd.f32 0.0, %v2094
      %v2096 = vpop.f32.mrb[0].mxu0
      %2097 = vmatprep.mubr.bf16.mxu0 0
      %2098 = vmatmul.mubr.bf16.gmra.mrb[0].mxu0 %v2006
      %v2099 = vpop.f32.mrb[0].mxu0
      %v2100 = vadd.f32 0.0, %v2099
      %v2101 = vpop.f32.mrb[0].mxu0
      %v2102 = vpop.f32.mrb[0].mxu0
      %v2103 = vadd.f32 0.0, %v2102
      %v2104 = vpop.f32.mrb[0].mxu0
      %2105 = vmatprep.mubr.bf16.mxu0 0
      %2106 = vmatmul.mubr.bf16.gmra.mrb[0].mxu0 %v2009
      %v2107 = vpop.f32.mrb[0].mxu0
      %v2108 = vadd.f32 0.0, %v2107
      %v2109 = vpop.f32.mrb[0].mxu0
      %v2110 = vpop.f32.mrb[0].mxu0
      %v2111 = vadd.f32 0.0, %v2110
      %v2112 = vpop.f32.mrb[0].mxu0
      %2113 = vmatprep.mubr.bf16.mxu0 0
      %2114 = vmatmul.mubr.bf16.gmra.mrb[0].mxu0 %v2012
      %v2115 = vpop.f32.mrb[0].mxu0
      %v2116 = vadd.f32 0.0, %v2115
      %v2117 = vpop.f32.mrb[0].mxu0
      %v2118 = vpop.f32.mrb[0].mxu0
      %v2119 = vadd.f32 0.0, %v2118
      %v2120 = vpop.f32.mrb[0].mxu0
      %2121 = vdwg.mxu0
      %v2122 = vadd.f32 %v1881, %v2052
      %v2123 = vadd.f32 %v1882, %v2055
      %v2124 = vadd.f32 %v1883, %v2060
      %v2125 = vadd.f32 %v1884, %v2063
      %v2126 = vadd.f32 %v1885, %v2068
      %v2127 = vadd.f32 %v1886, %v2071
      %v2128 = vadd.f32 %v1887, %v2076
      %v2129 = vadd.f32 %v1888, %v2079
      %v2130 = vadd.f32 %v1889, %v2084
      %v2131 = vadd.f32 %v1890, %v2087
      %v2132 = vadd.f32 %v1891, %v2092
      %v2133 = vadd.f32 %v1892, %v2095
      %v2134 = vadd.f32 %v1893, %v2100
      %v2135 = vadd.f32 %v1894, %v2103
      %v2136 = vadd.f32 %v1895, %v2108
      %v2137 = vadd.f32 %v1896, %v2111
      %v2138 = vadd.f32 %v1897, %v2116
      %v2139 = vadd.f32 %v1898, %v2119
      %v2140 = vld [vmem:[#allocation2 + $0x58] sm:$0x7]
      %s2141 = scalar_lea.vmem %s3, 14
      %v2142 = vld [vmem:[%s2141] sm:$0x3]
      %v2144 = vunpack.c.l.b16 %v2140
      %v2145 = vpack.c.b16 %v2144, %v2144
      %vm2146 = vsmask.f32 5376
      %v2148 = vshrl.u32 %v1958, 16
      %v2150 = vrot.slane %v2148, 2
      %v2151 = vshll.u32 %v1958, 16
      %v2153 = vrot.slane %v2151, 3
      %v2154 = vor.u32 %v2150, %v2153
      %v2156 = vshrl.u32 %v1959, 16
      %v2158 = vrot.slane %v2156, 2
      %v2159 = vshll.u32 %v1959, 16
      %v2161 = vrot.slane %v2159, 3
      %v2162 = vor.u32 %v2158, %v2161
      %v2163 = vsel %vm2146, %v2154, %v2162
      %v2165 = vshrl.u32 %v1960, 16
      %v2167 = vrot.slane %v2165, 2
      %v2168 = vshll.u32 %v1960, 16
      %v2170 = vrot.slane %v2168, 3
      %v2171 = vor.u32 %v2167, %v2170
      %v2172 = vsel %vm2146, %v2162, %v2171
      %v2174 = vshrl.u32 %v1961, 16
      %v2176 = vrot.slane %v2174, 2
      %v2177 = vshll.u32 %v1961, 16
      %v2179 = vrot.slane %v2177, 3
      %v2180 = vor.u32 %v2176, %v2179
      %v2181 = vsel %vm2146, %v2171, %v2180
      %v2183 = vshrl.u32 %v1962, 16
      %v2185 = vrot.slane %v2183, 2
      %v2186 = vshll.u32 %v1962, 16
      %v2188 = vrot.slane %v2186, 3
      %v2189 = vor.u32 %v2185, %v2188
      %v2190 = vsel %vm2146, %v2180, %v2189
      %v2192 = vshrl.u32 %v1963, 16
      %v2194 = vrot.slane %v2192, 2
      %v2195 = vshll.u32 %v1963, 16
      %v2197 = vrot.slane %v2195, 3
      %v2198 = vor.u32 %v2194, %v2197
      %v2199 = vsel %vm2146, %v2189, %v2198
      %v2201 = vshrl.u32 %v1964, 16
      %v2203 = vrot.slane %v2201, 2
      %v2204 = vshll.u32 %v1964, 16
      %v2206 = vrot.slane %v2204, 3
      %v2207 = vor.u32 %v2203, %v2206
      %v2208 = vsel %vm2146, %v2198, %v2207
      %v2210 = vshrl.u32 %v1965, 16
      %v2212 = vrot.slane %v2210, 2
      %v2213 = vshll.u32 %v1965, 16
      %v2215 = vrot.slane %v2213, 3
      %v2216 = vor.u32 %v2212, %v2215
      %v2217 = vsel %vm2146, %v2207, %v2216
      %v2219 = vshrl.u32 %v1966, 16
      %v2221 = vrot.slane %v2219, 2
      %v2222 = vshll.u32 %v1966, 16
      %v2224 = vrot.slane %v2222, 3
      %v2225 = vor.u32 %v2221, %v2224
      %v2226 = vsel %vm2146, %v2216, %v2225
      %v2228 = vshrl.u32 %v2145, 16
      %v2230 = vrot.slane %v2228, 2
      %v2231 = vshll.u32 %v2145, 16
      %v2233 = vrot.slane %v2231, 3
      %v2234 = vor.u32 %v2230, %v2233
      %v2235 = vsel %vm2146, %v2225, %v2234
      %v2237 = vsel %vm788, %v2163, 0
      %v2240 = vsel %vm788, %v2172, 0
      %v2243 = vsel %vm788, %v2181, 0
      %v2246 = vsel %vm788, %v2190, 0
      %v2249 = vsel %vm788, %v2199, 0
      %v2252 = vsel %vm788, %v2208, 0
      %v2255 = vsel %vm788, %v2217, 0
      %v2258 = vsel %vm788, %v2226, 0
      %v2261 = vsel %vm788, %v2235, 0
      %v2264 = vsel %vm816, %v2142, 0
      %2266 = vmatprep.subr.bf16.mxu0 0
      %2267 = vmatpush1.bf16.msra.mxu0 %v2264
      %2268 = vmatprep.subr.bf16.mxu0 0
      %2269 = vmatpush1.bf16.msra.mxu0 0
      %2270 = vmatprep.subr.bf16.mxu0 0
      %2271 = vmatpush1.bf16.msra.mxu0 0
      %2272 = vmatprep.subr.bf16.mxu0 0
      %2273 = vmatpush1.bf16.msra.mxu0 0
      %2274 = vmatprep.subr.bf16.mxu0 0
      %2275 = vmatpush1.bf16.msra.mxu0 0
      %2276 = vmatprep.subr.bf16.mxu0 0
      %2277 = vmatpush1.bf16.msra.mxu0 0
      %2278 = vmatprep.subr.bf16.mxu0 0
      %2279 = vmatpush1.bf16.msra.mxu0 0
      %2280 = vmatprep.subr.bf16.mxu0 0
      %2281 = vmatpush1.bf16.msra.mxu0 0
      %2282 = vmatprep.subr.bf16.mxu0 0
      %2283 = vmatpush1.bf16.msra.mxu0 0
      %2284 = vmatprep.subr.bf16.mxu0 0
      %2285 = vmatpush1.bf16.msra.mxu0 0
      %2286 = vmatprep.subr.bf16.mxu0 0
      %2287 = vmatpush1.bf16.msra.mxu0 0
      %2288 = vmatprep.subr.bf16.mxu0 0
      %2289 = vmatpush1.bf16.msra.mxu0 0
      %2290 = vmatprep.subr.bf16.mxu0 0
      %2291 = vmatpush1.bf16.msra.mxu0 0
      %2292 = vmatprep.subr.bf16.mxu0 0
      %2293 = vmatpush1.bf16.msra.mxu0 0
      %2294 = vmatprep.subr.bf16.mxu0 0
      %2295 = vmatpush1.bf16.msra.mxu0 0
      %2296 = vmatprep.subr.bf16.mxu0 0
      %2297 = vmatpush1.bf16.msra.mxu0 0
      %2298 = vmatprep.mubr.bf16.mxu0 0
      %2299 = vmatmul.mubr.bf16.gmra.mrb[0].mxu0 %v2237
      %v2300 = vpop.f32.mrb[0].mxu0
      %v2301 = vadd.f32 0.0, %v2300
      %v2302 = vpop.f32.mrb[0].mxu0
      %v2303 = vpop.f32.mrb[0].mxu0
      %v2304 = vadd.f32 0.0, %v2303
      %v2305 = vpop.f32.mrb[0].mxu0
      %2306 = vmatprep.mubr.bf16.mxu0 0
      %2307 = vmatmul.mubr.bf16.gmra.mrb[0].mxu0 %v2240
      %v2308 = vpop.f32.mrb[0].mxu0
      %v2309 = vadd.f32 0.0, %v2308
      %v2310 = vpop.f32.mrb[0].mxu0
      %v2311 = vpop.f32.mrb[0].mxu0
      %v2312 = vadd.f32 0.0, %v2311
      %v2313 = vpop.f32.mrb[0].mxu0
      %2314 = vmatprep.mubr.bf16.mxu0 0
      %2315 = vmatmul.mubr.bf16.gmra.mrb[0].mxu0 %v2243
      %v2316 = vpop.f32.mrb[0].mxu0
      %v2317 = vadd.f32 0.0, %v2316
      %v2318 = vpop.f32.mrb[0].mxu0
      %v2319 = vpop.f32.mrb[0].mxu0
      %v2320 = vadd.f32 0.0, %v2319
      %v2321 = vpop.f32.mrb[0].mxu0
      %2322 = vmatprep.mubr.bf16.mxu0 0
      %2323 = vmatmul.mubr.bf16.gmra.mrb[0].mxu0 %v2246
      %v2324 = vpop.f32.mrb[0].mxu0
      %v2325 = vadd.f32 0.0, %v2324
      %v2326 = vpop.f32.mrb[0].mxu0
      %v2327 = vpop.f32.mrb[0].mxu0
      %v2328 = vadd.f32 0.0, %v2327
      %v2329 = vpop.f32.mrb[0].mxu0
      %2330 = vmatprep.mubr.bf16.mxu0 0
      %2331 = vmatmul.mubr.bf16.gmra.mrb[0].mxu0 %v2249
      %v2332 = vpop.f32.mrb[0].mxu0
      %v2333 = vadd.f32 0.0, %v2332
      %v2334 = vpop.f32.mrb[0].mxu0
      %v2335 = vpop.f32.mrb[0].mxu0
      %v2336 = vadd.f32 0.0, %v2335
      %v2337 = vpop.f32.mrb[0].mxu0
      %2338 = vmatprep.mubr.bf16.mxu0 0
      %2339 = vmatmul.mubr.bf16.gmra.mrb[0].mxu0 %v2252
      %v2340 = vpop.f32.mrb[0].mxu0
      %v2341 = vadd.f32 0.0, %v2340
      %v2342 = vpop.f32.mrb[0].mxu0
      %v2343 = vpop.f32.mrb[0].mxu0
      %v2344 = vadd.f32 0.0, %v2343
      %v2345 = vpop.f32.mrb[0].mxu0
      %2346 = vmatprep.mubr.bf16.mxu0 0
      %2347 = vmatmul.mubr.bf16.gmra.mrb[0].mxu0 %v2255
      %v2348 = vpop.f32.mrb[0].mxu0
      %v2349 = vadd.f32 0.0, %v2348
      %v2350 = vpop.f32.mrb[0].mxu0
      %v2351 = vpop.f32.mrb[0].mxu0
      %v2352 = vadd.f32 0.0, %v2351
      %v2353 = vpop.f32.mrb[0].mxu0
      %2354 = vmatprep.mubr.bf16.mxu0 0
      %2355 = vmatmul.mubr.bf16.gmra.mrb[0].mxu0 %v2258
      %v2356 = vpop.f32.mrb[0].mxu0
      %v2357 = vadd.f32 0.0, %v2356
      %v2358 = vpop.f32.mrb[0].mxu0
      %v2359 = vpop.f32.mrb[0].mxu0
      %v2360 = vadd.f32 0.0, %v2359
      %v2361 = vpop.f32.mrb[0].mxu0
      %2362 = vmatprep.mubr.bf16.mxu0 0
      %2363 = vmatmul.mubr.bf16.gmra.mrb[0].mxu0 %v2261
      %v2364 = vpop.f32.mrb[0].mxu0
      %v2365 = vadd.f32 0.0, %v2364
      %v2366 = vpop.f32.mrb[0].mxu0
      %v2367 = vpop.f32.mrb[0].mxu0
      %v2368 = vadd.f32 0.0, %v2367
      %v2369 = vpop.f32.mrb[0].mxu0
      %2370 = vdwg.mxu0
      %v2371 = vadd.f32 %v2122, %v2301
      %v2372 = vadd.f32 %v2123, %v2304
      %v2373 = vadd.f32 %v2124, %v2309
      %v2374 = vadd.f32 %v2125, %v2312
      %v2375 = vadd.f32 %v2126, %v2317
      %v2376 = vadd.f32 %v2127, %v2320
      %v2377 = vadd.f32 %v2128, %v2325
      %v2378 = vadd.f32 %v2129, %v2328
      %v2379 = vadd.f32 %v2130, %v2333
      %v2380 = vadd.f32 %v2131, %v2336
      %v2381 = vadd.f32 %v2132, %v2341
      %v2382 = vadd.f32 %v2133, %v2344
      %v2383 = vadd.f32 %v2134, %v2349
      %v2384 = vadd.f32 %v2135, %v2352
      %v2385 = vadd.f32 %v2136, %v2357
      %v2386 = vadd.f32 %v2137, %v2360
      %v2387 = vadd.f32 %v2138, %v2365
      %v2388 = vadd.f32 %v2139, %v2368
      %v2389 = vld [vmem:[#allocation2 + $0x10] sm:$0x8]
      %s2390 = scalar_lea.vmem %s3, 16
      %v2391 = vld [vmem:[%s2390] sm:$0x3]
      %v2393 = vunpack.c.l.b16 %v2389
      %v2394 = vpack.c.b16 %v1940, %v2393
      %vm2395 = vcmask 1044480
      %v2396 = vrot.slane %v2394, 3
      %v2397 = vrot.slane %v1959, 3
      %v2398 = vsel %vm2395, %v2396, %v2397
      %v2399 = vrot.slane %v1960, 3
      %v2400 = vsel %vm2395, %v2397, %v2399
      %v2401 = vrot.slane %v1961, 3
      %v2402 = vsel %vm2395, %v2399, %v2401
      %v2403 = vrot.slane %v1962, 3
      %v2404 = vsel %vm2395, %v2401, %v2403
      %v2405 = vrot.slane %v1963, 3
      %v2406 = vsel %vm2395, %v2403, %v2405
      %v2407 = vrot.slane %v1964, 3
      %v2408 = vsel %vm2395, %v2405, %v2407
      %v2409 = vrot.slane %v1965, 3
      %v2410 = vsel %vm2395, %v2407, %v2409
      %v2411 = vrot.slane %v1966, 3
      %v2412 = vsel %vm2395, %v2409, %v2411
      %v2413 = vrot.slane %v2145, 3
      %v2414 = vsel %vm2395, %v2411, %v2413
      %v2416 = vsel %vm788, %v2398, 0
      %v2419 = vsel %vm788, %v2400, 0
      %v2422 = vsel %vm788, %v2402, 0
      %v2425 = vsel %vm788, %v2404, 0
      %v2428 = vsel %vm788, %v2406, 0
      %v2431 = vsel %vm788, %v2408, 0
      %v2434 = vsel %vm788, %v2410, 0
      %v2437 = vsel %vm788, %v2412, 0
      %v2440 = vsel %vm788, %v2414, 0
      %v2443 = vsel %vm816, %v2391, 0
      %2445 = vmatprep.subr.bf16.mxu0 0
      %2446 = vmatpush1.bf16.msra.mxu0 %v2443
      %2447 = vmatprep.subr.bf16.mxu0 0
      %2448 = vmatpush1.bf16.msra.mxu0 0
      %2449 = vmatprep.subr.bf16.mxu0 0
      %2450 = vmatpush1.bf16.msra.mxu0 0
      %2451 = vmatprep.subr.bf16.mxu0 0
      %2452 = vmatpush1.bf16.msra.mxu0 0
      %2453 = vmatprep.subr.bf16.mxu0 0
      %2454 = vmatpush1.bf16.msra.mxu0 0
      %2455 = vmatprep.subr.bf16.mxu0 0
      %2456 = vmatpush1.bf16.msra.mxu0 0
      %2457 = vmatprep.subr.bf16.mxu0 0
      %2458 = vmatpush1.bf16.msra.mxu0 0
      %2459 = vmatprep.subr.bf16.mxu0 0
      %2460 = vmatpush1.bf16.msra.mxu0 0
      %2461 = vmatprep.subr.bf16.mxu0 0
      %2462 = vmatpush1.bf16.msra.mxu0 0
      %2463 = vmatprep.subr.bf16.mxu0 0
      %2464 = vmatpush1.bf16.msra.mxu0 0
      %2465 = vmatprep.subr.bf16.mxu0 0
      %2466 = vmatpush1.bf16.msra.mxu0 0
      %2467 = vmatprep.subr.bf16.mxu0 0
      %2468 = vmatpush1.bf16.msra.mxu0 0
      %2469 = vmatprep.subr.bf16.mxu0 0
      %2470 = vmatpush1.bf16.msra.mxu0 0
      %2471 = vmatprep.subr.bf16.mxu0 0
      %2472 = vmatpush1.bf16.msra.mxu0 0
      %2473 = vmatprep.subr.bf16.mxu0 0
      %2474 = vmatpush1.bf16.msra.mxu0 0
      %2475 = vmatprep.subr.bf16.mxu0 0
      %2476 = vmatpush1.bf16.msra.mxu0 0
      %2477 = vmatprep.mubr.bf16.mxu0 0
      %2478 = vmatmul.mubr.bf16.gmra.mrb[0].mxu0 %v2416
      %v2479 = vpop.f32.mrb[0].mxu0
      %v2480 = vadd.f32 0.0, %v2479
      %v2481 = vpop.f32.mrb[0].mxu0
      %v2482 = vpop.f32.mrb[0].mxu0
      %v2483 = vadd.f32 0.0, %v2482
      %v2484 = vpop.f32.mrb[0].mxu0
      %2485 = vmatprep.mubr.bf16.mxu0 0
      %2486 = vmatmul.mubr.bf16.gmra.mrb[0].mxu0 %v2419
      %v2487 = vpop.f32.mrb[0].mxu0
      %v2488 = vadd.f32 0.0, %v2487
      %v2489 = vpop.f32.mrb[0].mxu0
      %v2490 = vpop.f32.mrb[0].mxu0
      %v2491 = vadd.f32 0.0, %v2490
      %v2492 = vpop.f32.mrb[0].mxu0
      %2493 = vmatprep.mubr.bf16.mxu0 0
      %2494 = vmatmul.mubr.bf16.gmra.mrb[0].mxu0 %v2422
      %v2495 = vpop.f32.mrb[0].mxu0
      %v2496 = vadd.f32 0.0, %v2495
      %v2497 = vpop.f32.mrb[0].mxu0
      %v2498 = vpop.f32.mrb[0].mxu0
      %v2499 = vadd.f32 0.0, %v2498
      %v2500 = vpop.f32.mrb[0].mxu0
      %2501 = vmatprep.mubr.bf16.mxu0 0
      %2502 = vmatmul.mubr.bf16.gmra.mrb[0].mxu0 %v2425
      %v2503 = vpop.f32.mrb[0].mxu0
      %v2504 = vadd.f32 0.0, %v2503
      %v2505 = vpop.f32.mrb[0].mxu0
      %v2506 = vpop.f32.mrb[0].mxu0
      %v2507 = vadd.f32 0.0, %v2506
      %v2508 = vpop.f32.mrb[0].mxu0
      %2509 = vmatprep.mubr.bf16.mxu0 0
      %2510 = vmatmul.mubr.bf16.gmra.mrb[0].mxu0 %v2428
      %v2511 = vpop.f32.mrb[0].mxu0
      %v2512 = vadd.f32 0.0, %v2511
      %v2513 = vpop.f32.mrb[0].mxu0
      %v2514 = vpop.f32.mrb[0].mxu0
      %v2515 = vadd.f32 0.0, %v2514
      %v2516 = vpop.f32.mrb[0].mxu0
      %2517 = vmatprep.mubr.bf16.mxu0 0
      %2518 = vmatmul.mubr.bf16.gmra.mrb[0].mxu0 %v2431
      %v2519 = vpop.f32.mrb[0].mxu0
      %v2520 = vadd.f32 0.0, %v2519
      %v2521 = vpop.f32.mrb[0].mxu0
      %v2522 = vpop.f32.mrb[0].mxu0
      %v2523 = vadd.f32 0.0, %v2522
      %v2524 = vpop.f32.mrb[0].mxu0
      %2525 = vmatprep.mubr.bf16.mxu0 0
      %2526 = vmatmul.mubr.bf16.gmra.mrb[0].mxu0 %v2434
      %v2527 = vpop.f32.mrb[0].mxu0
      %v2528 = vadd.f32 0.0, %v2527
      %v2529 = vpop.f32.mrb[0].mxu0
      %v2530 = vpop.f32.mrb[0].mxu0
      %v2531 = vadd.f32 0.0, %v2530
      %v2532 = vpop.f32.mrb[0].mxu0
      %2533 = vmatprep.mubr.bf16.mxu0 0
      %2534 = vmatmul.mubr.bf16.gmra.mrb[0].mxu0 %v2437
      %v2535 = vpop.f32.mrb[0].mxu0
      %v2536 = vadd.f32 0.0, %v2535
      %v2537 = vpop.f32.mrb[0].mxu0
      %v2538 = vpop.f32.mrb[0].mxu0
      %v2539 = vadd.f32 0.0, %v2538
      %v2540 = vpop.f32.mrb[0].mxu0
      %2541 = vmatprep.mubr.bf16.mxu0 0
      %2542 = vmatmul.mubr.bf16.gmra.mrb[0].mxu0 %v2440
      %v2543 = vpop.f32.mrb[0].mxu0
      %v2544 = vadd.f32 0.0, %v2543
      %v2545 = vpop.f32.mrb[0].mxu0
      %v2546 = vpop.f32.mrb[0].mxu0
      %v2547 = vadd.f32 0.0, %v2546
      %v2548 = vpop.f32.mrb[0].mxu0
      %2549 = vdwg.mxu0
      %v2550 = vadd.f32 %v2371, %v2480
      %v2551 = vadd.f32 %v2372, %v2483
      %v2552 = vadd.f32 %v2373, %v2488
      %v2553 = vadd.f32 %v2374, %v2491
      %v2554 = vadd.f32 %v2375, %v2496
      %v2555 = vadd.f32 %v2376, %v2499
      %v2556 = vadd.f32 %v2377, %v2504
      %v2557 = vadd.f32 %v2378, %v2507
      %v2558 = vadd.f32 %v2379, %v2512
      %v2559 = vadd.f32 %v2380, %v2515
      %v2560 = vadd.f32 %v2381, %v2520
      %v2561 = vadd.f32 %v2382, %v2523
      %v2562 = vadd.f32 %v2383, %v2528
      %v2563 = vadd.f32 %v2384, %v2531
      %v2564 = vadd.f32 %v2385, %v2536
      %v2565 = vadd.f32 %v2386, %v2539
      %v2566 = vadd.f32 %v2387, %v2544
      %v2567 = vadd.f32 %v2388, %v2547
      %v2568 = vld [vmem:[%s4] sm:$0x1]
      %v2570 = vlaneseq
      %v2571 = vshrl.u32 %v2570, 7
      %v2572 = vsub.s32 0, %v2571
      %v2573 = vrot.slane %v2568, %v2572
      %v2575 = vadd.f32 %v2550, %v2573
      %v2576 = vadd.f32 %v2551, %v2573
      %v2577 = vadd.f32 %v2552, %v2573
      %v2578 = vadd.f32 %v2553, %v2573
      %v2579 = vadd.f32 %v2554, %v2573
      %v2580 = vadd.f32 %v2555, %v2573
      %v2581 = vadd.f32 %v2556, %v2573
      %v2582 = vadd.f32 %v2557, %v2573
      %v2583 = vadd.f32 %v2558, %v2573
      %v2584 = vadd.f32 %v2559, %v2573
      %v2585 = vadd.f32 %v2560, %v2573
      %v2586 = vadd.f32 %v2561, %v2573
      %v2587 = vadd.f32 %v2562, %v2573
      %v2588 = vadd.f32 %v2563, %v2573
      %v2589 = vadd.f32 %v2564, %v2573
      %v2590 = vadd.f32 %v2565, %v2573
      %v2591 = vadd.f32 %v2566, %v2573
      %v2592 = vadd.f32 %v2567, %v2573
      %vm2593 = vcmask 64512
      %2594 = vst.msk [vmem:[%s353] sm:$0xff] %vm2593, %v2575
      %2595 = vst.msk [vmem:[%s353 + $0x8] sm:$0xff] %vm2593, %v2576
      %2596 = vst.msk [vmem:[%s353 + $0x10] sm:$0xff] %vm2593, %v2577
      %2597 = vst.msk [vmem:[%s353 + $0x18] sm:$0xff] %vm2593, %v2578
      %2598 = vst.msk [vmem:[%s353 + $0x20] sm:$0xff] %vm2593, %v2579
      %2599 = vst.msk [vmem:[%s353 + $0x28] sm:$0xff] %vm2593, %v2580
      %2600 = vst.msk [vmem:[%s353 + $0x30] sm:$0xff] %vm2593, %v2581
      %2601 = vst.msk [vmem:[%s353 + $0x38] sm:$0xff] %vm2593, %v2582
      %2602 = vst.msk [vmem:[%s353 + $0x40] sm:$0xff] %vm2593, %v2583
      %2603 = vst.msk [vmem:[%s353 + $0x48] sm:$0xff] %vm2593, %v2584
      %2604 = vst.msk [vmem:[%s353 + $0x50] sm:$0xff] %vm2593, %v2585
      %2605 = vst.msk [vmem:[%s353 + $0x58] sm:$0xff] %vm2593, %v2586
      %2606 = vst.msk [vmem:[%s353 + $0x60] sm:$0xff] %vm2593, %v2587
      %2607 = vst.msk [vmem:[%s353 + $0x68] sm:$0xff] %vm2593, %v2588
      %2608 = vst.msk [vmem:[%s353 + $0x70] sm:$0xff] %vm2593, %v2589
      %2609 = vst.msk [vmem:[%s353 + $0x78] sm:$0xff] %vm2593, %v2590
      %2610 = vst.msk [vmem:[%s353 + $0x80] sm:$0xff] %vm2593, %v2591
      %2611 = vst.msk [vmem:[%s353 + $0x88] sm:$0xff] %vm2593, %v2592
      %s2612 = smul.u32 18, %s22
      %p2613 = scmp.lt.s32.totalorder %s21, 1
      %s2614 = scalar_select %p2613, %s21, 1
      %p2615 = scmp.lt.s32.totalorder %s2612, 35
      %s2616 = scalar_select %p2615, %s2612, 35
      %s2617 = smul.addr %s2614, 36
      %s2618 = sadd.s32 %s2616, %s2617
      %s2619 = smul.addr %s2618, 8
      %s2620 = scalar_lea.vmem %s5, %s2619
      // Predicated region
      $region41: #{conv_bn_quant_forward.3} parent=39 // pred_check
        %p2621 = pneg %p172
      $region42: #{conv_bn_quant_forward.3} parent=39 // pred_check_branch
        %2623 = sbr.rel (%p2621) target = $region44
      $region43: #{conv_bn_quant_forward.3} parent=39 // pred_region
        %s2624 = smul.u32 18, %s22
      $region44: #{conv_bn_quant_forward.3} parent=39 // pred_fallthru
        _
    $region40: #{conv_bn_quant_forward.3} parent=5 // pred_fallthru
      _
    %p2625 = scmp.le.s32.totalorder 2, %s12
    // Predicated region
    $region45: #{conv_bn_quant_forward.3} parent=5 // pred_check
      %p2626 = pneg %p2625
    $region46: #{conv_bn_quant_forward.3} parent=5 // pred_check_branch
      %2628 = sbr.rel (%p2626) target = $region48
    $region47: #{conv_bn_quant_forward.3} parent=5 // pred_region
      %s2629 = ssub.s32 %s12, 2
      // Predicated region
      $region49: #{conv_bn_quant_forward.3} parent=47 // pred_check
        %p2630 = pneg %p178
      $region50: #{conv_bn_quant_forward.3} parent=47 // pred_check_branch
        %2632 = sbr.rel (%p2630) target = $region52
      $region51: #{conv_bn_quant_forward.3} parent=47 // pred_region
        %s2633 = smul.u32 18, %s24
        %p2634 = scmp.lt.s32.totalorder %s23, 1
        %s2635 = scalar_select %p2634, %s23, 1
        %p2636 = scmp.lt.s32.totalorder %s2633, 35
        %s2637 = scalar_select %p2636, %s2633, 35
        %s2638 = smul.addr %s2635, 36
        %s2639 = sadd.s32 %s2637, %s2638
        %s2640 = smul.addr %s2639, 8
        %s2641 = scalar_lea.vmem %s5, %s2640
      $region52: #{conv_bn_quant_forward.3} parent=47 // pred_fallthru
        _
    $region48: #{conv_bn_quant_forward.3} parent=5 // pred_fallthru
      _
  $region6: #{conv_bn_quant_forward.3} parent=0 // loop_footer
    %s16 = sadd.s32 1, %s12
  $region7: #{conv_bn_quant_forward.3} parent=0 // loop_footer_branch
    %11 = sbr.rel target = $region3
  $region8: #{conv_bn_quant_forward.3} parent=0 // loop_exit
    _

// kernel: conv_bn_quant_forward.2
$region0: #{conv_bn_quant_forward.2}
  #allocation0 [shape = 'u32[]', space=smem, size = 0x4, offset = 0x4, fixed_abs, tag = 'smem constant byte address 0x4 - core index']
  #allocation1 [shape = 'u32[144,128]{1,0:T(1,128)}', space=vmem, size = 0x12000, scoped, tag = 'internal scratch']
  #allocation2 [shape = 'bf16[182,4]{1,0:T(8,128)(2,1)}', space=vmem, size = 0xb800, scoped, tag = 'scratch operand']
  %s0 = inlined_call_operand.vmem [shape: f32[2,326,4], index: 0, kind: input, shape index: {}, may-alias: {0,1}]
  %s1 = inlined_call_operand.vmem [shape: f32[2,326,4], index: 1, kind: input, shape index: {}, may-alias: {0,1}]
  %s2 = inlined_call_operand.vmem [shape: bf16[9,4,8], index: 2, kind: input, shape index: {}]
  %s3 = inlined_call_operand.vmem [shape: f32[2,2,2,8], index: 3, kind: output, shape index: {}]
  %s4 = sld [smem:[#allocation0]]
  $region45: #{conv_bn_quant_forward.2} parent=0
    _
  %s6 = ssub.s32 1, %s4
  %s7 = scalar_select 0, %s6, %s4
  loop: start=0, step=1, limit=6
  $region2: #{conv_bn_quant_forward.2} parent=0 // loop_pre_header
    _
  $region3: #{conv_bn_quant_forward.2} parent=0 // loop_header
    %s9 = sphi 0, %s13
    %p10 = scmp.ge.s32.totalorder %s9, 6
    %s16 = sphi 0, %s28
    %s17 = sphi 0, %s24
    %s18 = sphi 0, %s16
    %s19 = sphi 0, %s17
    %s20 = sphi 0, %s18
    %s21 = sphi 0, %s19
    %s33 = sphi 0, %s35
    %s36 = sphi 0, %s33
    %s37 = sphi 0, %s36
    %s53 = sphi 0, %s37
    %s65 = sphi 0, %s67
    %s68 = sphi 0, %s65
    %s69 = sphi 0, %s68
    %s85 = sphi 0, %s69
    %s89 = sphi 0, %s89
    %s91 = sphi 0, %s89
    %s92 = sphi 0, %s91
    %s106 = sphi 0, %s92
    %s114 = sphi 0, %s116
    %s117 = sphi 0, %s114
    %s118 = sphi 0, %s117
    %s134 = sphi 0, %s118
  $region4: #{conv_bn_quant_forward.2} parent=0 // loop_header_branch
    %12 = sbr.rel (%p10) target = $region8
  $region5: #{conv_bn_quant_forward.2} parent=0 // loop_body
    %s14 = ssub.s32 %s9, 1
    %s15 = ssub.s32 %s9, 2
    %s22 = sadd.s32 1, %s17
    %p23 = scmp.ge.s32.totalorder %s22, 2
    %s24 = scalar_select %p23, 0, %s22
    %s25 = sadd.s32 1, %s16
    %s26 = scalar_select %p23, %s25, %s16
    %p27 = scmp.ge.s32.totalorder %s26, 2
    %s28 = scalar_select %p27, 0, %s26
    %s29 = ssub.s32 %s16, %s28
    %s30 = ssub.s32 %s17, %s24
    %s31 = sor.u32 %s29, %s30
    %p32 = scmp.eq.s32.totalorder %s31, 0
    %s34 = sadd.s32 %s33, 1
    %s35 = scalar_select %p32, %s33, %s34
    %p38 = pneg %p32
    %p39 = scmp.eq.s32.totalorder %s9, 3
    %p40 = por %p38, %p39
    %p41 = scmp.ne.s32.totalorder %s33, %s36
    %p42 = scmp.eq.s32.totalorder %s9, 0
    %p43 = por %p41, %p42
    %p44 = scmp.ne.s32.totalorder %s33, %s36
    %p45 = scmp.eq.s32.totalorder %s14, 3
    %p46 = por %p44, %p45
    %p47 = scmp.ne.s32.totalorder %s36, %s37
    %p48 = scmp.eq.s32.totalorder %s14, 0
    %p49 = por %p47, %p48
    %p50 = scmp.ne.s32.totalorder %s36, %s37
    %p51 = scmp.eq.s32.totalorder %s15, 3
    %p52 = por %p50, %p51
    %p54 = scmp.ne.s32.totalorder %s37, %s53
    %p55 = scmp.eq.s32.totalorder %s15, 0
    %p56 = por %p54, %p55
    %s57 = sadd.s32 %s17, 1
    %s58 = smul.u32 %s57, 3
    %s59 = sadd.s32 %s24, 1
    %s60 = smul.u32 %s59, 3
    %s61 = ssub.s32 %s16, %s28
    %s62 = ssub.s32 %s58, %s60
    %s63 = sor.u32 %s61, %s62
    %p64 = scmp.eq.s32.totalorder %s63, 0
    %s66 = sadd.s32 %s65, 1
    %s67 = scalar_select %p64, %s65, %s66
    %p70 = pneg %p64
    %p71 = scmp.eq.s32.totalorder %s9, 3
    %p72 = por %p70, %p71
    %p73 = scmp.ne.s32.totalorder %s65, %s68
    %p74 = scmp.eq.s32.totalorder %s9, 0
    %p75 = por %p73, %p74
    %p76 = scmp.ne.s32.totalorder %s65, %s68
    %p77 = scmp.eq.s32.totalorder %s14, 3
    %p78 = por %p76, %p77
    %p79 = scmp.ne.s32.totalorder %s68, %s69
    %p80 = scmp.eq.s32.totalorder %s14, 0
    %p81 = por %p79, %p80
    %p82 = scmp.ne.s32.totalorder %s68, %s69
    %p83 = scmp.eq.s32.totalorder %s15, 3
    %p84 = por %p82, %p83
    %p86 = scmp.ne.s32.totalorder %s69, %s85
    %p87 = scmp.eq.s32.totalorder %s15, 0
    %p88 = por %p86, %p87
    %s90 = sadd.s32 %s89, 1
    %p93 = scmp.eq.s32.totalorder %s9, 3
    %p94 = scmp.ne.s32.totalorder %s89, %s91
    %p95 = scmp.eq.s32.totalorder %s9, 0
    %p96 = por %p94, %p95
    %p97 = scmp.ne.s32.totalorder %s89, %s91
    %p98 = scmp.eq.s32.totalorder %s14, 3
    %p99 = por %p97, %p98
    %p100 = scmp.ne.s32.totalorder %s91, %s92
    %p101 = scmp.eq.s32.totalorder %s14, 0
    %p102 = por %p100, %p101
    %p103 = scmp.ne.s32.totalorder %s91, %s92
    %p104 = scmp.eq.s32.totalorder %s15, 3
    %p105 = por %p103, %p104
    %p107 = scmp.ne.s32.totalorder %s92, %s106
    %p108 = scmp.eq.s32.totalorder %s15, 0
    %p109 = por %p107, %p108
    %s110 = ssub.s32 %s16, %s28
    %s111 = ssub.s32 %s17, %s24
    %s112 = sor.u32 %s110, %s111
    %p113 = scmp.eq.s32.totalorder %s112, 0
    %s115 = sadd.s32 %s114, 1
    %s116 = scalar_select %p113, %s114, %s115
    %p119 = pneg %p113
    %p120 = scmp.eq.s32.totalorder %s9, 3
    %p121 = por %p119, %p120
    %p122 = scmp.ne.s32.totalorder %s114, %s117
    %p123 = scmp.eq.s32.totalorder %s9, 0
    %p124 = por %p122, %p123
    %p125 = scmp.ne.s32.totalorder %s114, %s117
    %p126 = scmp.eq.s32.totalorder %s14, 3
    %p127 = por %p125, %p126
    %p128 = scmp.ne.s32.totalorder %s117, %s118
    %p129 = scmp.eq.s32.totalorder %s14, 0
    %p130 = por %p128, %p129
    %p131 = scmp.ne.s32.totalorder %s117, %s118
    %p132 = scmp.eq.s32.totalorder %s15, 3
    %p133 = por %p131, %p132
    %p135 = scmp.ne.s32.totalorder %s118, %s134
    %p136 = scmp.eq.s32.totalorder %s15, 0
    %p137 = por %p135, %p136
    %p138 = scmp.le.s32.totalorder 1, %s9
    %p139 = scmp.lt.s32.totalorder %s9, 5
    %p140 = pnand %p138, %p139
    %p141 = pneg %p140
    // Predicated region
    $region9: #{conv_bn_quant_forward.2} parent=5 // pred_check
      _
    $region10: #{conv_bn_quant_forward.2} parent=5 // pred_check_branch
      %143 = sbr.rel (%p140) target = $region12
    $region11: #{conv_bn_quant_forward.2} parent=5 // pred_region
      %s144 = ssub.s32 %s9, 1
      // Predicated region
      $region13: #{conv_bn_quant_forward.2} parent=11 // pred_check
        %p145 = pneg %p102
      $region14: #{conv_bn_quant_forward.2} parent=11 // pred_check_branch
        %147 = sbr.rel (%p145) target = $region16
      $region15: #{conv_bn_quant_forward.2} parent=11 // pred_region
        _
      $region16: #{conv_bn_quant_forward.2} parent=11 // pred_fallthru
        _
    $region12: #{conv_bn_quant_forward.2} parent=5 // pred_fallthru
      _
    %p148 = scmp.lt.s32.totalorder %s9, 4
    // Predicated region
    $region17: #{conv_bn_quant_forward.2} parent=5 // pred_check
      %p149 = pneg %p148
    $region18: #{conv_bn_quant_forward.2} parent=5 // pred_check_branch
      %151 = sbr.rel (%p149) target = $region20
    $region19: #{conv_bn_quant_forward.2} parent=5 // pred_region
      // Predicated region
      $region21: #{conv_bn_quant_forward.2} parent=19 // pred_check
        %p152 = pneg %p43
      $region22: #{conv_bn_quant_forward.2} parent=19 // pred_check_branch
        %154 = sbr.rel (%p152) target = $region24
      $region23: #{conv_bn_quant_forward.2} parent=19 // pred_region
        %s155 = smul.u32 18, %s17
        %s156 = ssub.s32 41, %s155
        %p157 = scmp.lt.s32.totalorder %s156, 18
        %s158 = scalar_select %p157, %s156, 18
        %s159 = smul.u32 128, %s158
        %p160 = scmp.lt.s32.totalorder %s16, 1
        %s161 = scalar_select %p160, %s16, 1
        %p162 = scmp.lt.s32.totalorder %s155, 40
        %s163 = scalar_select %p162, %s155, 40
        %s164 = smul.addr %s161, 41
        %s165 = sadd.s32 %s163, %s164
        %s166 = smul.addr %s165, 8
        %s167 = scalar_lea.vmem %s0, %s166
        %s168 = smul.u32 18, %s17
        %s169 = ssub.s32 41, %s168
        %p170 = scmp.lt.s32.totalorder %s169, 18
        %s171 = scalar_select %p170, %s169, 18
        %s172 = smul.u32 128, %s171
      $region24: #{conv_bn_quant_forward.2} parent=19 // pred_fallthru
        _
      // Predicated region
      $region25: #{conv_bn_quant_forward.2} parent=19 // pred_check
        %p173 = pneg %p75
      $region26: #{conv_bn_quant_forward.2} parent=19 // pred_check_branch
        %175 = sbr.rel (%p173) target = $region28
      $region27: #{conv_bn_quant_forward.2} parent=19 // pred_region
        %s176 = sadd.s32 %s17, 1
        %s177 = smul.u32 %s176, 3
        %s178 = smul.u32 6, %s177
        %s179 = ssub.s32 41, %s178
        %p180 = scmp.lt.s32.totalorder %s179, 6
        %s181 = scalar_select %p180, %s179, 6
        %s182 = smul.u32 128, %s181
        %p183 = scmp.lt.s32.totalorder %s16, 1
        %s184 = scalar_select %p183, %s16, 1
        %p185 = scmp.lt.s32.totalorder %s178, 40
        %s186 = scalar_select %p185, %s178, 40
        %s187 = smul.addr %s184, 41
        %s188 = sadd.s32 %s186, %s187
        %s189 = smul.addr %s188, 8
        %s190 = scalar_lea.vmem %s1, %s189
        %s191 = sadd.s32 %s17, 1
        %s192 = smul.u32 %s191, 3
        %s193 = smul.u32 6, %s192
        %s194 = ssub.s32 41, %s193
        %p195 = scmp.lt.s32.totalorder %s194, 6
        %s196 = scalar_select %p195, %s194, 6
        %s197 = smul.u32 128, %s196
      $region28: #{conv_bn_quant_forward.2} parent=19 // pred_fallthru
        _
    $region20: #{conv_bn_quant_forward.2} parent=5 // pred_fallthru
      _
    %p198 = scmp.le.s32.totalorder 1, %s9
    %p199 = scmp.lt.s32.totalorder %s9, 5
    %p200 = pnand %p198, %p199
    %p201 = pneg %p200
    // Predicated region
    $region29: #{conv_bn_quant_forward.2} parent=5 // pred_check
      _
    $region30: #{conv_bn_quant_forward.2} parent=5 // pred_check_branch
      %203 = sbr.rel (%p200) target = $region32
    $region31: #{conv_bn_quant_forward.2} parent=5 // pred_region
      %s204 = ssub.s32 %s9, 1
      %s205 = smul.u32 18, %s19
      %s206 = ssub.s32 41, %s205
      %p207 = scmp.lt.s32.totalorder %s206, 18
      %s208 = scalar_select %p207, %s206, 18
      %s209 = smul.u32 128, %s208
      %p210 = scmp.lt.s32.totalorder %s18, 1
      %s211 = scalar_select %p210, %s18, 1
      %p212 = scmp.lt.s32.totalorder %s205, 40
      %s213 = scalar_select %p212, %s205, 40
      %s214 = smul.addr %s211, 41
      %s215 = sadd.s32 %s213, %s214
      %s216 = smul.addr %s215, 8
      %s217 = scalar_lea.vmem %s0, %s216
      %p218 = pneg %p49
      %p219 = pneg %p46
      %s220 = sadd.s32 %s19, 1
      %s221 = smul.u32 %s220, 3
      %s222 = smul.u32 6, %s221
      %s223 = ssub.s32 41, %s222
      %p224 = scmp.lt.s32.totalorder %s223, 6
      %s225 = scalar_select %p224, %s223, 6
      %s226 = smul.u32 128, %s225
      %p227 = scmp.lt.s32.totalorder %s18, 1
      %s228 = scalar_select %p227, %s18, 1
      %p229 = scmp.lt.s32.totalorder %s222, 40
      %s230 = scalar_select %p229, %s222, 40
      %s231 = smul.addr %s228, 41
      %s232 = sadd.s32 %s230, %s231
      %s233 = smul.addr %s232, 8
      %s234 = scalar_lea.vmem %s1, %s233
      %p235 = pneg %p81
      %p236 = pneg %p78
      %p237 = pneg %p102
      %p238 = pneg %p99
      %p239 = pneg %p130
      %p240 = pneg %p127
      %p241 = scmp.lt.s32.totalorder %s18, 1
      %s242 = scalar_select %p241, %s18, 1
      %p243 = scmp.lt.s32.totalorder %s19, 1
      %s244 = scalar_select %p243, %s19, 1
      %s245 = smul.addr %s242, 2
      %s246 = sadd.s32 %s244, %s245
      %s247 = smul.addr %s246, 2
      %s248 = scalar_lea.vmem %s3, %s247
      %s249 = smul.u32 18, %s19
      %s250 = ssub.s32 41, %s249
      %p251 = scmp.lt.s32.totalorder %s250, 18
      %s252 = scalar_select %p251, %s250, 18
      %s253 = smul.u32 128, %s252
      %p254 = scmp.lt.s32.totalorder %s18, 1
      %s255 = scalar_select %p254, %s18, 1
      %p256 = scmp.lt.s32.totalorder %s249, 40
      %s257 = scalar_select %p256, %s249, 40
      %s258 = smul.addr %s255, 41
      %s259 = sadd.s32 %s257, %s258
      %s260 = smul.addr %s259, 8
      %s261 = scalar_lea.vmem %s0, %s260
      %s262 = smul.u32 18, %s19
      %s263 = ssub.s32 41, %s262
      %p264 = scmp.lt.s32.totalorder %s263, 18
      %s265 = scalar_select %p264, %s263, 18
      %s266 = smul.u32 128, %s265
      %s267 = sadd.s32 %s19, 1
      %s268 = smul.u32 %s267, 3
      %s269 = smul.u32 6, %s268
      %s270 = ssub.s32 41, %s269
      %p271 = scmp.lt.s32.totalorder %s270, 6
      %s272 = scalar_select %p271, %s270, 6
      %s273 = smul.u32 128, %s272
      %p274 = scmp.lt.s32.totalorder %s18, 1
      %s275 = scalar_select %p274, %s18, 1
      %p276 = scmp.lt.s32.totalorder %s269, 40
      %s277 = scalar_select %p276, %s269, 40
      %s278 = smul.addr %s275, 41
      %s279 = sadd.s32 %s277, %s278
      %s280 = smul.addr %s279, 8
      %s281 = scalar_lea.vmem %s1, %s280
      %s282 = sadd.s32 %s19, 1
      %s283 = smul.u32 %s282, 3
      %s284 = smul.u32 6, %s283
      %s285 = ssub.s32 41, %s284
      %p286 = scmp.lt.s32.totalorder %s285, 6
      %s287 = scalar_select %p286, %s285, 6
      %s288 = smul.u32 128, %s287
      %p289 = scmp.lt.s32.totalorder %s18, 1
      %s290 = scalar_select %p289, %s18, 1
      %p291 = scmp.lt.s32.totalorder %s19, 1
      %s292 = scalar_select %p291, %s19, 1
      %s293 = smul.addr %s290, 2
      %s294 = sadd.s32 %s292, %s293
      %s295 = smul.addr %s294, 2
      %s296 = scalar_lea.vmem %s3, %s295
      %v298 = vld [vmem:[%s261] sm:$0xff]
      %v299 = vld [vmem:[%s261 + $0x8] sm:$0xff]
      %v300 = vld [vmem:[%s261 + $0x10] sm:$0xff]
      %v301 = vld [vmem:[%s261 + $0x18] sm:$0xff]
      %v302 = vld [vmem:[%s261 + $0x20] sm:$0xff]
      %v303 = vld [vmem:[%s261 + $0x28] sm:$0xff]
      %v304 = vld [vmem:[%s261 + $0x30] sm:$0xff]
      %v305 = vld [vmem:[%s261 + $0x38] sm:$0xff]
      %v306 = vld [vmem:[%s261 + $0x40] sm:$0xff]
      %v307 = vld [vmem:[%s261 + $0x48] sm:$0xff]
      %v308 = vld [vmem:[%s261 + $0x50] sm:$0xff]
      %v309 = vld [vmem:[%s261 + $0x58] sm:$0xff]
      %v310 = vld [vmem:[%s261 + $0x60] sm:$0xff]
      %v311 = vld [vmem:[%s261 + $0x68] sm:$0xff]
      %v312 = vld [vmem:[%s261 + $0x70] sm:$0xff]
      %v313 = vld [vmem:[%s261 + $0x78] sm:$0xff]
      %v314 = vld [vmem:[%s261 + $0x80] sm:$0xff]
      %v315 = vld [vmem:[%s261 + $0x88] sm:$0xff]
      %v316 = vld [vmem:[%s281] sm:$0xff]
      %v317 = vld [vmem:[%s281 + $0x8] sm:$0xff]
      %v318 = vld [vmem:[%s281 + $0x10] sm:$0xff]
      %v319 = vld [vmem:[%s281 + $0x18] sm:$0xff]
      %v320 = vld [vmem:[%s281 + $0x20] sm:$0xff]
      %v321 = vpack.c.bf16 %v299, %v298
      %v322 = vpack.c.bf16 %v301, %v300
      %v323 = vpack.c.bf16 %v303, %v302
      %v324 = vpack.c.bf16 %v305, %v304
      %v325 = vpack.c.bf16 %v307, %v306
      %v326 = vpack.c.bf16 %v309, %v308
      %v327 = vpack.c.bf16 %v311, %v310
      %v328 = vpack.c.bf16 %v313, %v312
      %v329 = vpack.c.bf16 %v315, %v314
      %v339 = vunpack.c.l.b16 %v321
      %v340 = vunpack.c.h.b16 %v321
      %v341 = vunpack.c.l.b16 %v322
      %v342 = vunpack.c.h.b16 %v322
      %v343 = vunpack.c.l.b16 %v323
      %v344 = vunpack.c.h.b16 %v323
      %v345 = vunpack.c.l.b16 %v324
      %v346 = vunpack.c.h.b16 %v324
      %v347 = vunpack.c.l.b16 %v325
      %v348 = vunpack.c.h.b16 %v325
      %v349 = vunpack.c.l.b16 %v326
      %v350 = vunpack.c.h.b16 %v326
      %v351 = vunpack.c.l.b16 %v327
      %v352 = vunpack.c.h.b16 %v327
      %v353 = vunpack.c.l.b16 %v328
      %v354 = vunpack.c.h.b16 %v328
      %v355 = vunpack.c.l.b16 %v329
      %v356 = vunpack.c.h.b16 %v329
      %v357 = vpack.c.b16 %v339, %v339
      %v358 = vpack.c.b16 %v340, %v340
      %v359 = vpack.c.b16 %v341, %v341
      %v360 = vpack.c.b16 %v342, %v342
      %v361 = vpack.c.b16 %v343, %v343
      %v362 = vpack.c.b16 %v344, %v344
      %v363 = vpack.c.b16 %v345, %v345
      %v364 = vpack.c.b16 %v346, %v346
      %v365 = vpack.c.b16 %v347, %v347
      %v366 = vpack.c.b16 %v348, %v348
      %v367 = vpack.c.b16 %v349, %v349
      %v368 = vpack.c.b16 %v350, %v350
      %v369 = vpack.c.b16 %v351, %v351
      %v370 = vpack.c.b16 %v352, %v352
      %v371 = vpack.c.b16 %v353, %v353
      %v372 = vpack.c.b16 %v354, %v354
      %v373 = vpack.c.b16 %v355, %v355
      %v374 = vpack.c.b16 %v356, %v356
      %vm393 = vcmask 27648
      %394 = vst.msk [vmem:[#allocation2] sm:$0xf] %vm393, %v357
      %395 = vst.msk [vmem:[#allocation2 + $0x4] sm:$0xf] %vm393, %v358
      %396 = vst.msk [vmem:[#allocation2 + $0x8] sm:$0xf] %vm393, %v359
      %397 = vst.msk [vmem:[#allocation2 + $0xc] sm:$0xf] %vm393, %v360
      %398 = vst.msk [vmem:[#allocation2 + $0x10] sm:$0xf] %vm393, %v361
      %399 = vst.msk [vmem:[#allocation2 + $0x14] sm:$0xf] %vm393, %v362
      %400 = vst.msk [vmem:[#allocation2 + $0x18] sm:$0xf] %vm393, %v363
      %401 = vst.msk [vmem:[#allocation2 + $0x1c] sm:$0xf] %vm393, %v364
      %402 = vst.msk [vmem:[#allocation2 + $0x20] sm:$0xf] %vm393, %v365
      %403 = vst.msk [vmem:[#allocation2 + $0x24] sm:$0xf] %vm393, %v366
      %404 = vst.msk [vmem:[#allocation2 + $0x28] sm:$0xf] %vm393, %v367
      %405 = vst.msk [vmem:[#allocation2 + $0x2c] sm:$0xf] %vm393, %v368
      %406 = vst.msk [vmem:[#allocation2 + $0x30] sm:$0xf] %vm393, %v369
      %407 = vst.msk [vmem:[#allocation2 + $0x34] sm:$0xf] %vm393, %v370
      %408 = vst.msk [vmem:[#allocation2 + $0x38] sm:$0xf] %vm393, %v371
      %409 = vst.msk [vmem:[#allocation2 + $0x3c] sm:$0xf] %vm393, %v372
      %410 = vst.msk [vmem:[#allocation2 + $0x40] sm:$0xf] %vm393, %v373
      %411 = vst.msk [vmem:[#allocation2 + $0x44] sm:$0xf] %vm393, %v374
      %v412 = vpack.c.bf16 %v317, %v316
      %v413 = vpack.c.bf16 %v319, %v318
      %v414 = vpack.c.bf16 %v320, %v320
      %v418 = vunpack.c.l.b16 %v412
      %v419 = vunpack.c.h.b16 %v412
      %v420 = vunpack.c.l.b16 %v413
      %v421 = vunpack.c.h.b16 %v413
      %v422 = vunpack.c.l.b16 %v414
      %v423 = vpack.c.b16 %v418, %v418
      %v424 = vpack.c.b16 %v419, %v419
      %v425 = vpack.c.b16 %v420, %v420
      %v426 = vpack.c.b16 %v421, %v421
      %v427 = vpack.c.b16 %v422, %v422
      %433 = vst.msk [vmem:[#allocation2 + $0x48] sm:$0xf] %vm393, %v423
      %434 = vst.msk [vmem:[#allocation2 + $0x4c] sm:$0xf] %vm393, %v424
      %435 = vst.msk [vmem:[#allocation2 + $0x50] sm:$0xf] %vm393, %v425
      %436 = vst.msk [vmem:[#allocation2 + $0x54] sm:$0xf] %vm393, %v426
      %vm437 = vcmask 26624
      %438 = vst.msk [vmem:[#allocation2 + $0x58] sm:$0x7] %vm437, %v427
      %v439 = vld [vmem:[#allocation2] sm:$0xf]
      %v440 = vld [vmem:[#allocation2 + $0x4] sm:$0xf]
      %v441 = vld [vmem:[#allocation2 + $0x8] sm:$0xf]
      %v442 = vld [vmem:[#allocation2 + $0xc] sm:$0xf]
      %v443 = vld [vmem:[#allocation2 + $0x10] sm:$0xf]
      %v444 = vld [vmem:[#allocation2 + $0x14] sm:$0xf]
      %v445 = vld [vmem:[#allocation2 + $0x18] sm:$0xf]
      %v446 = vld [vmem:[#allocation2 + $0x1c] sm:$0xf]
      %v447 = vld [vmem:[#allocation2 + $0x20] sm:$0xf]
      %v448 = vld [vmem:[#allocation2 + $0x24] sm:$0xf]
      %v449 = vld [vmem:[#allocation2 + $0x28] sm:$0xf]
      %v450 = vld [vmem:[#allocation2 + $0x2c] sm:$0xf]
      %v451 = vld [vmem:[#allocation2 + $0x30] sm:$0xf]
      %v452 = vld [vmem:[#allocation2 + $0x34] sm:$0xf]
      %v453 = vld [vmem:[#allocation2 + $0x38] sm:$0xf]
      %v454 = vld [vmem:[#allocation2 + $0x3c] sm:$0xf]
      %v455 = vld [vmem:[#allocation2 + $0x40] sm:$0xf]
      %v456 = vld [vmem:[#allocation2 + $0x44] sm:$0xf]
      %v457 = vld [vmem:[%s2] sm:$0x3]
      %v458 = vld [vmem:[#allocation2 + $0x48] sm:$0x1]
      %s459 = scalar_lea.vmem %s2, 2
      %v460 = vld [vmem:[%s459] sm:$0x3]
      %v480 = vunpack.c.l.b16 %v439
      %v481 = vunpack.c.l.b16 %v440
      %v482 = vunpack.c.l.b16 %v441
      %v483 = vunpack.c.l.b16 %v442
      %v484 = vunpack.c.l.b16 %v443
      %v485 = vunpack.c.l.b16 %v444
      %v486 = vunpack.c.l.b16 %v445
      %v487 = vunpack.c.l.b16 %v446
      %v488 = vunpack.c.l.b16 %v447
      %v489 = vunpack.c.l.b16 %v448
      %v490 = vunpack.c.l.b16 %v449
      %v491 = vunpack.c.l.b16 %v450
      %v492 = vunpack.c.l.b16 %v451
      %v493 = vunpack.c.l.b16 %v452
      %v494 = vunpack.c.l.b16 %v453
      %v495 = vunpack.c.l.b16 %v454
      %v496 = vunpack.c.l.b16 %v455
      %v497 = vunpack.c.l.b16 %v456
      %v498 = vunpack.c.l.b16 %v458
      %v499 = vpack.c.b16 %v481, %v480
      %v500 = vpack.c.b16 %v483, %v482
      %v501 = vpack.c.b16 %v485, %v484
      %v502 = vpack.c.b16 %v487, %v486
      %v503 = vpack.c.b16 %v489, %v488
      %v504 = vpack.c.b16 %v491, %v490
      %v505 = vpack.c.b16 %v493, %v492
      %v506 = vpack.c.b16 %v495, %v494
      %v507 = vpack.c.b16 %v497, %v496
      %v508 = vpack.c.b16 %v498, %v498
      %vm509 = vsmask.f32 7424
      %v511 = vshrl.u32 %v499, 16
      %v513 = vshll.u32 %v499, 16
      %v515 = vrot.slane %v513, 1
      %v516 = vor.u32 %v511, %v515
      %v518 = vshll.u32 %v500, 16
      %v520 = vrot.slane %v518, 1
      %v521 = vsel %vm509, %v516, %v520
      %v522 = vshrl.u32 %v500, 16
      %v524 = vor.u32 %v522, %v520
      %v526 = vshll.u32 %v501, 16
      %v528 = vrot.slane %v526, 1
      %v529 = vsel %vm509, %v524, %v528
      %v530 = vshrl.u32 %v501, 16
      %v532 = vor.u32 %v530, %v528
      %v534 = vshll.u32 %v502, 16
      %v536 = vrot.slane %v534, 1
      %v537 = vsel %vm509, %v532, %v536
      %v538 = vshrl.u32 %v502, 16
      %v540 = vor.u32 %v538, %v536
      %v542 = vshll.u32 %v503, 16
      %v544 = vrot.slane %v542, 1
      %v545 = vsel %vm509, %v540, %v544
      %v546 = vshrl.u32 %v503, 16
      %v548 = vor.u32 %v546, %v544
      %v550 = vshll.u32 %v504, 16
      %v552 = vrot.slane %v550, 1
      %v553 = vsel %vm509, %v548, %v552
      %v554 = vshrl.u32 %v504, 16
      %v556 = vor.u32 %v554, %v552
      %v558 = vshll.u32 %v505, 16
      %v560 = vrot.slane %v558, 1
      %v561 = vsel %vm509, %v556, %v560
      %v562 = vshrl.u32 %v505, 16
      %v564 = vor.u32 %v562, %v560
      %v566 = vshll.u32 %v506, 16
      %v568 = vrot.slane %v566, 1
      %v569 = vsel %vm509, %v564, %v568
      %v570 = vshrl.u32 %v506, 16
      %v572 = vor.u32 %v570, %v568
      %v574 = vshll.u32 %v507, 16
      %v576 = vrot.slane %v574, 1
      %v577 = vsel %vm509, %v572, %v576
      %v578 = vshrl.u32 %v507, 16
      %v580 = vor.u32 %v578, %v576
      %v582 = vshll.u32 %v508, 16
      %v584 = vrot.slane %v582, 1
      %v585 = vsel %vm509, %v580, %v584
      %vm586 = vcmask 31744
      %v588 = vsel %vm586, %v521, 0
      %v591 = vsel %vm586, %v529, 0
      %v594 = vsel %vm586, %v537, 0
      %v597 = vsel %vm586, %v545, 0
      %v600 = vsel %vm586, %v553, 0
      %v603 = vsel %vm586, %v561, 0
      %v606 = vsel %vm586, %v569, 0
      %v609 = vsel %vm586, %v577, 0
      %v612 = vsel %vm586, %v585, 0
      %vm614 = vcmask 1041408
      %v616 = vsel %vm614, %v460, 0
      %618 = vmatprep.subr.bf16.mxu0 0
      %619 = vmatpush1.bf16.msra.mxu0 %v616
      %620 = vmatprep.subr.bf16.mxu0 0
      %621 = vmatpush1.bf16.msra.mxu0 0
      %622 = vmatprep.subr.bf16.mxu0 0
      %623 = vmatpush1.bf16.msra.mxu0 0
      %624 = vmatprep.subr.bf16.mxu0 0
      %625 = vmatpush1.bf16.msra.mxu0 0
      %626 = vmatprep.subr.bf16.mxu0 0
      %627 = vmatpush1.bf16.msra.mxu0 0
      %628 = vmatprep.subr.bf16.mxu0 0
      %629 = vmatpush1.bf16.msra.mxu0 0
      %630 = vmatprep.subr.bf16.mxu0 0
      %631 = vmatpush1.bf16.msra.mxu0 0
      %632 = vmatprep.subr.bf16.mxu0 0
      %633 = vmatpush1.bf16.msra.mxu0 0
      %634 = vmatprep.subr.bf16.mxu0 0
      %635 = vmatpush1.bf16.msra.mxu0 0
      %636 = vmatprep.subr.bf16.mxu0 0
      %637 = vmatpush1.bf16.msra.mxu0 0
      %638 = vmatprep.subr.bf16.mxu0 0
      %639 = vmatpush1.bf16.msra.mxu0 0
      %640 = vmatprep.subr.bf16.mxu0 0
      %641 = vmatpush1.bf16.msra.mxu0 0
      %642 = vmatprep.subr.bf16.mxu0 0
      %643 = vmatpush1.bf16.msra.mxu0 0
      %644 = vmatprep.subr.bf16.mxu0 0
      %645 = vmatpush1.bf16.msra.mxu0 0
      %646 = vmatprep.subr.bf16.mxu0 0
      %647 = vmatpush1.bf16.msra.mxu0 0
      %648 = vmatprep.subr.bf16.mxu0 0
      %649 = vmatpush1.bf16.msra.mxu0 0
      %650 = vmatprep.mubr.bf16.mxu0 0
      %651 = vmatmul.mubr.bf16.gmra.mrb[0].mxu0 %v588
      %v652 = vpop.f32.mrb[0].mxu0
      %v653 = vadd.f32 0.0, %v652
      %v654 = vpop.f32.mrb[0].mxu0
      %v655 = vpop.f32.mrb[0].mxu0
      %v656 = vadd.f32 0.0, %v655
      %v657 = vpop.f32.mrb[0].mxu0
      %658 = vmatprep.mubr.bf16.mxu0 0
      %659 = vmatmul.mubr.bf16.gmra.mrb[0].mxu0 %v591
      %v660 = vpop.f32.mrb[0].mxu0
      %v661 = vadd.f32 0.0, %v660
      %v662 = vpop.f32.mrb[0].mxu0
      %v663 = vpop.f32.mrb[0].mxu0
      %v664 = vadd.f32 0.0, %v663
      %v665 = vpop.f32.mrb[0].mxu0
      %666 = vmatprep.mubr.bf16.mxu0 0
      %667 = vmatmul.mubr.bf16.gmra.mrb[0].mxu0 %v594
      %v668 = vpop.f32.mrb[0].mxu0
      %v669 = vadd.f32 0.0, %v668
      %v670 = vpop.f32.mrb[0].mxu0
      %v671 = vpop.f32.mrb[0].mxu0
      %v672 = vadd.f32 0.0, %v671
      %v673 = vpop.f32.mrb[0].mxu0
      %674 = vmatprep.mubr.bf16.mxu0 0
      %675 = vmatmul.mubr.bf16.gmra.mrb[0].mxu0 %v597
      %v676 = vpop.f32.mrb[0].mxu0
      %v677 = vadd.f32 0.0, %v676
      %v678 = vpop.f32.mrb[0].mxu0
      %v679 = vpop.f32.mrb[0].mxu0
      %v680 = vadd.f32 0.0, %v679
      %v681 = vpop.f32.mrb[0].mxu0
      %682 = vmatprep.mubr.bf16.mxu0 0
      %683 = vmatmul.mubr.bf16.gmra.mrb[0].mxu0 %v600
      %v684 = vpop.f32.mrb[0].mxu0
      %v685 = vadd.f32 0.0, %v684
      %v686 = vpop.f32.mrb[0].mxu0
      %v687 = vpop.f32.mrb[0].mxu0
      %v688 = vadd.f32 0.0, %v687
      %v689 = vpop.f32.mrb[0].mxu0
      %690 = vmatprep.mubr.bf16.mxu0 0
      %691 = vmatmul.mubr.bf16.gmra.mrb[0].mxu0 %v603
      %v692 = vpop.f32.mrb[0].mxu0
      %v693 = vadd.f32 0.0, %v692
      %v694 = vpop.f32.mrb[0].mxu0
      %v695 = vpop.f32.mrb[0].mxu0
      %v696 = vadd.f32 0.0, %v695
      %v697 = vpop.f32.mrb[0].mxu0
      %698 = vmatprep.mubr.bf16.mxu0 0
      %699 = vmatmul.mubr.bf16.gmra.mrb[0].mxu0 %v606
      %v700 = vpop.f32.mrb[0].mxu0
      %v701 = vadd.f32 0.0, %v700
      %v702 = vpop.f32.mrb[0].mxu0
      %v703 = vpop.f32.mrb[0].mxu0
      %v704 = vadd.f32 0.0, %v703
      %v705 = vpop.f32.mrb[0].mxu0
      %706 = vmatprep.mubr.bf16.mxu0 0
      %707 = vmatmul.mubr.bf16.gmra.mrb[0].mxu0 %v609
      %v708 = vpop.f32.mrb[0].mxu0
      %v709 = vadd.f32 0.0, %v708
      %v710 = vpop.f32.mrb[0].mxu0
      %v711 = vpop.f32.mrb[0].mxu0
      %v712 = vadd.f32 0.0, %v711
      %v713 = vpop.f32.mrb[0].mxu0
      %714 = vmatprep.mubr.bf16.mxu0 0
      %715 = vmatmul.mubr.bf16.gmra.mrb[0].mxu0 %v612
      %v716 = vpop.f32.mrb[0].mxu0
      %v717 = vadd.f32 0.0, %v716
      %v718 = vpop.f32.mrb[0].mxu0
      %v719 = vpop.f32.mrb[0].mxu0
      %v720 = vadd.f32 0.0, %v719
      %v721 = vpop.f32.mrb[0].mxu0
      %722 = vdwg.mxu0
      %v723 = vsel %vm586, %v499, 0
      %v725 = vsel %vm586, %v500, 0
      %v727 = vsel %vm586, %v501, 0
      %v729 = vsel %vm586, %v502, 0
      %v731 = vsel %vm586, %v503, 0
      %v733 = vsel %vm586, %v504, 0
      %v735 = vsel %vm586, %v505, 0
      %v737 = vsel %vm586, %v506, 0
      %v739 = vsel %vm586, %v507, 0
      %v742 = vsel %vm614, %v457, 0
      %744 = vmatprep.subr.bf16.mxu0 0
      %745 = vmatpush1.bf16.msra.mxu0 %v742
      %746 = vmatprep.subr.bf16.mxu0 0
      %747 = vmatpush1.bf16.msra.mxu0 0
      %748 = vmatprep.subr.bf16.mxu0 0
      %749 = vmatpush1.bf16.msra.mxu0 0
      %750 = vmatprep.subr.bf16.mxu0 0
      %751 = vmatpush1.bf16.msra.mxu0 0
      %752 = vmatprep.subr.bf16.mxu0 0
      %753 = vmatpush1.bf16.msra.mxu0 0
      %754 = vmatprep.subr.bf16.mxu0 0
      %755 = vmatpush1.bf16.msra.mxu0 0
      %756 = vmatprep.subr.bf16.mxu0 0
      %757 = vmatpush1.bf16.msra.mxu0 0
      %758 = vmatprep.subr.bf16.mxu0 0
      %759 = vmatpush1.bf16.msra.mxu0 0
      %760 = vmatprep.subr.bf16.mxu0 0
      %761 = vmatpush1.bf16.msra.mxu0 0
      %762 = vmatprep.subr.bf16.mxu0 0
      %763 = vmatpush1.bf16.msra.mxu0 0
      %764 = vmatprep.subr.bf16.mxu0 0
      %765 = vmatpush1.bf16.msra.mxu0 0
      %766 = vmatprep.subr.bf16.mxu0 0
      %767 = vmatpush1.bf16.msra.mxu0 0
      %768 = vmatprep.subr.bf16.mxu0 0
      %769 = vmatpush1.bf16.msra.mxu0 0
      %770 = vmatprep.subr.bf16.mxu0 0
      %771 = vmatpush1.bf16.msra.mxu0 0
      %772 = vmatprep.subr.bf16.mxu0 0
      %773 = vmatpush1.bf16.msra.mxu0 0
      %774 = vmatprep.subr.bf16.mxu0 0
      %775 = vmatpush1.bf16.msra.mxu0 0
      %776 = vmatprep.mubr.bf16.mxu0 0
      %777 = vmatmul.mubr.bf16.gmra.mrb[0].mxu0 %v723
      %v778 = vpop.f32.mrb[0].mxu0
      %v779 = vadd.f32 %v653, %v778
      %v780 = vpop.f32.mrb[0].mxu0
      %v781 = vpop.f32.mrb[0].mxu0
      %v782 = vadd.f32 %v656, %v781
      %v783 = vpop.f32.mrb[0].mxu0
      %784 = vmatprep.mubr.bf16.mxu0 0
      %785 = vmatmul.mubr.bf16.gmra.mrb[0].mxu0 %v725
      %v786 = vpop.f32.mrb[0].mxu0
      %v787 = vadd.f32 %v661, %v786
      %v788 = vpop.f32.mrb[0].mxu0
      %v789 = vpop.f32.mrb[0].mxu0
      %v790 = vadd.f32 %v664, %v789
      %v791 = vpop.f32.mrb[0].mxu0
      %792 = vmatprep.mubr.bf16.mxu0 0
      %793 = vmatmul.mubr.bf16.gmra.mrb[0].mxu0 %v727
      %v794 = vpop.f32.mrb[0].mxu0
      %v795 = vadd.f32 %v669, %v794
      %v796 = vpop.f32.mrb[0].mxu0
      %v797 = vpop.f32.mrb[0].mxu0
      %v798 = vadd.f32 %v672, %v797
      %v799 = vpop.f32.mrb[0].mxu0
      %800 = vmatprep.mubr.bf16.mxu0 0
      %801 = vmatmul.mubr.bf16.gmra.mrb[0].mxu0 %v729
      %v802 = vpop.f32.mrb[0].mxu0
      %v803 = vadd.f32 %v677, %v802
      %v804 = vpop.f32.mrb[0].mxu0
      %v805 = vpop.f32.mrb[0].mxu0
      %v806 = vadd.f32 %v680, %v805
      %v807 = vpop.f32.mrb[0].mxu0
      %808 = vmatprep.mubr.bf16.mxu0 0
      %809 = vmatmul.mubr.bf16.gmra.mrb[0].mxu0 %v731
      %v810 = vpop.f32.mrb[0].mxu0
      %v811 = vadd.f32 %v685, %v810
      %v812 = vpop.f32.mrb[0].mxu0
      %v813 = vpop.f32.mrb[0].mxu0
      %v814 = vadd.f32 %v688, %v813
      %v815 = vpop.f32.mrb[0].mxu0
      %816 = vmatprep.mubr.bf16.mxu0 0
      %817 = vmatmul.mubr.bf16.gmra.mrb[0].mxu0 %v733
      %v818 = vpop.f32.mrb[0].mxu0
      %v819 = vadd.f32 %v693, %v818
      %v820 = vpop.f32.mrb[0].mxu0
      %v821 = vpop.f32.mrb[0].mxu0
      %v822 = vadd.f32 %v696, %v821
      %v823 = vpop.f32.mrb[0].mxu0
      %824 = vmatprep.mubr.bf16.mxu0 0
      %825 = vmatmul.mubr.bf16.gmra.mrb[0].mxu0 %v735
      %v826 = vpop.f32.mrb[0].mxu0
      %v827 = vadd.f32 %v701, %v826
      %v828 = vpop.f32.mrb[0].mxu0
      %v829 = vpop.f32.mrb[0].mxu0
      %v830 = vadd.f32 %v704, %v829
      %v831 = vpop.f32.mrb[0].mxu0
      %832 = vmatprep.mubr.bf16.mxu0 0
      %833 = vmatmul.mubr.bf16.gmra.mrb[0].mxu0 %v737
      %v834 = vpop.f32.mrb[0].mxu0
      %v835 = vadd.f32 %v709, %v834
      %v836 = vpop.f32.mrb[0].mxu0
      %v837 = vpop.f32.mrb[0].mxu0
      %v838 = vadd.f32 %v712, %v837
      %v839 = vpop.f32.mrb[0].mxu0
      %840 = vmatprep.mubr.bf16.mxu0 0
      %841 = vmatmul.mubr.bf16.gmra.mrb[0].mxu0 %v739
      %v842 = vpop.f32.mrb[0].mxu0
      %v843 = vadd.f32 %v717, %v842
      %v844 = vpop.f32.mrb[0].mxu0
      %v845 = vpop.f32.mrb[0].mxu0
      %v846 = vadd.f32 %v720, %v845
      %v847 = vpop.f32.mrb[0].mxu0
      %848 = vdwg.mxu0
      %v849 = vld [vmem:[#allocation2] sm:$0xe]
      %s850 = scalar_lea.vmem %s2, 4
      %v851 = vld [vmem:[%s850] sm:$0x3]
      %v853 = vunpack.c.l.b16 %v849
      %v854 = vpack.c.b16 %v481, %v853
      %vm855 = vcmask 1046528
      %v856 = vrot.slane %v854, 1
      %v857 = vrot.slane %v500, 1
      %v858 = vsel %vm855, %v856, %v857
      %v859 = vrot.slane %v501, 1
      %v860 = vsel %vm855, %v857, %v859
      %v861 = vrot.slane %v502, 1
      %v862 = vsel %vm855, %v859, %v861
      %v863 = vrot.slane %v503, 1
      %v864 = vsel %vm855, %v861, %v863
      %v865 = vrot.slane %v504, 1
      %v866 = vsel %vm855, %v863, %v865
      %v867 = vrot.slane %v505, 1
      %v868 = vsel %vm855, %v865, %v867
      %v869 = vrot.slane %v506, 1
      %v870 = vsel %vm855, %v867, %v869
      %v871 = vrot.slane %v507, 1
      %v872 = vsel %vm855, %v869, %v871
      %v873 = vrot.slane %v508, 1
      %v874 = vsel %vm855, %v871, %v873
      %v876 = vsel %vm586, %v858, 0
      %v879 = vsel %vm586, %v860, 0
      %v882 = vsel %vm586, %v862, 0
      %v885 = vsel %vm586, %v864, 0
      %v888 = vsel %vm586, %v866, 0
      %v891 = vsel %vm586, %v868, 0
      %v894 = vsel %vm586, %v870, 0
      %v897 = vsel %vm586, %v872, 0
      %v900 = vsel %vm586, %v874, 0
      %v903 = vsel %vm614, %v851, 0
      %905 = vmatprep.subr.bf16.mxu0 0
      %906 = vmatpush1.bf16.msra.mxu0 %v903
      %907 = vmatprep.subr.bf16.mxu0 0
      %908 = vmatpush1.bf16.msra.mxu0 0
      %909 = vmatprep.subr.bf16.mxu0 0
      %910 = vmatpush1.bf16.msra.mxu0 0
      %911 = vmatprep.subr.bf16.mxu0 0
      %912 = vmatpush1.bf16.msra.mxu0 0
      %913 = vmatprep.subr.bf16.mxu0 0
      %914 = vmatpush1.bf16.msra.mxu0 0
      %915 = vmatprep.subr.bf16.mxu0 0
      %916 = vmatpush1.bf16.msra.mxu0 0
      %917 = vmatprep.subr.bf16.mxu0 0
      %918 = vmatpush1.bf16.msra.mxu0 0
      %919 = vmatprep.subr.bf16.mxu0 0
      %920 = vmatpush1.bf16.msra.mxu0 0
      %921 = vmatprep.subr.bf16.mxu0 0
      %922 = vmatpush1.bf16.msra.mxu0 0
      %923 = vmatprep.subr.bf16.mxu0 0
      %924 = vmatpush1.bf16.msra.mxu0 0
      %925 = vmatprep.subr.bf16.mxu0 0
      %926 = vmatpush1.bf16.msra.mxu0 0
      %927 = vmatprep.subr.bf16.mxu0 0
      %928 = vmatpush1.bf16.msra.mxu0 0
      %929 = vmatprep.subr.bf16.mxu0 0
      %930 = vmatpush1.bf16.msra.mxu0 0
      %931 = vmatprep.subr.bf16.mxu0 0
      %932 = vmatpush1.bf16.msra.mxu0 0
      %933 = vmatprep.subr.bf16.mxu0 0
      %934 = vmatpush1.bf16.msra.mxu0 0
      %935 = vmatprep.subr.bf16.mxu0 0
      %936 = vmatpush1.bf16.msra.mxu0 0
      %937 = vmatprep.mubr.bf16.mxu0 0
      %938 = vmatmul.mubr.bf16.gmra.mrb[0].mxu0 %v876
      %v939 = vpop.f32.mrb[0].mxu0
      %v940 = vadd.f32 0.0, %v939
      %v941 = vpop.f32.mrb[0].mxu0
      %v942 = vpop.f32.mrb[0].mxu0
      %v943 = vadd.f32 0.0, %v942
      %v944 = vpop.f32.mrb[0].mxu0
      %945 = vmatprep.mubr.bf16.mxu0 0
      %946 = vmatmul.mubr.bf16.gmra.mrb[0].mxu0 %v879
      %v947 = vpop.f32.mrb[0].mxu0
      %v948 = vadd.f32 0.0, %v947
      %v949 = vpop.f32.mrb[0].mxu0
      %v950 = vpop.f32.mrb[0].mxu0
      %v951 = vadd.f32 0.0, %v950
      %v952 = vpop.f32.mrb[0].mxu0
      %953 = vmatprep.mubr.bf16.mxu0 0
      %954 = vmatmul.mubr.bf16.gmra.mrb[0].mxu0 %v882
      %v955 = vpop.f32.mrb[0].mxu0
      %v956 = vadd.f32 0.0, %v955
      %v957 = vpop.f32.mrb[0].mxu0
      %v958 = vpop.f32.mrb[0].mxu0
      %v959 = vadd.f32 0.0, %v958
      %v960 = vpop.f32.mrb[0].mxu0
      %961 = vmatprep.mubr.bf16.mxu0 0
      %962 = vmatmul.mubr.bf16.gmra.mrb[0].mxu0 %v885
      %v963 = vpop.f32.mrb[0].mxu0
      %v964 = vadd.f32 0.0, %v963
      %v965 = vpop.f32.mrb[0].mxu0
      %v966 = vpop.f32.mrb[0].mxu0
      %v967 = vadd.f32 0.0, %v966
      %v968 = vpop.f32.mrb[0].mxu0
      %969 = vmatprep.mubr.bf16.mxu0 0
      %970 = vmatmul.mubr.bf16.gmra.mrb[0].mxu0 %v888
      %v971 = vpop.f32.mrb[0].mxu0
      %v972 = vadd.f32 0.0, %v971
      %v973 = vpop.f32.mrb[0].mxu0
      %v974 = vpop.f32.mrb[0].mxu0
      %v975 = vadd.f32 0.0, %v974
      %v976 = vpop.f32.mrb[0].mxu0
      %977 = vmatprep.mubr.bf16.mxu0 0
      %978 = vmatmul.mubr.bf16.gmra.mrb[0].mxu0 %v891
      %v979 = vpop.f32.mrb[0].mxu0
      %v980 = vadd.f32 0.0, %v979
      %v981 = vpop.f32.mrb[0].mxu0
      %v982 = vpop.f32.mrb[0].mxu0
      %v983 = vadd.f32 0.0, %v982
      %v984 = vpop.f32.mrb[0].mxu0
      %985 = vmatprep.mubr.bf16.mxu0 0
      %986 = vmatmul.mubr.bf16.gmra.mrb[0].mxu0 %v894
      %v987 = vpop.f32.mrb[0].mxu0
      %v988 = vadd.f32 0.0, %v987
      %v989 = vpop.f32.mrb[0].mxu0
      %v990 = vpop.f32.mrb[0].mxu0
      %v991 = vadd.f32 0.0, %v990
      %v992 = vpop.f32.mrb[0].mxu0
      %993 = vmatprep.mubr.bf16.mxu0 0
      %994 = vmatmul.mubr.bf16.gmra.mrb[0].mxu0 %v897
      %v995 = vpop.f32.mrb[0].mxu0
      %v996 = vadd.f32 0.0, %v995
      %v997 = vpop.f32.mrb[0].mxu0
      %v998 = vpop.f32.mrb[0].mxu0
      %v999 = vadd.f32 0.0, %v998
      %v1000 = vpop.f32.mrb[0].mxu0
      %1001 = vmatprep.mubr.bf16.mxu0 0
      %1002 = vmatmul.mubr.bf16.gmra.mrb[0].mxu0 %v900
      %v1003 = vpop.f32.mrb[0].mxu0
      %v1004 = vadd.f32 0.0, %v1003
      %v1005 = vpop.f32.mrb[0].mxu0
      %v1006 = vpop.f32.mrb[0].mxu0
      %v1007 = vadd.f32 0.0, %v1006
      %v1008 = vpop.f32.mrb[0].mxu0
      %1009 = vdwg.mxu0
      %v1010 = vadd.f32 %v779, %v940
      %v1011 = vadd.f32 %v782, %v943
      %v1012 = vadd.f32 %v787, %v948
      %v1013 = vadd.f32 %v790, %v951
      %v1014 = vadd.f32 %v795, %v956
      %v1015 = vadd.f32 %v798, %v959
      %v1016 = vadd.f32 %v803, %v964
      %v1017 = vadd.f32 %v806, %v967
      %v1018 = vadd.f32 %v811, %v972
      %v1019 = vadd.f32 %v814, %v975
      %v1020 = vadd.f32 %v819, %v980
      %v1021 = vadd.f32 %v822, %v983
      %v1022 = vadd.f32 %v827, %v988
      %v1023 = vadd.f32 %v830, %v991
      %v1024 = vadd.f32 %v835, %v996
      %v1025 = vadd.f32 %v838, %v999
      %v1026 = vadd.f32 %v843, %v1004
      %v1027 = vadd.f32 %v846, %v1007
      %v1028 = vld [vmem:[#allocation2 + $0x8] sm:$0xe]
      %v1029 = vld [vmem:[#allocation2 + $0xc] sm:$0xf]
      %v1030 = vld [vmem:[#allocation2 + $0x10] sm:$0xf]
      %v1031 = vld [vmem:[#allocation2 + $0x14] sm:$0xf]
      %v1032 = vld [vmem:[#allocation2 + $0x18] sm:$0xf]
      %v1033 = vld [vmem:[#allocation2 + $0x1c] sm:$0xf]
      %v1034 = vld [vmem:[#allocation2 + $0x20] sm:$0xf]
      %v1035 = vld [vmem:[#allocation2 + $0x24] sm:$0xf]
      %v1036 = vld [vmem:[#allocation2 + $0x28] sm:$0xf]
      %v1037 = vld [vmem:[#allocation2 + $0x2c] sm:$0xf]
      %v1038 = vld [vmem:[#allocation2 + $0x30] sm:$0xf]
      %v1039 = vld [vmem:[#allocation2 + $0x34] sm:$0xf]
      %v1040 = vld [vmem:[#allocation2 + $0x38] sm:$0xf]
      %v1041 = vld [vmem:[#allocation2 + $0x3c] sm:$0xf]
      %v1042 = vld [vmem:[#allocation2 + $0x40] sm:$0xf]
      %v1043 = vld [vmem:[#allocation2 + $0x44] sm:$0xf]
      %v1044 = vld [vmem:[#allocation2 + $0x48] sm:$0xf]
      %v1045 = vld [vmem:[#allocation2 + $0x4c] sm:$0xf]
      %v1046 = vld [vmem:[#allocation2 + $0x50] sm:$0x1]
      %s1047 = scalar_lea.vmem %s2, 6
      %v1048 = vld [vmem:[%s1047] sm:$0x3]
      %v1068 = vunpack.c.l.b16 %v1028
      %v1069 = vunpack.c.l.b16 %v1029
      %v1070 = vunpack.c.l.b16 %v1030
      %v1071 = vunpack.c.l.b16 %v1031
      %v1072 = vunpack.c.l.b16 %v1032
      %v1073 = vunpack.c.l.b16 %v1033
      %v1074 = vunpack.c.l.b16 %v1034
      %v1075 = vunpack.c.l.b16 %v1035
      %v1076 = vunpack.c.l.b16 %v1036
      %v1077 = vunpack.c.l.b16 %v1037
      %v1078 = vunpack.c.l.b16 %v1038
      %v1079 = vunpack.c.l.b16 %v1039
      %v1080 = vunpack.c.l.b16 %v1040
      %v1081 = vunpack.c.l.b16 %v1041
      %v1082 = vunpack.c.l.b16 %v1042
      %v1083 = vunpack.c.l.b16 %v1043
      %v1084 = vunpack.c.l.b16 %v1044
      %v1085 = vunpack.c.l.b16 %v1045
      %v1086 = vunpack.c.l.b16 %v1046
      %v1087 = vpack.c.b16 %v1069, %v1068
      %v1088 = vpack.c.b16 %v1071, %v1070
      %v1089 = vpack.c.b16 %v1073, %v1072
      %v1090 = vpack.c.b16 %v1075, %v1074
      %v1091 = vpack.c.b16 %v1077, %v1076
      %v1092 = vpack.c.b16 %v1079, %v1078
      %v1093 = vpack.c.b16 %v1081, %v1080
      %v1094 = vpack.c.b16 %v1083, %v1082
      %v1095 = vpack.c.b16 %v1085, %v1084
      %v1096 = vpack.c.b16 %v1086, %v1086
      %v1097 = vrot.slane %v1087, 1
      %v1098 = vrot.slane %v1088, 1
      %v1099 = vsel %vm855, %v1097, %v1098
      %v1100 = vrot.slane %v1089, 1
      %v1101 = vsel %vm855, %v1098, %v1100
      %v1102 = vrot.slane %v1090, 1
      %v1103 = vsel %vm855, %v1100, %v1102
      %v1104 = vrot.slane %v1091, 1
      %v1105 = vsel %vm855, %v1102, %v1104
      %v1106 = vrot.slane %v1092, 1
      %v1107 = vsel %vm855, %v1104, %v1106
      %v1108 = vrot.slane %v1093, 1
      %v1109 = vsel %vm855, %v1106, %v1108
      %v1110 = vrot.slane %v1094, 1
      %v1111 = vsel %vm855, %v1108, %v1110
      %v1112 = vrot.slane %v1095, 1
      %v1113 = vsel %vm855, %v1110, %v1112
      %v1114 = vrot.slane %v1096, 1
      %v1115 = vsel %vm855, %v1112, %v1114
      %v1117 = vsel %vm586, %v1099, 0
      %v1120 = vsel %vm586, %v1101, 0
      %v1123 = vsel %vm586, %v1103, 0
      %v1126 = vsel %vm586, %v1105, 0
      %v1129 = vsel %vm586, %v1107, 0
      %v1132 = vsel %vm586, %v1109, 0
      %v1135 = vsel %vm586, %v1111, 0
      %v1138 = vsel %vm586, %v1113, 0
      %v1141 = vsel %vm586, %v1115, 0
      %v1144 = vsel %vm614, %v1048, 0
      %1146 = vmatprep.subr.bf16.mxu0 0
      %1147 = vmatpush1.bf16.msra.mxu0 %v1144
      %1148 = vmatprep.subr.bf16.mxu0 0
      %1149 = vmatpush1.bf16.msra.mxu0 0
      %1150 = vmatprep.subr.bf16.mxu0 0
      %1151 = vmatpush1.bf16.msra.mxu0 0
      %1152 = vmatprep.subr.bf16.mxu0 0
      %1153 = vmatpush1.bf16.msra.mxu0 0
      %1154 = vmatprep.subr.bf16.mxu0 0
      %1155 = vmatpush1.bf16.msra.mxu0 0
      %1156 = vmatprep.subr.bf16.mxu0 0
      %1157 = vmatpush1.bf16.msra.mxu0 0
      %1158 = vmatprep.subr.bf16.mxu0 0
      %1159 = vmatpush1.bf16.msra.mxu0 0
      %1160 = vmatprep.subr.bf16.mxu0 0
      %1161 = vmatpush1.bf16.msra.mxu0 0
      %1162 = vmatprep.subr.bf16.mxu0 0
      %1163 = vmatpush1.bf16.msra.mxu0 0
      %1164 = vmatprep.subr.bf16.mxu0 0
      %1165 = vmatpush1.bf16.msra.mxu0 0
      %1166 = vmatprep.subr.bf16.mxu0 0
      %1167 = vmatpush1.bf16.msra.mxu0 0
      %1168 = vmatprep.subr.bf16.mxu0 0
      %1169 = vmatpush1.bf16.msra.mxu0 0
      %1170 = vmatprep.subr.bf16.mxu0 0
      %1171 = vmatpush1.bf16.msra.mxu0 0
      %1172 = vmatprep.subr.bf16.mxu0 0
      %1173 = vmatpush1.bf16.msra.mxu0 0
      %1174 = vmatprep.subr.bf16.mxu0 0
      %1175 = vmatpush1.bf16.msra.mxu0 0
      %1176 = vmatprep.subr.bf16.mxu0 0
      %1177 = vmatpush1.bf16.msra.mxu0 0
      %1178 = vmatprep.mubr.bf16.mxu0 0
      %1179 = vmatmul.mubr.bf16.gmra.mrb[0].mxu0 %v1117
      %v1180 = vpop.f32.mrb[0].mxu0
      %v1181 = vadd.f32 0.0, %v1180
      %v1182 = vpop.f32.mrb[0].mxu0
      %v1183 = vpop.f32.mrb[0].mxu0
      %v1184 = vadd.f32 0.0, %v1183
      %v1185 = vpop.f32.mrb[0].mxu0
      %1186 = vmatprep.mubr.bf16.mxu0 0
      %1187 = vmatmul.mubr.bf16.gmra.mrb[0].mxu0 %v1120
      %v1188 = vpop.f32.mrb[0].mxu0
      %v1189 = vadd.f32 0.0, %v1188
      %v1190 = vpop.f32.mrb[0].mxu0
      %v1191 = vpop.f32.mrb[0].mxu0
      %v1192 = vadd.f32 0.0, %v1191
      %v1193 = vpop.f32.mrb[0].mxu0
      %1194 = vmatprep.mubr.bf16.mxu0 0
      %1195 = vmatmul.mubr.bf16.gmra.mrb[0].mxu0 %v1123
      %v1196 = vpop.f32.mrb[0].mxu0
      %v1197 = vadd.f32 0.0, %v1196
      %v1198 = vpop.f32.mrb[0].mxu0
      %v1199 = vpop.f32.mrb[0].mxu0
      %v1200 = vadd.f32 0.0, %v1199
      %v1201 = vpop.f32.mrb[0].mxu0
      %1202 = vmatprep.mubr.bf16.mxu0 0
      %1203 = vmatmul.mubr.bf16.gmra.mrb[0].mxu0 %v1126
      %v1204 = vpop.f32.mrb[0].mxu0
      %v1205 = vadd.f32 0.0, %v1204
      %v1206 = vpop.f32.mrb[0].mxu0
      %v1207 = vpop.f32.mrb[0].mxu0
      %v1208 = vadd.f32 0.0, %v1207
      %v1209 = vpop.f32.mrb[0].mxu0
      %1210 = vmatprep.mubr.bf16.mxu0 0
      %1211 = vmatmul.mubr.bf16.gmra.mrb[0].mxu0 %v1129
      %v1212 = vpop.f32.mrb[0].mxu0
      %v1213 = vadd.f32 0.0, %v1212
      %v1214 = vpop.f32.mrb[0].mxu0
      %v1215 = vpop.f32.mrb[0].mxu0
      %v1216 = vadd.f32 0.0, %v1215
      %v1217 = vpop.f32.mrb[0].mxu0
      %1218 = vmatprep.mubr.bf16.mxu0 0
      %1219 = vmatmul.mubr.bf16.gmra.mrb[0].mxu0 %v1132
      %v1220 = vpop.f32.mrb[0].mxu0
      %v1221 = vadd.f32 0.0, %v1220
      %v1222 = vpop.f32.mrb[0].mxu0
      %v1223 = vpop.f32.mrb[0].mxu0
      %v1224 = vadd.f32 0.0, %v1223
      %v1225 = vpop.f32.mrb[0].mxu0
      %1226 = vmatprep.mubr.bf16.mxu0 0
      %1227 = vmatmul.mubr.bf16.gmra.mrb[0].mxu0 %v1135
      %v1228 = vpop.f32.mrb[0].mxu0
      %v1229 = vadd.f32 0.0, %v1228
      %v1230 = vpop.f32.mrb[0].mxu0
      %v1231 = vpop.f32.mrb[0].mxu0
      %v1232 = vadd.f32 0.0, %v1231
      %v1233 = vpop.f32.mrb[0].mxu0
      %1234 = vmatprep.mubr.bf16.mxu0 0
      %1235 = vmatmul.mubr.bf16.gmra.mrb[0].mxu0 %v1138
      %v1236 = vpop.f32.mrb[0].mxu0
      %v1237 = vadd.f32 0.0, %v1236
      %v1238 = vpop.f32.mrb[0].mxu0
      %v1239 = vpop.f32.mrb[0].mxu0
      %v1240 = vadd.f32 0.0, %v1239
      %v1241 = vpop.f32.mrb[0].mxu0
      %1242 = vmatprep.mubr.bf16.mxu0 0
      %1243 = vmatmul.mubr.bf16.gmra.mrb[0].mxu0 %v1141
      %v1244 = vpop.f32.mrb[0].mxu0
      %v1245 = vadd.f32 0.0, %v1244
      %v1246 = vpop.f32.mrb[0].mxu0
      %v1247 = vpop.f32.mrb[0].mxu0
      %v1248 = vadd.f32 0.0, %v1247
      %v1249 = vpop.f32.mrb[0].mxu0
      %1250 = vdwg.mxu0
      %v1251 = vadd.f32 %v1010, %v1181
      %v1252 = vadd.f32 %v1011, %v1184
      %v1253 = vadd.f32 %v1012, %v1189
      %v1254 = vadd.f32 %v1013, %v1192
      %v1255 = vadd.f32 %v1014, %v1197
      %v1256 = vadd.f32 %v1015, %v1200
      %v1257 = vadd.f32 %v1016, %v1205
      %v1258 = vadd.f32 %v1017, %v1208
      %v1259 = vadd.f32 %v1018, %v1213
      %v1260 = vadd.f32 %v1019, %v1216
      %v1261 = vadd.f32 %v1020, %v1221
      %v1262 = vadd.f32 %v1021, %v1224
      %v1263 = vadd.f32 %v1022, %v1229
      %v1264 = vadd.f32 %v1023, %v1232
      %v1265 = vadd.f32 %v1024, %v1237
      %v1266 = vadd.f32 %v1025, %v1240
      %v1267 = vadd.f32 %v1026, %v1245
      %v1268 = vadd.f32 %v1027, %v1248
      %v1269 = vld [vmem:[#allocation2 + $0x50] sm:$0x3]
      %s1270 = scalar_lea.vmem %s2, 8
      %v1271 = vld [vmem:[%s1270] sm:$0x3]
      %v1273 = vunpack.c.l.b16 %v1269
      %v1274 = vpack.c.b16 %v1273, %v1273
      %vm1275 = vsmask.f32 6400
      %v1277 = vshrl.u32 %v1087, 16
      %v1279 = vrot.slane %v1277, 1
      %v1280 = vshll.u32 %v1087, 16
      %v1282 = vrot.slane %v1280, 2
      %v1283 = vor.u32 %v1279, %v1282
      %v1285 = vshrl.u32 %v1088, 16
      %v1287 = vrot.slane %v1285, 1
      %v1288 = vshll.u32 %v1088, 16
      %v1290 = vrot.slane %v1288, 2
      %v1291 = vor.u32 %v1287, %v1290
      %v1292 = vsel %vm1275, %v1283, %v1291
      %v1294 = vshrl.u32 %v1089, 16
      %v1296 = vrot.slane %v1294, 1
      %v1297 = vshll.u32 %v1089, 16
      %v1299 = vrot.slane %v1297, 2
      %v1300 = vor.u32 %v1296, %v1299
      %v1301 = vsel %vm1275, %v1291, %v1300
      %v1303 = vshrl.u32 %v1090, 16
      %v1305 = vrot.slane %v1303, 1
      %v1306 = vshll.u32 %v1090, 16
      %v1308 = vrot.slane %v1306, 2
      %v1309 = vor.u32 %v1305, %v1308
      %v1310 = vsel %vm1275, %v1300, %v1309
      %v1312 = vshrl.u32 %v1091, 16
      %v1314 = vrot.slane %v1312, 1
      %v1315 = vshll.u32 %v1091, 16
      %v1317 = vrot.slane %v1315, 2
      %v1318 = vor.u32 %v1314, %v1317
      %v1319 = vsel %vm1275, %v1309, %v1318
      %v1321 = vshrl.u32 %v1092, 16
      %v1323 = vrot.slane %v1321, 1
      %v1324 = vshll.u32 %v1092, 16
      %v1326 = vrot.slane %v1324, 2
      %v1327 = vor.u32 %v1323, %v1326
      %v1328 = vsel %vm1275, %v1318, %v1327
      %v1330 = vshrl.u32 %v1093, 16
      %v1332 = vrot.slane %v1330, 1
      %v1333 = vshll.u32 %v1093, 16
      %v1335 = vrot.slane %v1333, 2
      %v1336 = vor.u32 %v1332, %v1335
      %v1337 = vsel %vm1275, %v1327, %v1336
      %v1339 = vshrl.u32 %v1094, 16
      %v1341 = vrot.slane %v1339, 1
      %v1342 = vshll.u32 %v1094, 16
      %v1344 = vrot.slane %v1342, 2
      %v1345 = vor.u32 %v1341, %v1344
      %v1346 = vsel %vm1275, %v1336, %v1345
      %v1348 = vshrl.u32 %v1095, 16
      %v1350 = vrot.slane %v1348, 1
      %v1351 = vshll.u32 %v1095, 16
      %v1353 = vrot.slane %v1351, 2
      %v1354 = vor.u32 %v1350, %v1353
      %v1355 = vsel %vm1275, %v1345, %v1354
      %v1357 = vshrl.u32 %v1274, 16
      %v1359 = vrot.slane %v1357, 1
      %v1360 = vshll.u32 %v1274, 16
      %v1362 = vrot.slane %v1360, 2
      %v1363 = vor.u32 %v1359, %v1362
      %v1364 = vsel %vm1275, %v1354, %v1363
      %v1366 = vsel %vm586, %v1292, 0
      %v1369 = vsel %vm586, %v1301, 0
      %v1372 = vsel %vm586, %v1310, 0
      %v1375 = vsel %vm586, %v1319, 0
      %v1378 = vsel %vm586, %v1328, 0
      %v1381 = vsel %vm586, %v1337, 0
      %v1384 = vsel %vm586, %v1346, 0
      %v1387 = vsel %vm586, %v1355, 0
      %v1390 = vsel %vm586, %v1364, 0
      %v1393 = vsel %vm614, %v1271, 0
      %1395 = vmatprep.subr.bf16.mxu0 0
      %1396 = vmatpush1.bf16.msra.mxu0 %v1393
      %1397 = vmatprep.subr.bf16.mxu0 0
      %1398 = vmatpush1.bf16.msra.mxu0 0
      %1399 = vmatprep.subr.bf16.mxu0 0
      %1400 = vmatpush1.bf16.msra.mxu0 0
      %1401 = vmatprep.subr.bf16.mxu0 0
      %1402 = vmatpush1.bf16.msra.mxu0 0
      %1403 = vmatprep.subr.bf16.mxu0 0
      %1404 = vmatpush1.bf16.msra.mxu0 0
      %1405 = vmatprep.subr.bf16.mxu0 0
      %1406 = vmatpush1.bf16.msra.mxu0 0
      %1407 = vmatprep.subr.bf16.mxu0 0
      %1408 = vmatpush1.bf16.msra.mxu0 0
      %1409 = vmatprep.subr.bf16.mxu0 0
      %1410 = vmatpush1.bf16.msra.mxu0 0
      %1411 = vmatprep.subr.bf16.mxu0 0
      %1412 = vmatpush1.bf16.msra.mxu0 0
      %1413 = vmatprep.subr.bf16.mxu0 0
      %1414 = vmatpush1.bf16.msra.mxu0 0
      %1415 = vmatprep.subr.bf16.mxu0 0
      %1416 = vmatpush1.bf16.msra.mxu0 0
      %1417 = vmatprep.subr.bf16.mxu0 0
      %1418 = vmatpush1.bf16.msra.mxu0 0
      %1419 = vmatprep.subr.bf16.mxu0 0
      %1420 = vmatpush1.bf16.msra.mxu0 0
      %1421 = vmatprep.subr.bf16.mxu0 0
      %1422 = vmatpush1.bf16.msra.mxu0 0
      %1423 = vmatprep.subr.bf16.mxu0 0
      %1424 = vmatpush1.bf16.msra.mxu0 0
      %1425 = vmatprep.subr.bf16.mxu0 0
      %1426 = vmatpush1.bf16.msra.mxu0 0
      %1427 = vmatprep.mubr.bf16.mxu0 0
      %1428 = vmatmul.mubr.bf16.gmra.mrb[0].mxu0 %v1366
      %v1429 = vpop.f32.mrb[0].mxu0
      %v1430 = vadd.f32 0.0, %v1429
      %v1431 = vpop.f32.mrb[0].mxu0
      %v1432 = vpop.f32.mrb[0].mxu0
      %v1433 = vadd.f32 0.0, %v1432
      %v1434 = vpop.f32.mrb[0].mxu0
      %1435 = vmatprep.mubr.bf16.mxu0 0
      %1436 = vmatmul.mubr.bf16.gmra.mrb[0].mxu0 %v1369
      %v1437 = vpop.f32.mrb[0].mxu0
      %v1438 = vadd.f32 0.0, %v1437
      %v1439 = vpop.f32.mrb[0].mxu0
      %v1440 = vpop.f32.mrb[0].mxu0
      %v1441 = vadd.f32 0.0, %v1440
      %v1442 = vpop.f32.mrb[0].mxu0
      %1443 = vmatprep.mubr.bf16.mxu0 0
      %1444 = vmatmul.mubr.bf16.gmra.mrb[0].mxu0 %v1372
      %v1445 = vpop.f32.mrb[0].mxu0
      %v1446 = vadd.f32 0.0, %v1445
      %v1447 = vpop.f32.mrb[0].mxu0
      %v1448 = vpop.f32.mrb[0].mxu0
      %v1449 = vadd.f32 0.0, %v1448
      %v1450 = vpop.f32.mrb[0].mxu0
      %1451 = vmatprep.mubr.bf16.mxu0 0
      %1452 = vmatmul.mubr.bf16.gmra.mrb[0].mxu0 %v1375
      %v1453 = vpop.f32.mrb[0].mxu0
      %v1454 = vadd.f32 0.0, %v1453
      %v1455 = vpop.f32.mrb[0].mxu0
      %v1456 = vpop.f32.mrb[0].mxu0
      %v1457 = vadd.f32 0.0, %v1456
      %v1458 = vpop.f32.mrb[0].mxu0
      %1459 = vmatprep.mubr.bf16.mxu0 0
      %1460 = vmatmul.mubr.bf16.gmra.mrb[0].mxu0 %v1378
      %v1461 = vpop.f32.mrb[0].mxu0
      %v1462 = vadd.f32 0.0, %v1461
      %v1463 = vpop.f32.mrb[0].mxu0
      %v1464 = vpop.f32.mrb[0].mxu0
      %v1465 = vadd.f32 0.0, %v1464
      %v1466 = vpop.f32.mrb[0].mxu0
      %1467 = vmatprep.mubr.bf16.mxu0 0
      %1468 = vmatmul.mubr.bf16.gmra.mrb[0].mxu0 %v1381
      %v1469 = vpop.f32.mrb[0].mxu0
      %v1470 = vadd.f32 0.0, %v1469
      %v1471 = vpop.f32.mrb[0].mxu0
      %v1472 = vpop.f32.mrb[0].mxu0
      %v1473 = vadd.f32 0.0, %v1472
      %v1474 = vpop.f32.mrb[0].mxu0
      %1475 = vmatprep.mubr.bf16.mxu0 0
      %1476 = vmatmul.mubr.bf16.gmra.mrb[0].mxu0 %v1384
      %v1477 = vpop.f32.mrb[0].mxu0
      %v1478 = vadd.f32 0.0, %v1477
      %v1479 = vpop.f32.mrb[0].mxu0
      %v1480 = vpop.f32.mrb[0].mxu0
      %v1481 = vadd.f32 0.0, %v1480
      %v1482 = vpop.f32.mrb[0].mxu0
      %1483 = vmatprep.mubr.bf16.mxu0 0
      %1484 = vmatmul.mubr.bf16.gmra.mrb[0].mxu0 %v1387
      %v1485 = vpop.f32.mrb[0].mxu0
      %v1486 = vadd.f32 0.0, %v1485
      %v1487 = vpop.f32.mrb[0].mxu0
      %v1488 = vpop.f32.mrb[0].mxu0
      %v1489 = vadd.f32 0.0, %v1488
      %v1490 = vpop.f32.mrb[0].mxu0
      %1491 = vmatprep.mubr.bf16.mxu0 0
      %1492 = vmatmul.mubr.bf16.gmra.mrb[0].mxu0 %v1390
      %v1493 = vpop.f32.mrb[0].mxu0
      %v1494 = vadd.f32 0.0, %v1493
      %v1495 = vpop.f32.mrb[0].mxu0
      %v1496 = vpop.f32.mrb[0].mxu0
      %v1497 = vadd.f32 0.0, %v1496
      %v1498 = vpop.f32.mrb[0].mxu0
      %1499 = vdwg.mxu0
      %v1500 = vadd.f32 %v1251, %v1430
      %v1501 = vadd.f32 %v1252, %v1433
      %v1502 = vadd.f32 %v1253, %v1438
      %v1503 = vadd.f32 %v1254, %v1441
      %v1504 = vadd.f32 %v1255, %v1446
      %v1505 = vadd.f32 %v1256, %v1449
      %v1506 = vadd.f32 %v1257, %v1454
      %v1507 = vadd.f32 %v1258, %v1457
      %v1508 = vadd.f32 %v1259, %v1462
      %v1509 = vadd.f32 %v1260, %v1465
      %v1510 = vadd.f32 %v1261, %v1470
      %v1511 = vadd.f32 %v1262, %v1473
      %v1512 = vadd.f32 %v1263, %v1478
      %v1513 = vadd.f32 %v1264, %v1481
      %v1514 = vadd.f32 %v1265, %v1486
      %v1515 = vadd.f32 %v1266, %v1489
      %v1516 = vadd.f32 %v1267, %v1494
      %v1517 = vadd.f32 %v1268, %v1497
      %v1518 = vld [vmem:[#allocation2 + $0x8] sm:$0xc]
      %s1519 = scalar_lea.vmem %s2, 10
      %v1520 = vld [vmem:[%s1519] sm:$0x3]
      %v1522 = vunpack.c.l.b16 %v1518
      %v1523 = vpack.c.b16 %v1069, %v1522
      %vm1524 = vcmask 1045504
      %v1525 = vrot.slane %v1523, 2
      %v1526 = vrot.slane %v1088, 2
      %v1527 = vsel %vm1524, %v1525, %v1526
      %v1528 = vrot.slane %v1089, 2
      %v1529 = vsel %vm1524, %v1526, %v1528
      %v1530 = vrot.slane %v1090, 2
      %v1531 = vsel %vm1524, %v1528, %v1530
      %v1532 = vrot.slane %v1091, 2
      %v1533 = vsel %vm1524, %v1530, %v1532
      %v1534 = vrot.slane %v1092, 2
      %v1535 = vsel %vm1524, %v1532, %v1534
      %v1536 = vrot.slane %v1093, 2
      %v1537 = vsel %vm1524, %v1534, %v1536
      %v1538 = vrot.slane %v1094, 2
      %v1539 = vsel %vm1524, %v1536, %v1538
      %v1540 = vrot.slane %v1095, 2
      %v1541 = vsel %vm1524, %v1538, %v1540
      %v1542 = vrot.slane %v1274, 2
      %v1543 = vsel %vm1524, %v1540, %v1542
      %v1545 = vsel %vm586, %v1527, 0
      %v1548 = vsel %vm586, %v1529, 0
      %v1551 = vsel %vm586, %v1531, 0
      %v1554 = vsel %vm586, %v1533, 0
      %v1557 = vsel %vm586, %v1535, 0
      %v1560 = vsel %vm586, %v1537, 0
      %v1563 = vsel %vm586, %v1539, 0
      %v1566 = vsel %vm586, %v1541, 0
      %v1569 = vsel %vm586, %v1543, 0
      %v1572 = vsel %vm614, %v1520, 0
      %1574 = vmatprep.subr.bf16.mxu0 0
      %1575 = vmatpush1.bf16.msra.mxu0 %v1572
      %1576 = vmatprep.subr.bf16.mxu0 0
      %1577 = vmatpush1.bf16.msra.mxu0 0
      %1578 = vmatprep.subr.bf16.mxu0 0
      %1579 = vmatpush1.bf16.msra.mxu0 0
      %1580 = vmatprep.subr.bf16.mxu0 0
      %1581 = vmatpush1.bf16.msra.mxu0 0
      %1582 = vmatprep.subr.bf16.mxu0 0
      %1583 = vmatpush1.bf16.msra.mxu0 0
      %1584 = vmatprep.subr.bf16.mxu0 0
      %1585 = vmatpush1.bf16.msra.mxu0 0
      %1586 = vmatprep.subr.bf16.mxu0 0
      %1587 = vmatpush1.bf16.msra.mxu0 0
      %1588 = vmatprep.subr.bf16.mxu0 0
      %1589 = vmatpush1.bf16.msra.mxu0 0
      %1590 = vmatprep.subr.bf16.mxu0 0
      %1591 = vmatpush1.bf16.msra.mxu0 0
      %1592 = vmatprep.subr.bf16.mxu0 0
      %1593 = vmatpush1.bf16.msra.mxu0 0
      %1594 = vmatprep.subr.bf16.mxu0 0
      %1595 = vmatpush1.bf16.msra.mxu0 0
      %1596 = vmatprep.subr.bf16.mxu0 0
      %1597 = vmatpush1.bf16.msra.mxu0 0
      %1598 = vmatprep.subr.bf16.mxu0 0
      %1599 = vmatpush1.bf16.msra.mxu0 0
      %1600 = vmatprep.subr.bf16.mxu0 0
      %1601 = vmatpush1.bf16.msra.mxu0 0
      %1602 = vmatprep.subr.bf16.mxu0 0
      %1603 = vmatpush1.bf16.msra.mxu0 0
      %1604 = vmatprep.subr.bf16.mxu0 0
      %1605 = vmatpush1.bf16.msra.mxu0 0
      %1606 = vmatprep.mubr.bf16.mxu0 0
      %1607 = vmatmul.mubr.bf16.gmra.mrb[0].mxu0 %v1545
      %v1608 = vpop.f32.mrb[0].mxu0
      %v1609 = vadd.f32 0.0, %v1608
      %v1610 = vpop.f32.mrb[0].mxu0
      %v1611 = vpop.f32.mrb[0].mxu0
      %v1612 = vadd.f32 0.0, %v1611
      %v1613 = vpop.f32.mrb[0].mxu0
      %1614 = vmatprep.mubr.bf16.mxu0 0
      %1615 = vmatmul.mubr.bf16.gmra.mrb[0].mxu0 %v1548
      %v1616 = vpop.f32.mrb[0].mxu0
      %v1617 = vadd.f32 0.0, %v1616
      %v1618 = vpop.f32.mrb[0].mxu0
      %v1619 = vpop.f32.mrb[0].mxu0
      %v1620 = vadd.f32 0.0, %v1619
      %v1621 = vpop.f32.mrb[0].mxu0
      %1622 = vmatprep.mubr.bf16.mxu0 0
      %1623 = vmatmul.mubr.bf16.gmra.mrb[0].mxu0 %v1551
      %v1624 = vpop.f32.mrb[0].mxu0
      %v1625 = vadd.f32 0.0, %v1624
      %v1626 = vpop.f32.mrb[0].mxu0
      %v1627 = vpop.f32.mrb[0].mxu0
      %v1628 = vadd.f32 0.0, %v1627
      %v1629 = vpop.f32.mrb[0].mxu0
      %1630 = vmatprep.mubr.bf16.mxu0 0
      %1631 = vmatmul.mubr.bf16.gmra.mrb[0].mxu0 %v1554
      %v1632 = vpop.f32.mrb[0].mxu0
      %v1633 = vadd.f32 0.0, %v1632
      %v1634 = vpop.f32.mrb[0].mxu0
      %v1635 = vpop.f32.mrb[0].mxu0
      %v1636 = vadd.f32 0.0, %v1635
      %v1637 = vpop.f32.mrb[0].mxu0
      %1638 = vmatprep.mubr.bf16.mxu0 0
      %1639 = vmatmul.mubr.bf16.gmra.mrb[0].mxu0 %v1557
      %v1640 = vpop.f32.mrb[0].mxu0
      %v1641 = vadd.f32 0.0, %v1640
      %v1642 = vpop.f32.mrb[0].mxu0
      %v1643 = vpop.f32.mrb[0].mxu0
      %v1644 = vadd.f32 0.0, %v1643
      %v1645 = vpop.f32.mrb[0].mxu0
      %1646 = vmatprep.mubr.bf16.mxu0 0
      %1647 = vmatmul.mubr.bf16.gmra.mrb[0].mxu0 %v1560
      %v1648 = vpop.f32.mrb[0].mxu0
      %v1649 = vadd.f32 0.0, %v1648
      %v1650 = vpop.f32.mrb[0].mxu0
      %v1651 = vpop.f32.mrb[0].mxu0
      %v1652 = vadd.f32 0.0, %v1651
      %v1653 = vpop.f32.mrb[0].mxu0
      %1654 = vmatprep.mubr.bf16.mxu0 0
      %1655 = vmatmul.mubr.bf16.gmra.mrb[0].mxu0 %v1563
      %v1656 = vpop.f32.mrb[0].mxu0
      %v1657 = vadd.f32 0.0, %v1656
      %v1658 = vpop.f32.mrb[0].mxu0
      %v1659 = vpop.f32.mrb[0].mxu0
      %v1660 = vadd.f32 0.0, %v1659
      %v1661 = vpop.f32.mrb[0].mxu0
      %1662 = vmatprep.mubr.bf16.mxu0 0
      %1663 = vmatmul.mubr.bf16.gmra.mrb[0].mxu0 %v1566
      %v1664 = vpop.f32.mrb[0].mxu0
      %v1665 = vadd.f32 0.0, %v1664
      %v1666 = vpop.f32.mrb[0].mxu0
      %v1667 = vpop.f32.mrb[0].mxu0
      %v1668 = vadd.f32 0.0, %v1667
      %v1669 = vpop.f32.mrb[0].mxu0
      %1670 = vmatprep.mubr.bf16.mxu0 0
      %1671 = vmatmul.mubr.bf16.gmra.mrb[0].mxu0 %v1569
      %v1672 = vpop.f32.mrb[0].mxu0
      %v1673 = vadd.f32 0.0, %v1672
      %v1674 = vpop.f32.mrb[0].mxu0
      %v1675 = vpop.f32.mrb[0].mxu0
      %v1676 = vadd.f32 0.0, %v1675
      %v1677 = vpop.f32.mrb[0].mxu0
      %1678 = vdwg.mxu0
      %v1679 = vadd.f32 %v1500, %v1609
      %v1680 = vadd.f32 %v1501, %v1612
      %v1681 = vadd.f32 %v1502, %v1617
      %v1682 = vadd.f32 %v1503, %v1620
      %v1683 = vadd.f32 %v1504, %v1625
      %v1684 = vadd.f32 %v1505, %v1628
      %v1685 = vadd.f32 %v1506, %v1633
      %v1686 = vadd.f32 %v1507, %v1636
      %v1687 = vadd.f32 %v1508, %v1641
      %v1688 = vadd.f32 %v1509, %v1644
      %v1689 = vadd.f32 %v1510, %v1649
      %v1690 = vadd.f32 %v1511, %v1652
      %v1691 = vadd.f32 %v1512, %v1657
      %v1692 = vadd.f32 %v1513, %v1660
      %v1693 = vadd.f32 %v1514, %v1665
      %v1694 = vadd.f32 %v1515, %v1668
      %v1695 = vadd.f32 %v1516, %v1673
      %v1696 = vadd.f32 %v1517, %v1676
      %v1697 = vld [vmem:[#allocation2 + $0x10] sm:$0xc]
      %v1698 = vld [vmem:[#allocation2 + $0x14] sm:$0xf]
      %v1699 = vld [vmem:[#allocation2 + $0x18] sm:$0xf]
      %v1700 = vld [vmem:[#allocation2 + $0x1c] sm:$0xf]
      %v1701 = vld [vmem:[#allocation2 + $0x20] sm:$0xf]
      %v1702 = vld [vmem:[#allocation2 + $0x24] sm:$0xf]
      %v1703 = vld [vmem:[#allocation2 + $0x28] sm:$0xf]
      %v1704 = vld [vmem:[#allocation2 + $0x2c] sm:$0xf]
      %v1705 = vld [vmem:[#allocation2 + $0x30] sm:$0xf]
      %v1706 = vld [vmem:[#allocation2 + $0x34] sm:$0xf]
      %v1707 = vld [vmem:[#allocation2 + $0x38] sm:$0xf]
      %v1708 = vld [vmem:[#allocation2 + $0x3c] sm:$0xf]
      %v1709 = vld [vmem:[#allocation2 + $0x40] sm:$0xf]
      %v1710 = vld [vmem:[#allocation2 + $0x44] sm:$0xf]
      %v1711 = vld [vmem:[#allocation2 + $0x48] sm:$0xf]
      %v1712 = vld [vmem:[#allocation2 + $0x4c] sm:$0xf]
      %v1713 = vld [vmem:[#allocation2 + $0x50] sm:$0xf]
      %v1714 = vld [vmem:[#allocation2 + $0x54] sm:$0xf]
      %v1715 = vld [vmem:[#allocation2 + $0x58] sm:$0x3]
      %s1716 = scalar_lea.vmem %s2, 12
      %v1717 = vld [vmem:[%s1716] sm:$0x3]
      %v1737 = vunpack.c.l.b16 %v1697
      %v1738 = vunpack.c.l.b16 %v1698
      %v1739 = vunpack.c.l.b16 %v1699
      %v1740 = vunpack.c.l.b16 %v1700
      %v1741 = vunpack.c.l.b16 %v1701
      %v1742 = vunpack.c.l.b16 %v1702
      %v1743 = vunpack.c.l.b16 %v1703
      %v1744 = vunpack.c.l.b16 %v1704
      %v1745 = vunpack.c.l.b16 %v1705
      %v1746 = vunpack.c.l.b16 %v1706
      %v1747 = vunpack.c.l.b16 %v1707
      %v1748 = vunpack.c.l.b16 %v1708
      %v1749 = vunpack.c.l.b16 %v1709
      %v1750 = vunpack.c.l.b16 %v1710
      %v1751 = vunpack.c.l.b16 %v1711
      %v1752 = vunpack.c.l.b16 %v1712
      %v1753 = vunpack.c.l.b16 %v1713
      %v1754 = vunpack.c.l.b16 %v1714
      %v1755 = vunpack.c.l.b16 %v1715
      %v1756 = vpack.c.b16 %v1738, %v1737
      %v1757 = vpack.c.b16 %v1740, %v1739
      %v1758 = vpack.c.b16 %v1742, %v1741
      %v1759 = vpack.c.b16 %v1744, %v1743
      %v1760 = vpack.c.b16 %v1746, %v1745
      %v1761 = vpack.c.b16 %v1748, %v1747
      %v1762 = vpack.c.b16 %v1750, %v1749
      %v1763 = vpack.c.b16 %v1752, %v1751
      %v1764 = vpack.c.b16 %v1754, %v1753
      %v1765 = vpack.c.b16 %v1755, %v1755
      %v1766 = vrot.slane %v1756, 2
      %v1767 = vrot.slane %v1757, 2
      %v1768 = vsel %vm1524, %v1766, %v1767
      %v1769 = vrot.slane %v1758, 2
      %v1770 = vsel %vm1524, %v1767, %v1769
      %v1771 = vrot.slane %v1759, 2
      %v1772 = vsel %vm1524, %v1769, %v1771
      %v1773 = vrot.slane %v1760, 2
      %v1774 = vsel %vm1524, %v1771, %v1773
      %v1775 = vrot.slane %v1761, 2
      %v1776 = vsel %vm1524, %v1773, %v1775
      %v1777 = vrot.slane %v1762, 2
      %v1778 = vsel %vm1524, %v1775, %v1777
      %v1779 = vrot.slane %v1763, 2
      %v1780 = vsel %vm1524, %v1777, %v1779
      %v1781 = vrot.slane %v1764, 2
      %v1782 = vsel %vm1524, %v1779, %v1781
      %v1783 = vrot.slane %v1765, 2
      %v1784 = vsel %vm1524, %v1781, %v1783
      %v1786 = vsel %vm586, %v1768, 0
      %v1789 = vsel %vm586, %v1770, 0
      %v1792 = vsel %vm586, %v1772, 0
      %v1795 = vsel %vm586, %v1774, 0
      %v1798 = vsel %vm586, %v1776, 0
      %v1801 = vsel %vm586, %v1778, 0
      %v1804 = vsel %vm586, %v1780, 0
      %v1807 = vsel %vm586, %v1782, 0
      %v1810 = vsel %vm586, %v1784, 0
      %v1813 = vsel %vm614, %v1717, 0
      %1815 = vmatprep.subr.bf16.mxu0 0
      %1816 = vmatpush1.bf16.msra.mxu0 %v1813
      %1817 = vmatprep.subr.bf16.mxu0 0
      %1818 = vmatpush1.bf16.msra.mxu0 0
      %1819 = vmatprep.subr.bf16.mxu0 0
      %1820 = vmatpush1.bf16.msra.mxu0 0
      %1821 = vmatprep.subr.bf16.mxu0 0
      %1822 = vmatpush1.bf16.msra.mxu0 0
      %1823 = vmatprep.subr.bf16.mxu0 0
      %1824 = vmatpush1.bf16.msra.mxu0 0
      %1825 = vmatprep.subr.bf16.mxu0 0
      %1826 = vmatpush1.bf16.msra.mxu0 0
      %1827 = vmatprep.subr.bf16.mxu0 0
      %1828 = vmatpush1.bf16.msra.mxu0 0
      %1829 = vmatprep.subr.bf16.mxu0 0
      %1830 = vmatpush1.bf16.msra.mxu0 0
      %1831 = vmatprep.subr.bf16.mxu0 0
      %1832 = vmatpush1.bf16.msra.mxu0 0
      %1833 = vmatprep.subr.bf16.mxu0 0
      %1834 = vmatpush1.bf16.msra.mxu0 0
      %1835 = vmatprep.subr.bf16.mxu0 0
      %1836 = vmatpush1.bf16.msra.mxu0 0
      %1837 = vmatprep.subr.bf16.mxu0 0
      %1838 = vmatpush1.bf16.msra.mxu0 0
      %1839 = vmatprep.subr.bf16.mxu0 0
      %1840 = vmatpush1.bf16.msra.mxu0 0
      %1841 = vmatprep.subr.bf16.mxu0 0
      %1842 = vmatpush1.bf16.msra.mxu0 0
      %1843 = vmatprep.subr.bf16.mxu0 0
      %1844 = vmatpush1.bf16.msra.mxu0 0
      %1845 = vmatprep.subr.bf16.mxu0 0
      %1846 = vmatpush1.bf16.msra.mxu0 0
      %1847 = vmatprep.mubr.bf16.mxu0 0
      %1848 = vmatmul.mubr.bf16.gmra.mrb[0].mxu0 %v1786
      %v1849 = vpop.f32.mrb[0].mxu0
      %v1850 = vadd.f32 0.0, %v1849
      %v1851 = vpop.f32.mrb[0].mxu0
      %v1852 = vpop.f32.mrb[0].mxu0
      %v1853 = vadd.f32 0.0, %v1852
      %v1854 = vpop.f32.mrb[0].mxu0
      %1855 = vmatprep.mubr.bf16.mxu0 0
      %1856 = vmatmul.mubr.bf16.gmra.mrb[0].mxu0 %v1789
      %v1857 = vpop.f32.mrb[0].mxu0
      %v1858 = vadd.f32 0.0, %v1857
      %v1859 = vpop.f32.mrb[0].mxu0
      %v1860 = vpop.f32.mrb[0].mxu0
      %v1861 = vadd.f32 0.0, %v1860
      %v1862 = vpop.f32.mrb[0].mxu0
      %1863 = vmatprep.mubr.bf16.mxu0 0
      %1864 = vmatmul.mubr.bf16.gmra.mrb[0].mxu0 %v1792
      %v1865 = vpop.f32.mrb[0].mxu0
      %v1866 = vadd.f32 0.0, %v1865
      %v1867 = vpop.f32.mrb[0].mxu0
      %v1868 = vpop.f32.mrb[0].mxu0
      %v1869 = vadd.f32 0.0, %v1868
      %v1870 = vpop.f32.mrb[0].mxu0
      %1871 = vmatprep.mubr.bf16.mxu0 0
      %1872 = vmatmul.mubr.bf16.gmra.mrb[0].mxu0 %v1795
      %v1873 = vpop.f32.mrb[0].mxu0
      %v1874 = vadd.f32 0.0, %v1873
      %v1875 = vpop.f32.mrb[0].mxu0
      %v1876 = vpop.f32.mrb[0].mxu0
      %v1877 = vadd.f32 0.0, %v1876
      %v1878 = vpop.f32.mrb[0].mxu0
      %1879 = vmatprep.mubr.bf16.mxu0 0
      %1880 = vmatmul.mubr.bf16.gmra.mrb[0].mxu0 %v1798
      %v1881 = vpop.f32.mrb[0].mxu0
      %v1882 = vadd.f32 0.0, %v1881
      %v1883 = vpop.f32.mrb[0].mxu0
      %v1884 = vpop.f32.mrb[0].mxu0
      %v1885 = vadd.f32 0.0, %v1884
      %v1886 = vpop.f32.mrb[0].mxu0
      %1887 = vmatprep.mubr.bf16.mxu0 0
      %1888 = vmatmul.mubr.bf16.gmra.mrb[0].mxu0 %v1801
      %v1889 = vpop.f32.mrb[0].mxu0
      %v1890 = vadd.f32 0.0, %v1889
      %v1891 = vpop.f32.mrb[0].mxu0
      %v1892 = vpop.f32.mrb[0].mxu0
      %v1893 = vadd.f32 0.0, %v1892
      %v1894 = vpop.f32.mrb[0].mxu0
      %1895 = vmatprep.mubr.bf16.mxu0 0
      %1896 = vmatmul.mubr.bf16.gmra.mrb[0].mxu0 %v1804
      %v1897 = vpop.f32.mrb[0].mxu0
      %v1898 = vadd.f32 0.0, %v1897
      %v1899 = vpop.f32.mrb[0].mxu0
      %v1900 = vpop.f32.mrb[0].mxu0
      %v1901 = vadd.f32 0.0, %v1900
      %v1902 = vpop.f32.mrb[0].mxu0
      %1903 = vmatprep.mubr.bf16.mxu0 0
      %1904 = vmatmul.mubr.bf16.gmra.mrb[0].mxu0 %v1807
      %v1905 = vpop.f32.mrb[0].mxu0
      %v1906 = vadd.f32 0.0, %v1905
      %v1907 = vpop.f32.mrb[0].mxu0
      %v1908 = vpop.f32.mrb[0].mxu0
      %v1909 = vadd.f32 0.0, %v1908
      %v1910 = vpop.f32.mrb[0].mxu0
      %1911 = vmatprep.mubr.bf16.mxu0 0
      %1912 = vmatmul.mubr.bf16.gmra.mrb[0].mxu0 %v1810
      %v1913 = vpop.f32.mrb[0].mxu0
      %v1914 = vadd.f32 0.0, %v1913
      %v1915 = vpop.f32.mrb[0].mxu0
      %v1916 = vpop.f32.mrb[0].mxu0
      %v1917 = vadd.f32 0.0, %v1916
      %v1918 = vpop.f32.mrb[0].mxu0
      %1919 = vdwg.mxu0
      %v1920 = vadd.f32 %v1679, %v1850
      %v1921 = vadd.f32 %v1680, %v1853
      %v1922 = vadd.f32 %v1681, %v1858
      %v1923 = vadd.f32 %v1682, %v1861
      %v1924 = vadd.f32 %v1683, %v1866
      %v1925 = vadd.f32 %v1684, %v1869
      %v1926 = vadd.f32 %v1685, %v1874
      %v1927 = vadd.f32 %v1686, %v1877
      %v1928 = vadd.f32 %v1687, %v1882
      %v1929 = vadd.f32 %v1688, %v1885
      %v1930 = vadd.f32 %v1689, %v1890
      %v1931 = vadd.f32 %v1690, %v1893
      %v1932 = vadd.f32 %v1691, %v1898
      %v1933 = vadd.f32 %v1692, %v1901
      %v1934 = vadd.f32 %v1693, %v1906
      %v1935 = vadd.f32 %v1694, %v1909
      %v1936 = vadd.f32 %v1695, %v1914
      %v1937 = vadd.f32 %v1696, %v1917
      %v1938 = vld [vmem:[#allocation2 + $0x58] sm:$0x7]
      %s1939 = scalar_lea.vmem %s2, 14
      %v1940 = vld [vmem:[%s1939] sm:$0x3]
      %v1942 = vunpack.c.l.b16 %v1938
      %v1943 = vpack.c.b16 %v1942, %v1942
      %vm1944 = vsmask.f32 5376
      %v1946 = vshrl.u32 %v1756, 16
      %v1948 = vrot.slane %v1946, 2
      %v1949 = vshll.u32 %v1756, 16
      %v1951 = vrot.slane %v1949, 3
      %v1952 = vor.u32 %v1948, %v1951
      %v1954 = vshrl.u32 %v1757, 16
      %v1956 = vrot.slane %v1954, 2
      %v1957 = vshll.u32 %v1757, 16
      %v1959 = vrot.slane %v1957, 3
      %v1960 = vor.u32 %v1956, %v1959
      %v1961 = vsel %vm1944, %v1952, %v1960
      %v1963 = vshrl.u32 %v1758, 16
      %v1965 = vrot.slane %v1963, 2
      %v1966 = vshll.u32 %v1758, 16
      %v1968 = vrot.slane %v1966, 3
      %v1969 = vor.u32 %v1965, %v1968
      %v1970 = vsel %vm1944, %v1960, %v1969
      %v1972 = vshrl.u32 %v1759, 16
      %v1974 = vrot.slane %v1972, 2
      %v1975 = vshll.u32 %v1759, 16
      %v1977 = vrot.slane %v1975, 3
      %v1978 = vor.u32 %v1974, %v1977
      %v1979 = vsel %vm1944, %v1969, %v1978
      %v1981 = vshrl.u32 %v1760, 16
      %v1983 = vrot.slane %v1981, 2
      %v1984 = vshll.u32 %v1760, 16
      %v1986 = vrot.slane %v1984, 3
      %v1987 = vor.u32 %v1983, %v1986
      %v1988 = vsel %vm1944, %v1978, %v1987
      %v1990 = vshrl.u32 %v1761, 16
      %v1992 = vrot.slane %v1990, 2
      %v1993 = vshll.u32 %v1761, 16
      %v1995 = vrot.slane %v1993, 3
      %v1996 = vor.u32 %v1992, %v1995
      %v1997 = vsel %vm1944, %v1987, %v1996
      %v1999 = vshrl.u32 %v1762, 16
      %v2001 = vrot.slane %v1999, 2
      %v2002 = vshll.u32 %v1762, 16
      %v2004 = vrot.slane %v2002, 3
      %v2005 = vor.u32 %v2001, %v2004
      %v2006 = vsel %vm1944, %v1996, %v2005
      %v2008 = vshrl.u32 %v1763, 16
      %v2010 = vrot.slane %v2008, 2
      %v2011 = vshll.u32 %v1763, 16
      %v2013 = vrot.slane %v2011, 3
      %v2014 = vor.u32 %v2010, %v2013
      %v2015 = vsel %vm1944, %v2005, %v2014
      %v2017 = vshrl.u32 %v1764, 16
      %v2019 = vrot.slane %v2017, 2
      %v2020 = vshll.u32 %v1764, 16
      %v2022 = vrot.slane %v2020, 3
      %v2023 = vor.u32 %v2019, %v2022
      %v2024 = vsel %vm1944, %v2014, %v2023
      %v2026 = vshrl.u32 %v1943, 16
      %v2028 = vrot.slane %v2026, 2
      %v2029 = vshll.u32 %v1943, 16
      %v2031 = vrot.slane %v2029, 3
      %v2032 = vor.u32 %v2028, %v2031
      %v2033 = vsel %vm1944, %v2023, %v2032
      %v2035 = vsel %vm586, %v1961, 0
      %v2038 = vsel %vm586, %v1970, 0
      %v2041 = vsel %vm586, %v1979, 0
      %v2044 = vsel %vm586, %v1988, 0
      %v2047 = vsel %vm586, %v1997, 0
      %v2050 = vsel %vm586, %v2006, 0
      %v2053 = vsel %vm586, %v2015, 0
      %v2056 = vsel %vm586, %v2024, 0
      %v2059 = vsel %vm586, %v2033, 0
      %v2062 = vsel %vm614, %v1940, 0
      %2064 = vmatprep.subr.bf16.mxu0 0
      %2065 = vmatpush1.bf16.msra.mxu0 %v2062
      %2066 = vmatprep.subr.bf16.mxu0 0
      %2067 = vmatpush1.bf16.msra.mxu0 0
      %2068 = vmatprep.subr.bf16.mxu0 0
      %2069 = vmatpush1.bf16.msra.mxu0 0
      %2070 = vmatprep.subr.bf16.mxu0 0
      %2071 = vmatpush1.bf16.msra.mxu0 0
      %2072 = vmatprep.subr.bf16.mxu0 0
      %2073 = vmatpush1.bf16.msra.mxu0 0
      %2074 = vmatprep.subr.bf16.mxu0 0
      %2075 = vmatpush1.bf16.msra.mxu0 0
      %2076 = vmatprep.subr.bf16.mxu0 0
      %2077 = vmatpush1.bf16.msra.mxu0 0
      %2078 = vmatprep.subr.bf16.mxu0 0
      %2079 = vmatpush1.bf16.msra.mxu0 0
      %2080 = vmatprep.subr.bf16.mxu0 0
      %2081 = vmatpush1.bf16.msra.mxu0 0
      %2082 = vmatprep.subr.bf16.mxu0 0
      %2083 = vmatpush1.bf16.msra.mxu0 0
      %2084 = vmatprep.subr.bf16.mxu0 0
      %2085 = vmatpush1.bf16.msra.mxu0 0
      %2086 = vmatprep.subr.bf16.mxu0 0
      %2087 = vmatpush1.bf16.msra.mxu0 0
      %2088 = vmatprep.subr.bf16.mxu0 0
      %2089 = vmatpush1.bf16.msra.mxu0 0
      %2090 = vmatprep.subr.bf16.mxu0 0
      %2091 = vmatpush1.bf16.msra.mxu0 0
      %2092 = vmatprep.subr.bf16.mxu0 0
      %2093 = vmatpush1.bf16.msra.mxu0 0
      %2094 = vmatprep.subr.bf16.mxu0 0
      %2095 = vmatpush1.bf16.msra.mxu0 0
      %2096 = vmatprep.mubr.bf16.mxu0 0
      %2097 = vmatmul.mubr.bf16.gmra.mrb[0].mxu0 %v2035
      %v2098 = vpop.f32.mrb[0].mxu0
      %v2099 = vadd.f32 0.0, %v2098
      %v2100 = vpop.f32.mrb[0].mxu0
      %v2101 = vpop.f32.mrb[0].mxu0
      %v2102 = vadd.f32 0.0, %v2101
      %v2103 = vpop.f32.mrb[0].mxu0
      %2104 = vmatprep.mubr.bf16.mxu0 0
      %2105 = vmatmul.mubr.bf16.gmra.mrb[0].mxu0 %v2038
      %v2106 = vpop.f32.mrb[0].mxu0
      %v2107 = vadd.f32 0.0, %v2106
      %v2108 = vpop.f32.mrb[0].mxu0
      %v2109 = vpop.f32.mrb[0].mxu0
      %v2110 = vadd.f32 0.0, %v2109
      %v2111 = vpop.f32.mrb[0].mxu0
      %2112 = vmatprep.mubr.bf16.mxu0 0
      %2113 = vmatmul.mubr.bf16.gmra.mrb[0].mxu0 %v2041
      %v2114 = vpop.f32.mrb[0].mxu0
      %v2115 = vadd.f32 0.0, %v2114
      %v2116 = vpop.f32.mrb[0].mxu0
      %v2117 = vpop.f32.mrb[0].mxu0
      %v2118 = vadd.f32 0.0, %v2117
      %v2119 = vpop.f32.mrb[0].mxu0
      %2120 = vmatprep.mubr.bf16.mxu0 0
      %2121 = vmatmul.mubr.bf16.gmra.mrb[0].mxu0 %v2044
      %v2122 = vpop.f32.mrb[0].mxu0
      %v2123 = vadd.f32 0.0, %v2122
      %v2124 = vpop.f32.mrb[0].mxu0
      %v2125 = vpop.f32.mrb[0].mxu0
      %v2126 = vadd.f32 0.0, %v2125
      %v2127 = vpop.f32.mrb[0].mxu0
      %2128 = vmatprep.mubr.bf16.mxu0 0
      %2129 = vmatmul.mubr.bf16.gmra.mrb[0].mxu0 %v2047
      %v2130 = vpop.f32.mrb[0].mxu0
      %v2131 = vadd.f32 0.0, %v2130
      %v2132 = vpop.f32.mrb[0].mxu0
      %v2133 = vpop.f32.mrb[0].mxu0
      %v2134 = vadd.f32 0.0, %v2133
      %v2135 = vpop.f32.mrb[0].mxu0
      %2136 = vmatprep.mubr.bf16.mxu0 0
      %2137 = vmatmul.mubr.bf16.gmra.mrb[0].mxu0 %v2050
      %v2138 = vpop.f32.mrb[0].mxu0
      %v2139 = vadd.f32 0.0, %v2138
      %v2140 = vpop.f32.mrb[0].mxu0
      %v2141 = vpop.f32.mrb[0].mxu0
      %v2142 = vadd.f32 0.0, %v2141
      %v2143 = vpop.f32.mrb[0].mxu0
      %2144 = vmatprep.mubr.bf16.mxu0 0
      %2145 = vmatmul.mubr.bf16.gmra.mrb[0].mxu0 %v2053
      %v2146 = vpop.f32.mrb[0].mxu0
      %v2147 = vadd.f32 0.0, %v2146
      %v2148 = vpop.f32.mrb[0].mxu0
      %v2149 = vpop.f32.mrb[0].mxu0
      %v2150 = vadd.f32 0.0, %v2149
      %v2151 = vpop.f32.mrb[0].mxu0
      %2152 = vmatprep.mubr.bf16.mxu0 0
      %2153 = vmatmul.mubr.bf16.gmra.mrb[0].mxu0 %v2056
      %v2154 = vpop.f32.mrb[0].mxu0
      %v2155 = vadd.f32 0.0, %v2154
      %v2156 = vpop.f32.mrb[0].mxu0
      %v2157 = vpop.f32.mrb[0].mxu0
      %v2158 = vadd.f32 0.0, %v2157
      %v2159 = vpop.f32.mrb[0].mxu0
      %2160 = vmatprep.mubr.bf16.mxu0 0
      %2161 = vmatmul.mubr.bf16.gmra.mrb[0].mxu0 %v2059
      %v2162 = vpop.f32.mrb[0].mxu0
      %v2163 = vadd.f32 0.0, %v2162
      %v2164 = vpop.f32.mrb[0].mxu0
      %v2165 = vpop.f32.mrb[0].mxu0
      %v2166 = vadd.f32 0.0, %v2165
      %v2167 = vpop.f32.mrb[0].mxu0
      %2168 = vdwg.mxu0
      %v2169 = vadd.f32 %v1920, %v2099
      %v2170 = vadd.f32 %v1921, %v2102
      %v2171 = vadd.f32 %v1922, %v2107
      %v2172 = vadd.f32 %v1923, %v2110
      %v2173 = vadd.f32 %v1924, %v2115
      %v2174 = vadd.f32 %v1925, %v2118
      %v2175 = vadd.f32 %v1926, %v2123
      %v2176 = vadd.f32 %v1927, %v2126
      %v2177 = vadd.f32 %v1928, %v2131
      %v2178 = vadd.f32 %v1929, %v2134
      %v2179 = vadd.f32 %v1930, %v2139
      %v2180 = vadd.f32 %v1931, %v2142
      %v2181 = vadd.f32 %v1932, %v2147
      %v2182 = vadd.f32 %v1933, %v2150
      %v2183 = vadd.f32 %v1934, %v2155
      %v2184 = vadd.f32 %v1935, %v2158
      %v2185 = vadd.f32 %v1936, %v2163
      %v2186 = vadd.f32 %v1937, %v2166
      %v2187 = vld [vmem:[#allocation2 + $0x10] sm:$0x8]
      %s2188 = scalar_lea.vmem %s2, 16
      %v2189 = vld [vmem:[%s2188] sm:$0x3]
      %v2191 = vunpack.c.l.b16 %v2187
      %v2192 = vpack.c.b16 %v1738, %v2191
      %vm2193 = vcmask 1044480
      %v2194 = vrot.slane %v2192, 3
      %v2195 = vrot.slane %v1757, 3
      %v2196 = vsel %vm2193, %v2194, %v2195
      %v2197 = vrot.slane %v1758, 3
      %v2198 = vsel %vm2193, %v2195, %v2197
      %v2199 = vrot.slane %v1759, 3
      %v2200 = vsel %vm2193, %v2197, %v2199
      %v2201 = vrot.slane %v1760, 3
      %v2202 = vsel %vm2193, %v2199, %v2201
      %v2203 = vrot.slane %v1761, 3
      %v2204 = vsel %vm2193, %v2201, %v2203
      %v2205 = vrot.slane %v1762, 3
      %v2206 = vsel %vm2193, %v2203, %v2205
      %v2207 = vrot.slane %v1763, 3
      %v2208 = vsel %vm2193, %v2205, %v2207
      %v2209 = vrot.slane %v1764, 3
      %v2210 = vsel %vm2193, %v2207, %v2209
      %v2211 = vrot.slane %v1943, 3
      %v2212 = vsel %vm2193, %v2209, %v2211
      %v2214 = vsel %vm586, %v2196, 0
      %v2217 = vsel %vm586, %v2198, 0
      %v2220 = vsel %vm586, %v2200, 0
      %v2223 = vsel %vm586, %v2202, 0
      %v2226 = vsel %vm586, %v2204, 0
      %v2229 = vsel %vm586, %v2206, 0
      %v2232 = vsel %vm586, %v2208, 0
      %v2235 = vsel %vm586, %v2210, 0
      %v2238 = vsel %vm586, %v2212, 0
      %v2241 = vsel %vm614, %v2189, 0
      %2243 = vmatprep.subr.bf16.mxu0 0
      %2244 = vmatpush1.bf16.msra.mxu0 %v2241
      %2245 = vmatprep.subr.bf16.mxu0 0
      %2246 = vmatpush1.bf16.msra.mxu0 0
      %2247 = vmatprep.subr.bf16.mxu0 0
      %2248 = vmatpush1.bf16.msra.mxu0 0
      %2249 = vmatprep.subr.bf16.mxu0 0
      %2250 = vmatpush1.bf16.msra.mxu0 0
      %2251 = vmatprep.subr.bf16.mxu0 0
      %2252 = vmatpush1.bf16.msra.mxu0 0
      %2253 = vmatprep.subr.bf16.mxu0 0
      %2254 = vmatpush1.bf16.msra.mxu0 0
      %2255 = vmatprep.subr.bf16.mxu0 0
      %2256 = vmatpush1.bf16.msra.mxu0 0
      %2257 = vmatprep.subr.bf16.mxu0 0
      %2258 = vmatpush1.bf16.msra.mxu0 0
      %2259 = vmatprep.subr.bf16.mxu0 0
      %2260 = vmatpush1.bf16.msra.mxu0 0
      %2261 = vmatprep.subr.bf16.mxu0 0
      %2262 = vmatpush1.bf16.msra.mxu0 0
      %2263 = vmatprep.subr.bf16.mxu0 0
      %2264 = vmatpush1.bf16.msra.mxu0 0
      %2265 = vmatprep.subr.bf16.mxu0 0
      %2266 = vmatpush1.bf16.msra.mxu0 0
      %2267 = vmatprep.subr.bf16.mxu0 0
      %2268 = vmatpush1.bf16.msra.mxu0 0
      %2269 = vmatprep.subr.bf16.mxu0 0
      %2270 = vmatpush1.bf16.msra.mxu0 0
      %2271 = vmatprep.subr.bf16.mxu0 0
      %2272 = vmatpush1.bf16.msra.mxu0 0
      %2273 = vmatprep.subr.bf16.mxu0 0
      %2274 = vmatpush1.bf16.msra.mxu0 0
      %2275 = vmatprep.mubr.bf16.mxu0 0
      %2276 = vmatmul.mubr.bf16.gmra.mrb[0].mxu0 %v2214
      %v2277 = vpop.f32.mrb[0].mxu0
      %v2278 = vadd.f32 0.0, %v2277
      %v2279 = vpop.f32.mrb[0].mxu0
      %v2280 = vpop.f32.mrb[0].mxu0
      %v2281 = vadd.f32 0.0, %v2280
      %v2282 = vpop.f32.mrb[0].mxu0
      %2283 = vmatprep.mubr.bf16.mxu0 0
      %2284 = vmatmul.mubr.bf16.gmra.mrb[0].mxu0 %v2217
      %v2285 = vpop.f32.mrb[0].mxu0
      %v2286 = vadd.f32 0.0, %v2285
      %v2287 = vpop.f32.mrb[0].mxu0
      %v2288 = vpop.f32.mrb[0].mxu0
      %v2289 = vadd.f32 0.0, %v2288
      %v2290 = vpop.f32.mrb[0].mxu0
      %2291 = vmatprep.mubr.bf16.mxu0 0
      %2292 = vmatmul.mubr.bf16.gmra.mrb[0].mxu0 %v2220
      %v2293 = vpop.f32.mrb[0].mxu0
      %v2294 = vadd.f32 0.0, %v2293
      %v2295 = vpop.f32.mrb[0].mxu0
      %v2296 = vpop.f32.mrb[0].mxu0
      %v2297 = vadd.f32 0.0, %v2296
      %v2298 = vpop.f32.mrb[0].mxu0
      %2299 = vmatprep.mubr.bf16.mxu0 0
      %2300 = vmatmul.mubr.bf16.gmra.mrb[0].mxu0 %v2223
      %v2301 = vpop.f32.mrb[0].mxu0
      %v2302 = vadd.f32 0.0, %v2301
      %v2303 = vpop.f32.mrb[0].mxu0
      %v2304 = vpop.f32.mrb[0].mxu0
      %v2305 = vadd.f32 0.0, %v2304
      %v2306 = vpop.f32.mrb[0].mxu0
      %2307 = vmatprep.mubr.bf16.mxu0 0
      %2308 = vmatmul.mubr.bf16.gmra.mrb[0].mxu0 %v2226
      %v2309 = vpop.f32.mrb[0].mxu0
      %v2310 = vadd.f32 0.0, %v2309
      %v2311 = vpop.f32.mrb[0].mxu0
      %v2312 = vpop.f32.mrb[0].mxu0
      %v2313 = vadd.f32 0.0, %v2312
      %v2314 = vpop.f32.mrb[0].mxu0
      %2315 = vmatprep.mubr.bf16.mxu0 0
      %2316 = vmatmul.mubr.bf16.gmra.mrb[0].mxu0 %v2229
      %v2317 = vpop.f32.mrb[0].mxu0
      %v2318 = vadd.f32 0.0, %v2317
      %v2319 = vpop.f32.mrb[0].mxu0
      %v2320 = vpop.f32.mrb[0].mxu0
      %v2321 = vadd.f32 0.0, %v2320
      %v2322 = vpop.f32.mrb[0].mxu0
      %2323 = vmatprep.mubr.bf16.mxu0 0
      %2324 = vmatmul.mubr.bf16.gmra.mrb[0].mxu0 %v2232
      %v2325 = vpop.f32.mrb[0].mxu0
      %v2326 = vadd.f32 0.0, %v2325
      %v2327 = vpop.f32.mrb[0].mxu0
      %v2328 = vpop.f32.mrb[0].mxu0
      %v2329 = vadd.f32 0.0, %v2328
      %v2330 = vpop.f32.mrb[0].mxu0
      %2331 = vmatprep.mubr.bf16.mxu0 0
      %2332 = vmatmul.mubr.bf16.gmra.mrb[0].mxu0 %v2235
      %v2333 = vpop.f32.mrb[0].mxu0
      %v2334 = vadd.f32 0.0, %v2333
      %v2335 = vpop.f32.mrb[0].mxu0
      %v2336 = vpop.f32.mrb[0].mxu0
      %v2337 = vadd.f32 0.0, %v2336
      %v2338 = vpop.f32.mrb[0].mxu0
      %2339 = vmatprep.mubr.bf16.mxu0 0
      %2340 = vmatmul.mubr.bf16.gmra.mrb[0].mxu0 %v2238
      %v2341 = vpop.f32.mrb[0].mxu0
      %v2342 = vadd.f32 0.0, %v2341
      %v2343 = vpop.f32.mrb[0].mxu0
      %v2344 = vpop.f32.mrb[0].mxu0
      %v2345 = vadd.f32 0.0, %v2344
      %v2346 = vpop.f32.mrb[0].mxu0
      %2347 = vdwg.mxu0
      %v2348 = vadd.f32 %v2169, %v2278
      %v2349 = vadd.f32 %v2170, %v2281
      %v2350 = vadd.f32 %v2171, %v2286
      %v2351 = vadd.f32 %v2172, %v2289
      %v2352 = vadd.f32 %v2173, %v2294
      %v2353 = vadd.f32 %v2174, %v2297
      %v2354 = vadd.f32 %v2175, %v2302
      %v2355 = vadd.f32 %v2176, %v2305
      %v2356 = vadd.f32 %v2177, %v2310
      %v2357 = vadd.f32 %v2178, %v2313
      %v2358 = vadd.f32 %v2179, %v2318
      %v2359 = vadd.f32 %v2180, %v2321
      %v2360 = vadd.f32 %v2181, %v2326
      %v2361 = vadd.f32 %v2182, %v2329
      %v2362 = vadd.f32 %v2183, %v2334
      %v2363 = vadd.f32 %v2184, %v2337
      %v2364 = vadd.f32 %v2185, %v2342
      %v2365 = vadd.f32 %v2186, %v2345
      %v2366 = vlaneseq
      %v2367 = vshrl.u32 %v2366, 7
      %v2368 = vadd.s32 %v2367, 8
      %v2369 = vadd.s32 %v2367, 16
      %v2370 = vadd.s32 %v2367, 24
      %v2371 = vadd.s32 %v2367, 32
      %v2372 = vadd.s32 %v2367, 40
      %v2373 = vadd.s32 %v2367, 48
      %v2374 = vadd.s32 %v2367, 56
      %v2375 = vadd.s32 %v2367, 64
      %v2376 = vadd.s32 %v2367, 72
      %v2377 = vadd.s32 %v2367, 80
      %v2378 = vadd.s32 %v2367, 88
      %v2379 = vadd.s32 %v2367, 96
      %v2380 = vadd.s32 %v2367, 104
      %v2381 = vadd.s32 %v2367, 112
      %v2382 = vadd.s32 %v2367, 120
      %v2383 = vadd.s32 %v2367, 128
      %v2384 = vadd.s32 %v2367, 136
      %vm2385 = vcmp.lt.s32.totalorder %v2367, 0
      %v2386 = vsub.s32 0, %v2367
      %v2387 = vsel %vm2385, %v2386, %v2367
      %v2388 = vmul.u32.u64.compose %v2387, 3817748708
      %v2389 = vextract.low.u32 %v2388
      %v2390 = vextract.high.u32 %v2388
      %v2391 = vshrl.u32 %v2390, 4
      %v2392 = vmul.u32 %v2391, 18
      %v2393 = vsub.s32 %v2387, %v2392
      %v2394 = vsub.s32 0, %v2393
      %v2395 = vsel %vm2385, %v2394, %v2393
      %vm2396 = vcmp.lt.s32.totalorder %v2368, 0
      %v2397 = vsub.s32 0, %v2368
      %v2398 = vsel %vm2396, %v2397, %v2368
      %v2399 = vmul.u32.u64.compose %v2398, 3817748708
      %v2400 = vextract.low.u32 %v2399
      %v2401 = vextract.high.u32 %v2399
      %v2402 = vshrl.u32 %v2401, 4
      %v2403 = vmul.u32 %v2402, 18
      %v2404 = vsub.s32 %v2398, %v2403
      %v2405 = vsub.s32 0, %v2404
      %v2406 = vsel %vm2396, %v2405, %v2404
      %vm2407 = vcmp.lt.s32.totalorder %v2369, 0
      %v2408 = vsub.s32 0, %v2369
      %v2409 = vsel %vm2407, %v2408, %v2369
      %v2410 = vmul.u32.u64.compose %v2409, 3817748708
      %v2411 = vextract.low.u32 %v2410
      %v2412 = vextract.high.u32 %v2410
      %v2413 = vshrl.u32 %v2412, 4
      %v2414 = vmul.u32 %v2413, 18
      %v2415 = vsub.s32 %v2409, %v2414
      %v2416 = vsub.s32 0, %v2415
      %v2417 = vsel %vm2407, %v2416, %v2415
      %vm2418 = vcmp.lt.s32.totalorder %v2370, 0
      %v2419 = vsub.s32 0, %v2370
      %v2420 = vsel %vm2418, %v2419, %v2370
      %v2421 = vmul.u32.u64.compose %v2420, 3817748708
      %v2422 = vextract.low.u32 %v2421
      %v2423 = vextract.high.u32 %v2421
      %v2424 = vshrl.u32 %v2423, 4
      %v2425 = vmul.u32 %v2424, 18
      %v2426 = vsub.s32 %v2420, %v2425
      %v2427 = vsub.s32 0, %v2426
      %v2428 = vsel %vm2418, %v2427, %v2426
      %vm2429 = vcmp.lt.s32.totalorder %v2371, 0
      %v2430 = vsub.s32 0, %v2371
      %v2431 = vsel %vm2429, %v2430, %v2371
      %v2432 = vmul.u32.u64.compose %v2431, 3817748708
      %v2433 = vextract.low.u32 %v2432
      %v2434 = vextract.high.u32 %v2432
      %v2435 = vshrl.u32 %v2434, 4
      %v2436 = vmul.u32 %v2435, 18
      %v2437 = vsub.s32 %v2431, %v2436
      %v2438 = vsub.s32 0, %v2437
      %v2439 = vsel %vm2429, %v2438, %v2437
      %vm2440 = vcmp.lt.s32.totalorder %v2372, 0
      %v2441 = vsub.s32 0, %v2372
      %v2442 = vsel %vm2440, %v2441, %v2372
      %v2443 = vmul.u32.u64.compose %v2442, 3817748708
      %v2444 = vextract.low.u32 %v2443
      %v2445 = vextract.high.u32 %v2443
      %v2446 = vshrl.u32 %v2445, 4
      %v2447 = vmul.u32 %v2446, 18
      %v2448 = vsub.s32 %v2442, %v2447
      %v2449 = vsub.s32 0, %v2448
      %v2450 = vsel %vm2440, %v2449, %v2448
      %vm2451 = vcmp.lt.s32.totalorder %v2373, 0
      %v2452 = vsub.s32 0, %v2373
      %v2453 = vsel %vm2451, %v2452, %v2373
      %v2454 = vmul.u32.u64.compose %v2453, 3817748708
      %v2455 = vextract.low.u32 %v2454
      %v2456 = vextract.high.u32 %v2454
      %v2457 = vshrl.u32 %v2456, 4
      %v2458 = vmul.u32 %v2457, 18
      %v2459 = vsub.s32 %v2453, %v2458
      %v2460 = vsub.s32 0, %v2459
      %v2461 = vsel %vm2451, %v2460, %v2459
      %vm2462 = vcmp.lt.s32.totalorder %v2374, 0
      %v2463 = vsub.s32 0, %v2374
      %v2464 = vsel %vm2462, %v2463, %v2374
      %v2465 = vmul.u32.u64.compose %v2464, 3817748708
      %v2466 = vextract.low.u32 %v2465
      %v2467 = vextract.high.u32 %v2465
      %v2468 = vshrl.u32 %v2467, 4
      %v2469 = vmul.u32 %v2468, 18
      %v2470 = vsub.s32 %v2464, %v2469
      %v2471 = vsub.s32 0, %v2470
      %v2472 = vsel %vm2462, %v2471, %v2470
      %vm2473 = vcmp.lt.s32.totalorder %v2375, 0
      %v2474 = vsub.s32 0, %v2375
      %v2475 = vsel %vm2473, %v2474, %v2375
      %v2476 = vmul.u32.u64.compose %v2475, 3817748708
      %v2477 = vextract.low.u32 %v2476
      %v2478 = vextract.high.u32 %v2476
      %v2479 = vshrl.u32 %v2478, 4
      %v2480 = vmul.u32 %v2479, 18
      %v2481 = vsub.s32 %v2475, %v2480
      %v2482 = vsub.s32 0, %v2481
      %v2483 = vsel %vm2473, %v2482, %v2481
      %vm2484 = vcmp.lt.s32.totalorder %v2376, 0
      %v2485 = vsub.s32 0, %v2376
      %v2486 = vsel %vm2484, %v2485, %v2376
      %v2487 = vmul.u32.u64.compose %v2486, 3817748708
      %v2488 = vextract.low.u32 %v2487
      %v2489 = vextract.high.u32 %v2487
      %v2490 = vshrl.u32 %v2489, 4
      %v2491 = vmul.u32 %v2490, 18
      %v2492 = vsub.s32 %v2486, %v2491
      %v2493 = vsub.s32 0, %v2492
      %v2494 = vsel %vm2484, %v2493, %v2492
      %vm2495 = vcmp.lt.s32.totalorder %v2377, 0
      %v2496 = vsub.s32 0, %v2377
      %v2497 = vsel %vm2495, %v2496, %v2377
      %v2498 = vmul.u32.u64.compose %v2497, 3817748708
      %v2499 = vextract.low.u32 %v2498
      %v2500 = vextract.high.u32 %v2498
      %v2501 = vshrl.u32 %v2500, 4
      %v2502 = vmul.u32 %v2501, 18
      %v2503 = vsub.s32 %v2497, %v2502
      %v2504 = vsub.s32 0, %v2503
      %v2505 = vsel %vm2495, %v2504, %v2503
      %vm2506 = vcmp.lt.s32.totalorder %v2378, 0
      %v2507 = vsub.s32 0, %v2378
      %v2508 = vsel %vm2506, %v2507, %v2378
      %v2509 = vmul.u32.u64.compose %v2508, 3817748708
      %v2510 = vextract.low.u32 %v2509
      %v2511 = vextract.high.u32 %v2509
      %v2512 = vshrl.u32 %v2511, 4
      %v2513 = vmul.u32 %v2512, 18
      %v2514 = vsub.s32 %v2508, %v2513
      %v2515 = vsub.s32 0, %v2514
      %v2516 = vsel %vm2506, %v2515, %v2514
      %vm2517 = vcmp.lt.s32.totalorder %v2379, 0
      %v2518 = vsub.s32 0, %v2379
      %v2519 = vsel %vm2517, %v2518, %v2379
      %v2520 = vmul.u32.u64.compose %v2519, 3817748708
      %v2521 = vextract.low.u32 %v2520
      %v2522 = vextract.high.u32 %v2520
      %v2523 = vshrl.u32 %v2522, 4
      %v2524 = vmul.u32 %v2523, 18
      %v2525 = vsub.s32 %v2519, %v2524
      %v2526 = vsub.s32 0, %v2525
      %v2527 = vsel %vm2517, %v2526, %v2525
      %vm2528 = vcmp.lt.s32.totalorder %v2380, 0
      %v2529 = vsub.s32 0, %v2380
      %v2530 = vsel %vm2528, %v2529, %v2380
      %v2531 = vmul.u32.u64.compose %v2530, 3817748708
      %v2532 = vextract.low.u32 %v2531
      %v2533 = vextract.high.u32 %v2531
      %v2534 = vshrl.u32 %v2533, 4
      %v2535 = vmul.u32 %v2534, 18
      %v2536 = vsub.s32 %v2530, %v2535
      %v2537 = vsub.s32 0, %v2536
      %v2538 = vsel %vm2528, %v2537, %v2536
      %vm2539 = vcmp.lt.s32.totalorder %v2381, 0
      %v2540 = vsub.s32 0, %v2381
      %v2541 = vsel %vm2539, %v2540, %v2381
      %v2542 = vmul.u32.u64.compose %v2541, 3817748708
      %v2543 = vextract.low.u32 %v2542
      %v2544 = vextract.high.u32 %v2542
      %v2545 = vshrl.u32 %v2544, 4
      %v2546 = vmul.u32 %v2545, 18
      %v2547 = vsub.s32 %v2541, %v2546
      %v2548 = vsub.s32 0, %v2547
      %v2549 = vsel %vm2539, %v2548, %v2547
      %vm2550 = vcmp.lt.s32.totalorder %v2382, 0
      %v2551 = vsub.s32 0, %v2382
      %v2552 = vsel %vm2550, %v2551, %v2382
      %v2553 = vmul.u32.u64.compose %v2552, 3817748708
      %v2554 = vextract.low.u32 %v2553
      %v2555 = vextract.high.u32 %v2553
      %v2556 = vshrl.u32 %v2555, 4
      %v2557 = vmul.u32 %v2556, 18
      %v2558 = vsub.s32 %v2552, %v2557
      %v2559 = vsub.s32 0, %v2558
      %v2560 = vsel %vm2550, %v2559, %v2558
      %vm2561 = vcmp.lt.s32.totalorder %v2383, 0
      %v2562 = vsub.s32 0, %v2383
      %v2563 = vsel %vm2561, %v2562, %v2383
      %v2564 = vmul.u32.u64.compose %v2563, 3817748708
      %v2565 = vextract.low.u32 %v2564
      %v2566 = vextract.high.u32 %v2564
      %v2567 = vshrl.u32 %v2566, 4
      %v2568 = vmul.u32 %v2567, 18
      %v2569 = vsub.s32 %v2563, %v2568
      %v2570 = vsub.s32 0, %v2569
      %v2571 = vsel %vm2561, %v2570, %v2569
      %vm2572 = vcmp.lt.s32.totalorder %v2384, 0
      %v2573 = vsub.s32 0, %v2384
      %v2574 = vsel %vm2572, %v2573, %v2384
      %v2575 = vmul.u32.u64.compose %v2574, 3817748708
      %v2576 = vextract.low.u32 %v2575
      %v2577 = vextract.high.u32 %v2575
      %v2578 = vshrl.u32 %v2577, 4
      %v2579 = vmul.u32 %v2578, 18
      %v2580 = vsub.s32 %v2574, %v2579
      %v2581 = vsub.s32 0, %v2580
      %v2582 = vsel %vm2572, %v2581, %v2580
      %vm2583 = vcmp.ne.s32.totalorder %v2395, 0
      %vm2584 = vcmp.ne.s32.totalorder %v2406, 0
      %vm2585 = vcmp.ne.s32.totalorder %v2417, 0
      %vm2586 = vcmp.ne.s32.totalorder %v2428, 0
      %vm2587 = vcmp.ne.s32.totalorder %v2439, 0
      %vm2588 = vcmp.ne.s32.totalorder %v2450, 0
      %vm2589 = vcmp.ne.s32.totalorder %v2461, 0
      %vm2590 = vcmp.ne.s32.totalorder %v2472, 0
      %vm2591 = vcmp.ne.s32.totalorder %v2483, 0
      %vm2592 = vcmp.ne.s32.totalorder %v2494, 0
      %vm2593 = vcmp.ne.s32.totalorder %v2505, 0
      %vm2594 = vcmp.ne.s32.totalorder %v2516, 0
      %vm2595 = vcmp.ne.s32.totalorder %v2527, 0
      %vm2596 = vcmp.ne.s32.totalorder %v2538, 0
      %vm2597 = vcmp.ne.s32.totalorder %v2549, 0
      %vm2598 = vcmp.ne.s32.totalorder %v2560, 0
      %vm2599 = vcmp.ne.s32.totalorder %v2571, 0
      %vm2600 = vcmp.ne.s32.totalorder %v2582, 0
      %vm2601 = vcmp.lt.s32.totalorder %v2395, 0
      %vm2602 = vcmp.lt.s32.totalorder %v2406, 0
      %vm2603 = vcmp.lt.s32.totalorder %v2417, 0
      %vm2604 = vcmp.lt.s32.totalorder %v2428, 0
      %vm2605 = vcmp.lt.s32.totalorder %v2439, 0
      %vm2606 = vcmp.lt.s32.totalorder %v2450, 0
      %vm2607 = vcmp.lt.s32.totalorder %v2461, 0
      %vm2608 = vcmp.lt.s32.totalorder %v2472, 0
      %vm2609 = vcmp.lt.s32.totalorder %v2483, 0
      %vm2610 = vcmp.lt.s32.totalorder %v2494, 0
      %vm2611 = vcmp.lt.s32.totalorder %v2505, 0
      %vm2612 = vcmp.lt.s32.totalorder %v2516, 0
      %vm2613 = vcmp.lt.s32.totalorder %v2527, 0
      %vm2614 = vcmp.lt.s32.totalorder %v2538, 0
      %vm2615 = vcmp.lt.s32.totalorder %v2549, 0
      %vm2616 = vcmp.lt.s32.totalorder %v2560, 0
      %vm2617 = vcmp.lt.s32.totalorder %v2571, 0
      %vm2618 = vcmp.lt.s32.totalorder %v2582, 0
      %vm2619 = vmand %vm2601, %vm2583
      %vm2620 = vmand %vm2602, %vm2584
      %vm2621 = vmand %vm2603, %vm2585
      %vm2622 = vmand %vm2604, %vm2586
      %vm2623 = vmand %vm2605, %vm2587
      %vm2624 = vmand %vm2606, %vm2588
      %vm2625 = vmand %vm2607, %vm2589
      %vm2626 = vmand %vm2608, %vm2590
      %vm2627 = vmand %vm2609, %vm2591
      %vm2628 = vmand %vm2610, %vm2592
      %vm2629 = vmand %vm2611, %vm2593
      %vm2630 = vmand %vm2612, %vm2594
      %vm2631 = vmand %vm2613, %vm2595
      %vm2632 = vmand %vm2614, %vm2596
      %vm2633 = vmand %vm2615, %vm2597
      %vm2634 = vmand %vm2616, %vm2598
      %vm2635 = vmand %vm2617, %vm2599
      %vm2636 = vmand %vm2618, %vm2600
      %v2637 = vadd.s32 %v2395, 18
      %v2638 = vadd.s32 %v2406, 18
      %v2639 = vadd.s32 %v2417, 18
      %v2640 = vadd.s32 %v2428, 18
      %v2641 = vadd.s32 %v2439, 18
      %v2642 = vadd.s32 %v2450, 18
      %v2643 = vadd.s32 %v2461, 18
      %v2644 = vadd.s32 %v2472, 18
      %v2645 = vadd.s32 %v2483, 18
      %v2646 = vadd.s32 %v2494, 18
      %v2647 = vadd.s32 %v2505, 18
      %v2648 = vadd.s32 %v2516, 18
      %v2649 = vadd.s32 %v2527, 18
      %v2650 = vadd.s32 %v2538, 18
      %v2651 = vadd.s32 %v2549, 18
      %v2652 = vadd.s32 %v2560, 18
      %v2653 = vadd.s32 %v2571, 18
      %v2654 = vadd.s32 %v2582, 18
      %v2655 = vsel %vm2619, %v2637, %v2395
      %v2656 = vsel %vm2620, %v2638, %v2406
      %v2657 = vsel %vm2621, %v2639, %v2417
      %v2658 = vsel %vm2622, %v2640, %v2428
      %v2659 = vsel %vm2623, %v2641, %v2439
      %v2660 = vsel %vm2624, %v2642, %v2450
      %v2661 = vsel %vm2625, %v2643, %v2461
      %v2662 = vsel %vm2626, %v2644, %v2472
      %v2663 = vsel %vm2627, %v2645, %v2483
      %v2664 = vsel %vm2628, %v2646, %v2494
      %v2665 = vsel %vm2629, %v2647, %v2505
      %v2666 = vsel %vm2630, %v2648, %v2516
      %v2667 = vsel %vm2631, %v2649, %v2527
      %v2668 = vsel %vm2632, %v2650, %v2538
      %v2669 = vsel %vm2633, %v2651, %v2549
      %v2670 = vsel %vm2634, %v2652, %v2560
      %v2671 = vsel %vm2635, %v2653, %v2571
      %v2672 = vsel %vm2636, %v2654, %v2582
      %vm2673 = vcmp.lt.s32.totalorder %v2655, 16
      %vm2674 = vcmp.lt.s32.totalorder %v2656, 16
      %vm2675 = vcmp.lt.s32.totalorder %v2657, 16
      %vm2676 = vcmp.lt.s32.totalorder %v2658, 16
      %vm2677 = vcmp.lt.s32.totalorder %v2659, 16
      %vm2678 = vcmp.lt.s32.totalorder %v2660, 16
      %vm2679 = vcmp.lt.s32.totalorder %v2661, 16
      %vm2680 = vcmp.lt.s32.totalorder %v2662, 16
      %vm2681 = vcmp.lt.s32.totalorder %v2663, 16
      %vm2682 = vcmp.lt.s32.totalorder %v2664, 16
      %vm2683 = vcmp.lt.s32.totalorder %v2665, 16
      %vm2684 = vcmp.lt.s32.totalorder %v2666, 16
      %vm2685 = vcmp.lt.s32.totalorder %v2667, 16
      %vm2686 = vcmp.lt.s32.totalorder %v2668, 16
      %vm2687 = vcmp.lt.s32.totalorder %v2669, 16
      %vm2688 = vcmp.lt.s32.totalorder %v2670, 16
      %vm2689 = vcmp.lt.s32.totalorder %v2671, 16
      %vm2690 = vcmp.lt.s32.totalorder %v2672, 16
      %v2691 = vsel %vm2673, 1, 0
      %v2692 = vsel %vm2674, 1, 0
      %v2693 = vsel %vm2675, 1, 0
      %v2694 = vsel %vm2676, 1, 0
      %v2695 = vsel %vm2677, 1, 0
      %v2696 = vsel %vm2678, 1, 0
      %v2697 = vsel %vm2679, 1, 0
      %v2698 = vsel %vm2680, 1, 0
      %v2699 = vsel %vm2681, 1, 0
      %v2700 = vsel %vm2682, 1, 0
      %v2701 = vsel %vm2683, 1, 0
      %v2702 = vsel %vm2684, 1, 0
      %v2703 = vsel %vm2685, 1, 0
      %v2704 = vsel %vm2686, 1, 0
      %v2705 = vsel %vm2687, 1, 0
      %v2706 = vsel %vm2688, 1, 0
      %v2707 = vsel %vm2689, 1, 0
      %v2708 = vsel %vm2690, 1, 0
      %vm2709 = vcmp.eq.s32.totalorder %v2691, 1
      %vm2710 = vcmp.eq.s32.totalorder %v2692, 1
      %vm2711 = vcmp.eq.s32.totalorder %v2693, 1
      %vm2712 = vcmp.eq.s32.totalorder %v2694, 1
      %vm2713 = vcmp.eq.s32.totalorder %v2695, 1
      %vm2714 = vcmp.eq.s32.totalorder %v2696, 1
      %vm2715 = vcmp.eq.s32.totalorder %v2697, 1
      %vm2716 = vcmp.eq.s32.totalorder %v2698, 1
      %vm2717 = vcmp.eq.s32.totalorder %v2699, 1
      %vm2718 = vcmp.eq.s32.totalorder %v2700, 1
      %vm2719 = vcmp.eq.s32.totalorder %v2701, 1
      %vm2720 = vcmp.eq.s32.totalorder %v2702, 1
      %vm2721 = vcmp.eq.s32.totalorder %v2703, 1
      %vm2722 = vcmp.eq.s32.totalorder %v2704, 1
      %vm2723 = vcmp.eq.s32.totalorder %v2705, 1
      %vm2724 = vcmp.eq.s32.totalorder %v2706, 1
      %vm2725 = vcmp.eq.s32.totalorder %v2707, 1
      %vm2726 = vcmp.eq.s32.totalorder %v2708, 1
      %v2727 = vsel %vm2709, %v2348, 0.0
      %v2728 = vsel %vm2710, %v2349, 0.0
      %v2729 = vsel %vm2711, %v2350, 0.0
      %v2730 = vsel %vm2712, %v2351, 0.0
      %v2731 = vsel %vm2713, %v2352, 0.0
      %v2732 = vsel %vm2714, %v2353, 0.0
      %v2733 = vsel %vm2715, %v2354, 0.0
      %v2734 = vsel %vm2716, %v2355, 0.0
      %v2735 = vsel %vm2717, %v2356, 0.0
      %v2736 = vsel %vm2718, %v2357, 0.0
      %v2737 = vsel %vm2719, %v2358, 0.0
      %v2738 = vsel %vm2720, %v2359, 0.0
      %v2739 = vsel %vm2721, %v2360, 0.0
      %v2740 = vsel %vm2722, %v2361, 0.0
      %v2741 = vsel %vm2723, %v2362, 0.0
      %v2742 = vsel %vm2724, %v2363, 0.0
      %v2743 = vsel %vm2725, %v2364, 0.0
      %v2744 = vsel %vm2726, %v2365, 0.0
      %vm2745 = vcmask 64512
      %v2746 = vsel %vm2745, %v2727, 0.0
      %v2747 = vsel %vm2745, %v2728, 0.0
      %v2748 = vadd.f32 %v2746, %v2747
      %v2749 = vsel %vm2745, %v2729, 0.0
      %v2750 = vadd.f32 %v2748, %v2749
      %v2751 = vsel %vm2745, %v2730, 0.0
      %v2752 = vadd.f32 %v2750, %v2751
      %v2753 = vsel %vm2745, %v2731, 0.0
      %v2754 = vadd.f32 %v2752, %v2753
      %v2755 = vsel %vm2745, %v2732, 0.0
      %v2756 = vadd.f32 %v2754, %v2755
      %v2757 = vsel %vm2745, %v2733, 0.0
      %v2758 = vadd.f32 %v2756, %v2757
      %v2759 = vsel %vm2745, %v2734, 0.0
      %v2760 = vadd.f32 %v2758, %v2759
      %v2761 = vsel %vm2745, %v2735, 0.0
      %v2762 = vadd.f32 %v2760, %v2761
      %v2763 = vsel %vm2745, %v2736, 0.0
      %v2764 = vadd.f32 %v2762, %v2763
      %v2765 = vsel %vm2745, %v2737, 0.0
      %v2766 = vadd.f32 %v2764, %v2765
      %v2767 = vsel %vm2745, %v2738, 0.0
      %v2768 = vadd.f32 %v2766, %v2767
      %v2769 = vsel %vm2745, %v2739, 0.0
      %v2770 = vadd.f32 %v2768, %v2769
      %v2771 = vsel %vm2745, %v2740, 0.0
      %v2772 = vadd.f32 %v2770, %v2771
      %v2773 = vsel %vm2745, %v2741, 0.0
      %v2774 = vadd.f32 %v2772, %v2773
      %v2775 = vsel %vm2745, %v2742, 0.0
      %v2776 = vadd.f32 %v2774, %v2775
      %v2777 = vsel %vm2745, %v2743, 0.0
      %v2778 = vadd.f32 %v2776, %v2777
      %v2779 = vsel %vm2745, %v2744, 0.0
      %v2780 = vadd.f32 %v2778, %v2779
      %v2781 = vrot.slane %v2780, 4
      %v2782 = vadd.f32 %v2780, %v2781
      %v2783 = vrot.slane %v2782, 2
      %v2784 = vadd.f32 %v2782, %v2783
      %v2785 = vrot.slane %v2784, 1
      %v2786 = vadd.f32 %v2784, %v2785
      %v2787 = vrcp.pop 128.0
      %v2788 = vmul.f32 %v2786, %v2787
      %v2789 = vsub.f32 %v2348, %v2788
      %v2790 = vsub.f32 %v2349, %v2788
      %v2791 = vsub.f32 %v2350, %v2788
      %v2792 = vsub.f32 %v2351, %v2788
      %v2793 = vsub.f32 %v2352, %v2788
      %v2794 = vsub.f32 %v2353, %v2788
      %v2795 = vsub.f32 %v2354, %v2788
      %v2796 = vsub.f32 %v2355, %v2788
      %v2797 = vsub.f32 %v2356, %v2788
      %v2798 = vsub.f32 %v2357, %v2788
      %v2799 = vsub.f32 %v2358, %v2788
      %v2800 = vsub.f32 %v2359, %v2788
      %v2801 = vsub.f32 %v2360, %v2788
      %v2802 = vsub.f32 %v2361, %v2788
      %v2803 = vsub.f32 %v2362, %v2788
      %v2804 = vsub.f32 %v2363, %v2788
      %v2805 = vsub.f32 %v2364, %v2788
      %v2806 = vsub.f32 %v2365, %v2788
      %v2807 = vsel %vm2709, %v2789, 0.0
      %v2808 = vsel %vm2710, %v2790, 0.0
      %v2809 = vsel %vm2711, %v2791, 0.0
      %v2810 = vsel %vm2712, %v2792, 0.0
      %v2811 = vsel %vm2713, %v2793, 0.0
      %v2812 = vsel %vm2714, %v2794, 0.0
      %v2813 = vsel %vm2715, %v2795, 0.0
      %v2814 = vsel %vm2716, %v2796, 0.0
      %v2815 = vsel %vm2717, %v2797, 0.0
      %v2816 = vsel %vm2718, %v2798, 0.0
      %v2817 = vsel %vm2719, %v2799, 0.0
      %v2818 = vsel %vm2720, %v2800, 0.0
      %v2819 = vsel %vm2721, %v2801, 0.0
      %v2820 = vsel %vm2722, %v2802, 0.0
      %v2821 = vsel %vm2723, %v2803, 0.0
      %v2822 = vsel %vm2724, %v2804, 0.0
      %v2823 = vsel %vm2725, %v2805, 0.0
      %v2824 = vsel %vm2726, %v2806, 0.0
      %v2825 = vmul.f32 %v2807, %v2807
      %v2826 = vmul.f32 %v2808, %v2808
      %v2827 = vmul.f32 %v2809, %v2809
      %v2828 = vmul.f32 %v2810, %v2810
      %v2829 = vmul.f32 %v2811, %v2811
      %v2830 = vmul.f32 %v2812, %v2812
      %v2831 = vmul.f32 %v2813, %v2813
      %v2832 = vmul.f32 %v2814, %v2814
      %v2833 = vmul.f32 %v2815, %v2815
      %v2834 = vmul.f32 %v2816, %v2816
      %v2835 = vmul.f32 %v2817, %v2817
      %v2836 = vmul.f32 %v2818, %v2818
      %v2837 = vmul.f32 %v2819, %v2819
      %v2838 = vmul.f32 %v2820, %v2820
      %v2839 = vmul.f32 %v2821, %v2821
      %v2840 = vmul.f32 %v2822, %v2822
      %v2841 = vmul.f32 %v2823, %v2823
      %v2842 = vmul.f32 %v2824, %v2824
      %v2843 = vsel %vm2745, %v2825, 0.0
      %v2844 = vsel %vm2745, %v2826, 0.0
      %v2845 = vadd.f32 %v2843, %v2844
      %v2846 = vsel %vm2745, %v2827, 0.0
      %v2847 = vadd.f32 %v2845, %v2846
      %v2848 = vsel %vm2745, %v2828, 0.0
      %v2849 = vadd.f32 %v2847, %v2848
      %v2850 = vsel %vm2745, %v2829, 0.0
      %v2851 = vadd.f32 %v2849, %v2850
      %v2852 = vsel %vm2745, %v2830, 0.0
      %v2853 = vadd.f32 %v2851, %v2852
      %v2854 = vsel %vm2745, %v2831, 0.0
      %v2855 = vadd.f32 %v2853, %v2854
      %v2856 = vsel %vm2745, %v2832, 0.0
      %v2857 = vadd.f32 %v2855, %v2856
      %v2858 = vsel %vm2745, %v2833, 0.0
      %v2859 = vadd.f32 %v2857, %v2858
      %v2860 = vsel %vm2745, %v2834, 0.0
      %v2861 = vadd.f32 %v2859, %v2860
      %v2862 = vsel %vm2745, %v2835, 0.0
      %v2863 = vadd.f32 %v2861, %v2862
      %v2864 = vsel %vm2745, %v2836, 0.0
      %v2865 = vadd.f32 %v2863, %v2864
      %v2866 = vsel %vm2745, %v2837, 0.0
      %v2867 = vadd.f32 %v2865, %v2866
      %v2868 = vsel %vm2745, %v2838, 0.0
      %v2869 = vadd.f32 %v2867, %v2868
      %v2870 = vsel %vm2745, %v2839, 0.0
      %v2871 = vadd.f32 %v2869, %v2870
      %v2872 = vsel %vm2745, %v2840, 0.0
      %v2873 = vadd.f32 %v2871, %v2872
      %v2874 = vsel %vm2745, %v2841, 0.0
      %v2875 = vadd.f32 %v2873, %v2874
      %v2876 = vsel %vm2745, %v2842, 0.0
      %v2877 = vadd.f32 %v2875, %v2876
      %v2878 = vrot.slane %v2877, 4
      %v2879 = vadd.f32 %v2877, %v2878
      %v2880 = vrot.slane %v2879, 2
      %v2881 = vadd.f32 %v2879, %v2880
      %v2882 = vrot.slane %v2881, 1
      %v2883 = vadd.f32 %v2881, %v2882
      %vm2884 = vcmask 1040384
      %v2885 = vsel %vm2884, %v2786, %v2883
      %vm2886 = vcmask 58368
      %2887 = vst.msk [vmem:[%s296] sm:$0x3] %vm2886, %v2885
      %p2888 = scmp.lt.s32.totalorder %s18, 1
      %s2889 = scalar_select %p2888, %s18, 1
      %p2890 = scmp.lt.s32.totalorder %s19, 1
      %s2891 = scalar_select %p2890, %s19, 1
      %s2892 = smul.addr %s2889, 2
      %s2893 = sadd.s32 %s2891, %s2892
      %s2894 = smul.addr %s2893, 2
      %s2895 = scalar_lea.vmem %s3, %s2894
      // Predicated region
      $region33: #{conv_bn_quant_forward.2} parent=31 // pred_check
        %p2896 = pneg %p127
      $region34: #{conv_bn_quant_forward.2} parent=31 // pred_check_branch
        %2898 = sbr.rel (%p2896) target = $region36
      $region35: #{conv_bn_quant_forward.2} parent=31 // pred_region
        _
      $region36: #{conv_bn_quant_forward.2} parent=31 // pred_fallthru
        _
    $region32: #{conv_bn_quant_forward.2} parent=5 // pred_fallthru
      _
    %p2899 = scmp.le.s32.totalorder 2, %s9
    // Predicated region
    $region37: #{conv_bn_quant_forward.2} parent=5 // pred_check
      %p2900 = pneg %p2899
    $region38: #{conv_bn_quant_forward.2} parent=5 // pred_check_branch
      %2902 = sbr.rel (%p2900) target = $region40
    $region39: #{conv_bn_quant_forward.2} parent=5 // pred_region
      %s2903 = ssub.s32 %s9, 2
      // Predicated region
      $region41: #{conv_bn_quant_forward.2} parent=39 // pred_check
        %p2904 = pneg %p133
      $region42: #{conv_bn_quant_forward.2} parent=39 // pred_check_branch
        %2906 = sbr.rel (%p2904) target = $region44
      $region43: #{conv_bn_quant_forward.2} parent=39 // pred_region
        %p2907 = scmp.lt.s32.totalorder %s20, 1
        %s2908 = scalar_select %p2907, %s20, 1
        %p2909 = scmp.lt.s32.totalorder %s21, 1
        %s2910 = scalar_select %p2909, %s21, 1
        %s2911 = smul.addr %s2908, 2
        %s2912 = sadd.s32 %s2910, %s2911
        %s2913 = smul.addr %s2912, 2
        %s2914 = scalar_lea.vmem %s3, %s2913
      $region44: #{conv_bn_quant_forward.2} parent=39 // pred_fallthru
        _
    $region40: #{conv_bn_quant_forward.2} parent=5 // pred_fallthru
      _
  $region6: #{conv_bn_quant_forward.2} parent=0 // loop_footer
    %s13 = sadd.s32 1, %s9
  $region7: #{conv_bn_quant_forward.2} parent=0 // loop_footer_branch
    %8 = sbr.rel target = $region3
  $region8: #{conv_bn_quant_forward.2} parent=0 // loop_exit
    _

</llo_original>
